<compile_context>
chip_gen: v7x
topology: tpu7x:2x2x1
jax: 0.10.0
libtpu: 0.0.40
codegen_flags: <defaults>
</compile_context>

<pallas_src>
import functools
import math

import jax
import jax.numpy as jnp
from jax.experimental import pallas as pl
from jax.experimental.pallas import tpu as pltpu


_VMEM_LIMIT_BYTES = 48 * 1024 * 1024   # > v5e/v6e/v7x defaults, < v7x physical


def _round_up(x, m):
    return ((x + m - 1) // m) * m


# ----------------------------------------------------------------------------
# Kernel 1: first Conv1d(Cin, W, 3, 1, 1) + ReLU.
#   Input is wrapper-side im2col'd (Cin is tiny), so the conv is one matmul.
#   Output is emitted with `halo` zero rows on each side so the next level's
#   strided conv needs no HBM-side padding.
# ----------------------------------------------------------------------------
def _conv_in_kernel(cols_ref, w_ref, b_ref, o_ref, *, halo):
    w = w_ref[...]                                          # (K*Cin, W) bf16
    y = jnp.dot(cols_ref[0].astype(w.dtype), w,
                preferred_element_type=jnp.float32)         # (T, W) f32
    y = jnp.maximum(y + b_ref[...], 0.0)
    if halo > 0:
        z = jnp.zeros((halo, y.shape[1]), y.dtype)
        y = jnp.concatenate([z, y, z], axis=0)              # zero halo rows
    o_ref[0] = y.astype(o_ref.dtype)


def conv_in_pallas(x, w, b, *, halo):
    """x: (B, T, Cin) channels-last.  w: (K, Cin, W).  b: (W,)."""
    B, T, Cin = x.shape
    K, _, W = w.shape
    pad = (K - 1) // 2
    # Cin is tiny (3): im2col in the wrapper is negligible HBM traffic and
    # turns the conv into one MXU matmul of contraction depth K*Cin.
    xp = jnp.pad(x, ((0, 0), (pad, pad), (0, 0)))
    cols = jnp.concatenate([xp[:, k:k + T, :] for k in range(K)], axis=2)
    w_r = w.reshape(K * Cin, W).astype(jnp.bfloat16)
    b_r = b.reshape(1, W).astype(jnp.float32)

    out_rows = T + 2 * halo
    flops = 2 * B * T * (K * Cin) * W
    bytes_accessed = 4 * cols.size + 2 * w_r.size + 4 * b_r.size + 4 * B * out_rows * W

    return pl.pallas_call(
        functools.partial(_conv_in_kernel, halo=halo),
        out_shape=jax.ShapeDtypeStruct((B, out_rows, W), x.dtype),
        grid=(B,),
        in_specs=[
            pl.BlockSpec((1, T, K * Cin), lambda bi: (bi, 0, 0)),
            pl.BlockSpec((K * Cin, W), lambda bi: (0, 0)),
            pl.BlockSpec((1, W), lambda bi: (0, 0)),
        ],
        out_specs=pl.BlockSpec((1, out_rows, W), lambda bi: (bi, 0, 0)),
        compiler_params=pltpu.CompilerParams(
            dimension_semantics=("parallel",),
            vmem_limit_bytes=_VMEM_LIMIT_BYTES),
        cost_estimate=pl.CostEstimate(flops=flops, transcendentals=0,
                                      bytes_accessed=bytes_accessed),
    )(cols, w_r, b_r)


# ----------------------------------------------------------------------------
# Kernel 2: one full down-sampling level, fused:
#   strided conv (stride-1 two-tap conv over a space-to-depth view) followed by
#   the whole Resnet1D stack, activation resident in VMEM.  The last level also
#   fuses the final Conv1d(W, Cout, 3, 1, 1); non-last levels emit their output
#   with zero halo rows for the next level.
# ----------------------------------------------------------------------------
def _level_kernel(*refs, down_offsets, dilations, t_out, pad0, halo_hi,
                  down_concat, res_concat, out_halo, fuse_out):
    if fuse_out:
        (sd_ref, wd_ref, bd_ref, w1_ref, b1_ref, w2_ref, b2_ref,
         wo_ref, bo_ref, o_ref, hp_ref) = refs
    else:
        (sd_ref, wd_ref, bd_ref, w1_ref, b1_ref, w2_ref, b2_ref,
         o_ref, hp_ref) = refs
        wo_ref = bo_ref = None

    w_lanes = hp_ref.shape[1]                                # W
    sd = sd_ref[0]                                           # (G, sdc) f32
    sdc = sd.shape[1]
    wd = wd_ref[...]                                         # (K*W, W) bf16

    # --- strided down-sampling conv ---
    if down_concat and len(down_offsets) > 1:
        cols = jnp.concatenate([sd[o:o + t_out, :] for o in down_offsets], axis=1)
        x = jnp.dot(cols.astype(wd.dtype), wd, preferred_element_type=jnp.float32)
    else:
        x = None
        for i, o in enumerate(down_offsets):
            part = jnp.dot(sd[o:o + t_out, :].astype(wd.dtype),
                           wd[i * sdc:(i + 1) * sdc, :],
                           preferred_element_type=jnp.float32)
            x = part if x is None else x + part
    x = x + bd_ref[...]                                      # f32

    # --- zero only the halo rows of the padded scratch; interior rows are
    #     fully overwritten every block.  (Not hoisted behind pl.when: scratch
    #     is per-core when the batch axis is megacore-partitioned.) ---
    hp_ref[pl.ds(0, pad0), :] = jnp.zeros((pad0, w_lanes), jnp.float32)
    hp_ref[pl.ds(pad0 + t_out, halo_hi), :] = jnp.zeros((halo_hi, w_lanes),
                                                        jnp.float32)

    # --- Resnet1D stack (static unroll over depth), residual carried in f32 ---
    for j, d in enumerate(dilations):
        hp_ref[pl.ds(pad0, t_out), :] = jnp.maximum(x, 0.0)  # zero-padded relu(x)
        w1 = w1_ref[j]                                       # (3W, W) bf16
        if res_concat:
            cols = jnp.concatenate(
                [hp_ref[pl.ds(pad0 + (k - 1) * d, t_out), :] for k in range(3)],
                axis=1)
            h = jnp.dot(cols.astype(w1.dtype), w1,
                        preferred_element_type=jnp.float32)
        else:
            h = None
            for k in range(3):
                tap = hp_ref[pl.ds(pad0 + (k - 1) * d, t_out), :]
                part = jnp.dot(tap.astype(w1.dtype),
                               w1[k * w_lanes:(k + 1) * w_lanes, :],
                               preferred_element_type=jnp.float32)
                h = part if h is None else h + part
        h = jnp.maximum(h + b1_ref[j], 0.0)
        w2 = w2_ref[j]                                       # (W, W) bf16
        h = jnp.dot(h.astype(w2.dtype), w2,
                    preferred_element_type=jnp.float32) + b2_ref[j]
        x = x + h

    if fuse_out:
        # --- fused Conv1d(W, Cout, 3, 1, 1) epilogue; halo rows still zero ---
        hp_ref[pl.ds(pad0, t_out), :] = x
        wo = wo_ref[...]                                     # (3W, Cout) bf16
        if res_concat:
            cols = jnp.concatenate(
                [hp_ref[pl.ds(pad0 + k - 1, t_out), :] for k in range(3)], axis=1)
            y = jnp.dot(cols.astype(wo.dtype), wo,
                        preferred_element_type=jnp.float32)
        else:
            y = None
            for k in range(3):
                tap = hp_ref[pl.ds(pad0 + k - 1, t_out), :]
                part = jnp.dot(tap.astype(wo.dtype),
                               wo[k * w_lanes:(k + 1) * w_lanes, :],
                               preferred_element_type=jnp.float32)
                y = part if y is None else y + part
        y = y + bo_ref[...]
        o_ref[0] = y.astype(o_ref.dtype)
    else:
        if out_halo > 0:
            z = jnp.zeros((out_halo, w_lanes), jnp.float32)
            y = jnp.concatenate([z, x, z], axis=0)           # zero halos for next level
        else:
            y = x
        o_ref[0] = y.astype(o_ref.dtype)


def encoder_level_pallas(xp, down_wb, res_wb, out_wb, *, stride, dilations,
                         out_halo):
    """One fused down-sampling level.

    xp: (B, Tp, W) channels-last, ALREADY padded with stride//2 zero halo rows
        on each side (emitted by the producing kernel).
    down_wb: (w (2s, W, W), b (W,)).   res_wb: [((w1,b1),(w2,b2)), ...].
    out_wb:  if not None, Conv1d(W, Cout, 3, 1, 1) is fused as an epilogue and
             the output is (B, t_out, Cout); otherwise the output is
             (B, out_halo + t_out + out_halo, W) with zero halo rows.
    """
    B, Tp, W = xp.shape
    wd, bd = down_wb
    K = wd.shape[0]                                          # 2 * stride
    t_out = (Tp - K) // stride + 1

    if stride > 1 and K == 2 * stride and Tp % stride == 0:
        # free space-to-depth reshape: stride-s, k=2s conv -> stride-1, 2-tap conv
        sd = xp.reshape(B, Tp // stride, stride * W)
        down_offsets = (0, 1)
        sdc = stride * W
    else:
        # TODO(synk): generic fallback builds a K-times im2col in HBM; real
        #             configs (stride_t=2, even lengths) never hit it.
        span = stride * (t_out - 1) + 1
        sd = jnp.concatenate(
            [jax.lax.slice(xp, (0, k, 0), (B, k + span, W), (1, stride, 1))
             for k in range(K)], axis=2)
        down_offsets = (0,)
        sdc = K * W
    G = sd.shape[1]

    depth = len(res_wb)
    wd_r = wd.reshape(K * W, W).astype(jnp.bfloat16)
    bd_r = bd.reshape(1, W).astype(jnp.float32)
    w1 = jnp.stack([blk[0][0].reshape(3 * W, W) for blk in res_wb]).astype(jnp.bfloat16)
    b1 = jnp.stack([blk[0][1].reshape(1, W) for blk in res_wb]).astype(jnp.float32)
    w2 = jnp.stack([blk[1][0].reshape(W, W) for blk in res_wb]).astype(jnp.bfloat16)
    b2 = jnp.stack([blk[1][1].reshape(1, W) for blk in res_wb]).astype(jnp.float32)

    fuse_out = out_wb is not None
    if fuse_out:
        wo, bo = out_wb
        cout = wo.shape[2]
        wo_r = wo.reshape(3 * W, cout).astype(jnp.bfloat16)
        bo_r = bo.reshape(1, cout).astype(jnp.float32)
        out_rows, out_cols = t_out, cout
    else:
        out_rows, out_cols = out_halo + t_out + out_halo, W

    dmax = max(dilations)
    pad0 = _round_up(dmax, 8)                                # 8-aligned interior start
    halo_hi = _round_up(dmax, 8)

    kernel = functools.partial(
        _level_kernel, down_offsets=down_offsets, dilations=tuple(dilations),
        t_out=t_out, pad0=pad0, halo_hi=halo_hi,
        down_concat=(sdc % 128 == 0), res_concat=(W % 128 == 0),
        out_halo=out_halo, fuse_out=fuse_out)

    in_specs = [
        pl.BlockSpec((1, G, sdc), lambda bi: (bi, 0, 0)),
        pl.BlockSpec((K * W, W), lambda bi: (0, 0)),
        pl.BlockSpec((1, W), lambda bi: (0, 0)),
        pl.BlockSpec((depth, 3 * W, W), lambda bi: (0, 0, 0)),
        pl.BlockSpec((depth, 1, W), lambda bi: (0, 0, 0)),
        pl.BlockSpec((depth, W, W), lambda bi: (0, 0, 0)),
        pl.BlockSpec((depth, 1, W), lambda bi: (0, 0, 0)),
    ]
    args = [sd, wd_r, bd_r, w1, b1, w2, b2]
    if fuse_out:
        in_specs += [pl.BlockSpec((3 * W, out_cols), lambda bi: (0, 0)),
                     pl.BlockSpec((1, out_cols), lambda bi: (0, 0))]
        args += [wo_r, bo_r]

    flops = 2 * t_out * (K * W) * W
    flops += depth * (2 * t_out * (3 * W) * W + 2 * t_out * W * W)
    if fuse_out:
        flops += 2 * t_out * (3 * W) * out_cols
    flops *= B
    w_bytes = 2 * (wd_r.size + w1.size + w2.size) + 4 * (bd_r.size + b1.size + b2.size)
    if fuse_out:
        w_bytes += 2 * wo_r.size + 4 * bo_r.size
    bytes_accessed = 4 * sd.size + w_bytes + 4 * B * out_rows * out_cols

    return pl.pallas_call(
        kernel,
        out_shape=jax.ShapeDtypeStruct((B, out_rows, out_cols), xp.dtype),
        grid=(B,),
        in_specs=in_specs,
        out_specs=pl.BlockSpec((1, out_rows, out_cols), lambda bi: (bi, 0, 0)),
        scratch_shapes=[pltpu.VMEM((pad0 + t_out + halo_hi, W), jnp.float32)],
        compiler_params=pltpu.CompilerParams(
            dimension_semantics=("parallel",),
            vmem_limit_bytes=_VMEM_LIMIT_BYTES),
        cost_estimate=pl.CostEstimate(flops=flops, transcendentals=0,
                                      bytes_accessed=bytes_accessed),
    )(*args)


# ----------------------------------------------------------------------------
# Encoder forward (Pallas path).
# ----------------------------------------------------------------------------
def encoder_apply_pallas(params, x_nct, cfg):
    assert cfg['down_t'] >= 1 and cfg['depth'] >= 1
    stride = cfg['stride_t']
    pad_t = stride // 2
    x = jnp.transpose(x_nct, (0, 2, 1))          # NCW -> NWC (channels on lanes)
    w, b = params['in']
    h = conv_in_pallas(x, w, b, halo=pad_t)      # (B, T + 2*pad_t, W), ReLU'd
    # Resnet1D uses reverse_dilation=True -> dilations applied in reversed order
    dilations = [cfg['dilation_growth_rate'] ** d for d in range(cfg['depth'])][::-1]
    for i in range(cfg['down_t']):
        last = (i == cfg['down_t'] - 1)
        h = encoder_level_pallas(
            h, params['down'][i], params['res'][i],
            out_wb=params['out'] if last else None,
            stride=stride, dilations=dilations,
            out_halo=0 if last else pad_t)
    return jnp.transpose(h, (0, 2, 1))           # back to NCW


# ----------------------------------------------------------------------------
# Pure-JAX reference (correctness check only, f32 / HIGHEST precision).
# ----------------------------------------------------------------------------
def conv1d_reference(x, w, b, *, stride=1, pad=0, dilation=1,
                     relu_in=False, relu_out=False, residual=None):
    if relu_in:
        x = jnp.maximum(x, 0.0)
    y = jax.lax.conv_general_dilated(
        x, w, window_strides=(stride,), padding=[(pad, pad)],
        rhs_dilation=(dilation,),
        dimension_numbers=('NWC', 'WIO', 'NWC'),
        precision=jax.lax.Precision.HIGHEST)
    y = y + b[None, None, :]
    if relu_out:
        y = jnp.maximum(y, 0.0)
    if residual is not None:
        y = y + residual
    return y


def encoder_apply_reference(params, x_nct, cfg):
    x = jnp.transpose(x_nct, (0, 2, 1))
    w, b = params['in']
    x = conv1d_reference(x, w, b, pad=1, relu_out=True)
    pad_t = cfg['stride_t'] // 2
    dilations = [cfg['dilation_growth_rate'] ** d for d in range(cfg['depth'])][::-1]
    for i in range(cfg['down_t']):
        w, b = params['down'][i]
        x = conv1d_reference(x, w, b, stride=cfg['stride_t'], pad=pad_t)
        for j, d in enumerate(dilations):
            (w1, b1), (w2, b2) = params['res'][i][j]
            h = conv1d_reference(x, w1, b1, pad=d, dilation=d, relu_in=True)
            x = conv1d_reference(h, w2, b2, relu_in=True, residual=x)
    w, b = params['out']
    x = conv1d_reference(x, w, b, pad=1)
    return jnp.transpose(x, (0, 2, 1))


# ----------------------------------------------------------------------------
# Deterministic parameter init (PyTorch-Conv1d-style uniform bounds).
# Weights stored as (K, Cin, Cout) == torch weight (Cout, Cin, K) transposed.
# ----------------------------------------------------------------------------
def _init_conv(key, cin, cout, k):
    bound = 1.0 / math.sqrt(cin * k)
    kw, kb = jax.random.split(key)
    w = jax.random.uniform(kw, (k, cin, cout), jnp.float32, -bound, bound)
    b = jax.random.uniform(kb, (cout,), jnp.float32, -bound, bound)
    return w, b


def init_encoder_params(key, cfg):
    ks = iter(jax.random.split(key, 128))
    p = {}
    p['in'] = _init_conv(next(ks), cfg['input_emb_width'], cfg['width'], 3)
    p['down'], p['res'] = [], []
    filter_t = cfg['stride_t'] * 2
    for _ in range(cfg['down_t']):
        p['down'].append(_init_conv(next(ks), cfg['width'], cfg['width'], filter_t))
        blocks = []
        for _ in range(cfg['depth']):
            c1 = _init_conv(next(ks), cfg['width'], cfg['width'], 3)
            c2 = _init_conv(next(ks), cfg['width'], cfg['width'], 1)
            blocks.append((c1, c2))
        p['res'].append(blocks)
    p['out'] = _init_conv(next(ks), cfg['width'], cfg['output_emb_width'], 3)
    return p


if __name__ == "__main__":
    # Small but lane-friendly config (real module default width is 512; 128 keeps
    # the demo small while exercising the lane-aligned single-matmul fast path).
    cfg = dict(input_emb_width=3, output_emb_width=128, width=128,
               down_t=2, stride_t=2, depth=3, dilation_growth_rate=3)
    B, T = 2, 64

    key = jax.random.PRNGKey(0)
    pkey, xkey = jax.random.split(key)
    params = init_encoder_params(pkey, cfg)
    x = jax.random.normal(xkey, (B, cfg['input_emb_width'], T), jnp.float32)  # NCW

    fwd = jax.jit(functools.partial(encoder_apply_pallas, cfg=cfg))
    y = jax.block_until_ready(fwd(params, x))

    t_exp = T // (cfg['stride_t'] ** cfg['down_t'])
    assert y.shape == (B, cfg['output_emb_width'], t_exp), y.shape

    y_ref = encoder_apply_reference(params, x, cfg)
    max_err = float(jnp.max(jnp.abs(y - y_ref)))
    scale = float(jnp.max(jnp.abs(y_ref)))
    # bf16 MXU operands (f32 accumulation / residual): loosened tolerance.
    assert max_err <= 3e-2 * max(1.0, scale), \
        f"mismatch vs reference: {max_err} (ref scale {scale})"

    print("KERNEL_OK")
</pallas_src>

<mosaic_0001>
module attributes {stable_mosaic.version = 11 : i64} {
  func.func @_conv_in_kernel(%arg0: i32, %arg1: memref<1x64x9xf32, #tpu.memory_space<vmem>>, %arg2: memref<9x128xbf16, #tpu.memory_space<vmem>>, %arg3: memref<1x128xf32, #tpu.memory_space<vmem>>, %arg4: memref<1x66x128xf32, #tpu.memory_space<vmem>>) attributes {dimension_semantics = [#tpu.dimension_semantics<parallel>], iteration_bounds = array<i64: 2>, scalar_prefetch = 0 : i64, scratch_operands = 0 : i64, tpu.core_type = #tpu.core_type<tc>, window_params = [{transform_indices = @transform_0, window_bounds = array<i64: 1, 64, 9>}, {pipeline_mode = #tpu.pipeline_mode<synchronous>, transform_indices = @transform_1, window_bounds = array<i64: 9, 128>}, {pipeline_mode = #tpu.pipeline_mode<synchronous>, transform_indices = @transform_2, window_bounds = array<i64: 1, 128>}, {transform_indices = @transform_3, window_bounds = array<i64: 1, 66, 128>}]} {
    %c0 = arith.constant 0 : index
    %c0_0 = arith.constant 0 : index
    %0 = vector.load %arg2[%c0, %c0_0] : memref<9x128xbf16, #tpu.memory_space<vmem>>, vector<9x128xbf16>
    %c0_1 = arith.constant 0 : index
    %c0_2 = arith.constant 0 : index
    %c0_3 = arith.constant 0 : index
    %1 = vector.load %arg1[%c0_1, %c0_2, %c0_3] : memref<1x64x9xf32, #tpu.memory_space<vmem>>, vector<1x64x9xf32>
    %2 = vector.shape_cast %1 : vector<1x64x9xf32> to vector<64x9xf32>
    %3 = arith.truncf %2 : vector<64x9xf32> to vector<64x9xbf16>
    %cst = arith.constant dense<0.000000e+00> : vector<64x128xf32>
    %4 = tpu.matmul %3, %0, %cst {dimension_numbers = #tpu.dot_dimension_numbers<[1], [0], [0], [1], [0, 0, 1, 1], [], []>} : vector<64x9xbf16>, vector<9x128xbf16>, vector<64x128xf32> -> vector<64x128xf32>
    %c0_4 = arith.constant 0 : index
    %c0_5 = arith.constant 0 : index
    %5 = vector.load %arg3[%c0_4, %c0_5] : memref<1x128xf32, #tpu.memory_space<vmem>>, vector<1x128xf32>
    %6 = vector.broadcast %5 : vector<1x128xf32> to vector<64x128xf32>
    %7 = arith.addf %4, %6 : vector<64x128xf32>
    %cst_6 = arith.constant 0.000000e+00 : f32
    %8 = vector.broadcast %cst_6 : f32 to vector<64x128xf32>
    %9 = arith.maximumf %7, %8 : vector<64x128xf32>
    %cst_7 = arith.constant 0.000000e+00 : f32
    %10 = vector.broadcast %cst_7 : f32 to vector<1x128xf32>
    %11 = tpu.concatenate %10, %9, %10 in 0 : vector<1x128xf32>, vector<64x128xf32>, vector<1x128xf32> -> vector<66x128xf32>
    %c0_8 = arith.constant 0 : index
    %c0_9 = arith.constant 0 : index
    %c0_10 = arith.constant 0 : index
    %12 = vector.load %arg4[%c0_8, %c0_9, %c0_10] : memref<1x66x128xf32, #tpu.memory_space<vmem>>, vector<1x66x128xf32>
    %13 = vector.shape_cast %12 : vector<1x66x128xf32> to vector<66x128xf32>
    %14 = vector.shape_cast %11 : vector<66x128xf32> to vector<1x66x128xf32>
    tpu.vector_store %arg4[%c0_8, %c0_9, %c0_10], %14 {strides = array<i32>} : memref<1x66x128xf32, #tpu.memory_space<vmem>>, vector<1x66x128xf32>,
    return
  }
  func.func @transform_0(%arg0: i32) -> (i32, i32, i32) {
    %c0_i32 = arith.constant 0 : i32
    %c0_i32_0 = arith.constant 0 : i32
    %c0_i32_1 = arith.constant 0 : i32
    return %arg0, %c0_i32, %c0_i32_0 : i32, i32, i32
  }
  func.func @transform_1(%arg0: i32) -> (i32, i32) {
    %c0_i32 = arith.constant 0 : i32
    %c0_i32_0 = arith.constant 0 : i32
    %c0_i32_1 = arith.constant 0 : i32
    return %c0_i32, %c0_i32_0 : i32, i32
  }
  func.func @transform_2(%arg0: i32) -> (i32, i32) {
    %c0_i32 = arith.constant 0 : i32
    %c0_i32_0 = arith.constant 0 : i32
    %c0_i32_1 = arith.constant 0 : i32
    return %c0_i32, %c0_i32_0 : i32, i32
  }
  func.func @transform_3(%arg0: i32) -> (i32, i32, i32) {
    %c0_i32 = arith.constant 0 : i32
    %c0_i32_0 = arith.constant 0 : i32
    %c0_i32_1 = arith.constant 0 : i32
    return %arg0, %c0_i32, %c0_i32_0 : i32, i32, i32
  }
}

module attributes {stable_mosaic.version = 11 : i64} {
  func.func @_level_kernel(%arg0: i32, %arg1: memref<1x33x256xf32, #tpu.memory_space<vmem>>, %arg2: memref<512x128xbf16, #tpu.memory_space<vmem>>, %arg3: memref<1x128xf32, #tpu.memory_space<vmem>>, %arg4: memref<3x384x128xbf16, #tpu.memory_space<vmem>>, %arg5: memref<3x1x128xf32, #tpu.memory_space<vmem>>, %arg6: memref<3x128x128xbf16, #tpu.memory_space<vmem>>, %arg7: memref<3x1x128xf32, #tpu.memory_space<vmem>>, %arg8: memref<1x34x128xf32, #tpu.memory_space<vmem>>, %arg9: memref<64x128xf32, #tpu.memory_space<vmem>>) attributes {dimension_semantics = [#tpu.dimension_semantics<parallel>], iteration_bounds = array<i64: 2>, scalar_prefetch = 0 : i64, scratch_operands = 1 : i64, tpu.core_type = #tpu.core_type<tc>, window_params = [{transform_indices = @transform_0, window_bounds = array<i64: 1, 33, 256>}, {pipeline_mode = #tpu.pipeline_mode<synchronous>, transform_indices = @transform_1, window_bounds = array<i64: 512, 128>}, {pipeline_mode = #tpu.pipeline_mode<synchronous>, transform_indices = @transform_2, window_bounds = array<i64: 1, 128>}, {pipeline_mode = #tpu.pipeline_mode<synchronous>, transform_indices = @transform_3, window_bounds = array<i64: 3, 384, 128>}, {pipeline_mode = #tpu.pipeline_mode<synchronous>, transform_indices = @transform_4, window_bounds = array<i64: 3, 1, 128>}, {pipeline_mode = #tpu.pipeline_mode<synchronous>, transform_indices = @transform_5, window_bounds = array<i64: 3, 128, 128>}, {pipeline_mode = #tpu.pipeline_mode<synchronous>, transform_indices = @transform_6, window_bounds = array<i64: 3, 1, 128>}, {transform_indices = @transform_7, window_bounds = array<i64: 1, 34, 128>}]} {
    %c0 = arith.constant 0 : index
    %c0_0 = arith.constant 0 : index
    %c0_1 = arith.constant 0 : index
    %0 = vector.load %arg1[%c0, %c0_0, %c0_1] : memref<1x33x256xf32, #tpu.memory_space<vmem>>, vector<1x33x256xf32>
    %1 = vector.shape_cast %0 : vector<1x33x256xf32> to vector<33x256xf32>
    %c0_2 = arith.constant 0 : index
    %c0_3 = arith.constant 0 : index
    %2 = vector.load %arg2[%c0_2, %c0_3] : memref<512x128xbf16, #tpu.memory_space<vmem>>, vector<512x128xbf16>
    %3 = vector.extract_strided_slice %1 {offsets = [0, 0], sizes = [32, 256], strides = [1, 1]} : vector<33x256xf32> to vector<32x256xf32>
    %4 = vector.extract_strided_slice %1 {offsets = [1, 0], sizes = [32, 256], strides = [1, 1]} : vector<33x256xf32> to vector<32x256xf32>
    %5 = tpu.concatenate %3, %4 in 1 : vector<32x256xf32>, vector<32x256xf32> -> vector<32x512xf32>
    %6 = arith.truncf %5 : vector<32x512xf32> to vector<32x512xbf16>
    %cst = arith.constant dense<0.000000e+00> : vector<32x128xf32>
    %7 = tpu.matmul %6, %2, %cst {dimension_numbers = #tpu.dot_dimension_numbers<[1], [0], [0], [1], [0, 0, 1, 1], [], []>} : vector<32x512xbf16>, vector<512x128xbf16>, vector<32x128xf32> -> vector<32x128xf32>
    %c0_4 = arith.constant 0 : index
    %c0_5 = arith.constant 0 : index
    %8 = vector.load %arg3[%c0_4, %c0_5] : memref<1x128xf32, #tpu.memory_space<vmem>>, vector<1x128xf32>
    %9 = vector.broadcast %8 : vector<1x128xf32> to vector<32x128xf32>
    %10 = arith.addf %7, %9 : vector<32x128xf32>
    %cst_6 = arith.constant 0.000000e+00 : f32
    %11 = vector.broadcast %cst_6 : f32 to vector<16x128xf32>
    %c0_7 = arith.constant 0 : index
    %c0_8 = arith.constant 0 : index
    %12 = vector.load %arg9[%c0_7, %c0_8] : memref<64x128xf32, #tpu.memory_space<vmem>>, vector<16x128xf32>
    tpu.vector_store %arg9[%c0_7, %c0_8], %11 {strides = array<i32>} : memref<64x128xf32, #tpu.memory_space<vmem>>, vector<16x128xf32>,
    %cst_9 = arith.constant 0.000000e+00 : f32
    %13 = vector.broadcast %cst_9 : f32 to vector<16x128xf32>
    %c48 = arith.constant 48 : index
    %c0_10 = arith.constant 0 : index
    %14 = vector.load %arg9[%c48, %c0_10] : memref<64x128xf32, #tpu.memory_space<vmem>>, vector<16x128xf32>
    tpu.vector_store %arg9[%c48, %c0_10], %13 {strides = array<i32>} : memref<64x128xf32, #tpu.memory_space<vmem>>, vector<16x128xf32>,
    %cst_11 = arith.constant 0.000000e+00 : f32
    %15 = vector.broadcast %cst_11 : f32 to vector<32x128xf32>
    %16 = arith.maximumf %10, %15 : vector<32x128xf32>
    %c16 = arith.constant 16 : index
    %c0_12 = arith.constant 0 : index
    %17 = vector.load %arg9[%c16, %c0_12] : memref<64x128xf32, #tpu.memory_space<vmem>>, vector<32x128xf32>
    tpu.vector_store %arg9[%c16, %c0_12], %16 {strides = array<i32>} : memref<64x128xf32, #tpu.memory_space<vmem>>, vector<32x128xf32>,
    %c0_13 = arith.constant 0 : index
    %c0_14 = arith.constant 0 : index
    %c0_15 = arith.constant 0 : index
    %18 = vector.load %arg4[%c0_13, %c0_14, %c0_15] : memref<3x384x128xbf16, #tpu.memory_space<vmem>>, vector<1x384x128xbf16>
    %19 = vector.shape_cast %18 : vector<1x384x128xbf16> to vector<384x128xbf16>
    %c7 = arith.constant 7 : index
    %c0_16 = arith.constant 0 : index
    %20 = vector.load %arg9[%c7, %c0_16] : memref<64x128xf32, #tpu.memory_space<vmem>>, vector<32x128xf32>
    %c16_17 = arith.constant 16 : index
    %c0_18 = arith.constant 0 : index
    %21 = vector.load %arg9[%c16_17, %c0_18] : memref<64x128xf32, #tpu.memory_space<vmem>>, vector<32x128xf32>
    %c25 = arith.constant 25 : index
    %c0_19 = arith.constant 0 : index
    %22 = vector.load %arg9[%c25, %c0_19] : memref<64x128xf32, #tpu.memory_space<vmem>>, vector<32x128xf32>
    %23 = tpu.concatenate %20, %21, %22 in 1 : vector<32x128xf32>, vector<32x128xf32>, vector<32x128xf32> -> vector<32x384xf32>
    %24 = arith.truncf %23 : vector<32x384xf32> to vector<32x384xbf16>
    %cst_20 = arith.constant dense<0.000000e+00> : vector<32x128xf32>
    %25 = tpu.matmul %24, %19, %cst_20 {dimension_numbers = #tpu.dot_dimension_numbers<[1], [0], [0], [1], [0, 0, 1, 1], [], []>} : vector<32x384xbf16>, vector<384x128xbf16>, vector<32x128xf32> -> vector<32x128xf32>
    %c0_21 = arith.constant 0 : index
    %c0_22 = arith.constant 0 : index
    %c0_23 = arith.constant 0 : index
    %26 = vector.load %arg5[%c0_21, %c0_22, %c0_23] : memref<3x1x128xf32, #tpu.memory_space<vmem>>, vector<1x1x128xf32>
    %27 = vector.shape_cast %26 : vector<1x1x128xf32> to vector<1x128xf32>
    %28 = vector.broadcast %27 : vector<1x128xf32> to vector<32x128xf32>
    %29 = arith.addf %25, %28 : vector<32x128xf32>
    %cst_24 = arith.constant 0.000000e+00 : f32
    %30 = vector.broadcast %cst_24 : f32 to vector<32x128xf32>
    %31 = arith.maximumf %29, %30 : vector<32x128xf32>
    %c0_25 = arith.constant 0 : index
    %c0_26 = arith.constant 0 : index
    %c0_27 = arith.constant 0 : index
    %32 = vector.load %arg6[%c0_25, %c0_26, %c0_27] : memref<3x128x128xbf16, #tpu.memory_space<vmem>>, vector<1x128x128xbf16>
    %33 = vector.shape_cast %32 : vector<1x128x128xbf16> to vector<128x128xbf16>
    %34 = arith.truncf %31 : vector<32x128xf32> to vector<32x128xbf16>
    %cst_28 = arith.constant dense<0.000000e+00> : vector<32x128xf32>
    %35 = tpu.matmul %34, %33, %cst_28 {dimension_numbers = #tpu.dot_dimension_numbers<[1], [0], [0], [1], [0, 0, 1, 1], [], []>} : vector<32x128xbf16>, vector<128x128xbf16>, vector<32x128xf32> -> vector<32x128xf32>
    %c0_29 = arith.constant 0 : index
    %c0_30 = arith.constant 0 : index
    %c0_31 = arith.constant 0 : index
    %36 = vector.load %arg7[%c0_29, %c0_30, %c0_31] : memref<3x1x128xf32, #tpu.memory_space<vmem>>, vector<1x1x128xf32>
    %37 = vector.shape_cast %36 : vector<1x1x128xf32> to vector<1x128xf32>
    %38 = vector.broadcast %37 : vector<1x128xf32> to vector<32x128xf32>
    %39 = arith.addf %35, %38 : vector<32x128xf32>
    %40 = arith.addf %10, %39 : vector<32x128xf32>
    %cst_32 = arith.constant 0.000000e+00 : f32
    %41 = vector.broadcast %cst_32 : f32 to vector<32x128xf32>
    %42 = arith.maximumf %40, %41 : vector<32x128xf32>
    %c16_33 = arith.constant 16 : index
    %c0_34 = arith.constant 0 : index
    %43 = vector.load %arg9[%c16_33, %c0_34] : memref<64x128xf32, #tpu.memory_space<vmem>>, vector<32x128xf32>
    tpu.vector_store %arg9[%c16_33, %c0_34], %42 {strides = array<i32>} : memref<64x128xf32, #tpu.memory_space<vmem>>, vector<32x128xf32>,
    %c1 = arith.constant 1 : index
    %c0_35 = arith.constant 0 : index
    %c0_36 = arith.constant 0 : index
    %44 = vector.load %arg4[%c1, %c0_35, %c0_36] : memref<3x384x128xbf16, #tpu.memory_space<vmem>>, vector<1x384x128xbf16>
    %45 = vector.shape_cast %44 : vector<1x384x128xbf16> to vector<384x128xbf16>
    %c13 = arith.constant 13 : index
    %c0_37 = arith.constant 0 : index
    %46 = vector.load %arg9[%c13, %c0_37] : memref<64x128xf32, #tpu.memory_space<vmem>>, vector<32x128xf32>
    %c16_38 = arith.constant 16 : index
    %c0_39 = arith.constant 0 : index
    %47 = vector.load %arg9[%c16_38, %c0_39] : memref<64x128xf32, #tpu.memory_space<vmem>>, vector<32x128xf32>
    %c19 = arith.constant 19 : index
    %c0_40 = arith.constant 0 : index
    %48 = vector.load %arg9[%c19, %c0_40] : memref<64x128xf32, #tpu.memory_space<vmem>>, vector<32x128xf32>
    %49 = tpu.concatenate %46, %47, %48 in 1 : vector<32x128xf32>, vector<32x128xf32>, vector<32x128xf32> -> vector<32x384xf32>
    %50 = arith.truncf %49 : vector<32x384xf32> to vector<32x384xbf16>
    %cst_41 = arith.constant dense<0.000000e+00> : vector<32x128xf32>
    %51 = tpu.matmul %50, %45, %cst_41 {dimension_numbers = #tpu.dot_dimension_numbers<[1], [0], [0], [1], [0, 0, 1, 1], [], []>} : vector<32x384xbf16>, vector<384x128xbf16>, vector<32x128xf32> -> vector<32x128xf32>
    %c1_42 = arith.constant 1 : index
    %c0_43 = arith.constant 0 : index
    %c0_44 = arith.constant 0 : index
    %52 = vector.load %arg5[%c1_42, %c0_43, %c0_44] : memref<3x1x128xf32, #tpu.memory_space<vmem>>, vector<1x1x128xf32>
    %53 = vector.shape_cast %52 : vector<1x1x128xf32> to vector<1x128xf32>
    %54 = vector.broadcast %53 : vector<1x128xf32> to vector<32x128xf32>
    %55 = arith.addf %51, %54 : vector<32x128xf32>
    %cst_45 = arith.constant 0.000000e+00 : f32
    %56 = vector.broadcast %cst_45 : f32 to vector<32x128xf32>
    %57 = arith.maximumf %55, %56 : vector<32x128xf32>
    %c1_46 = arith.constant 1 : index
    %c0_47 = arith.constant 0 : index
    %c0_48 = arith.constant 0 : index
    %58 = vector.load %arg6[%c1_46, %c0_47, %c0_48] : memref<3x128x128xbf16, #tpu.memory_space<vmem>>, vector<1x128x128xbf16>
    %59 = vector.shape_cast %58 : vector<1x128x128xbf16> to vector<128x128xbf16>
    %60 = arith.truncf %57 : vector<32x128xf32> to vector<32x128xbf16>
    %cst_49 = arith.constant dense<0.000000e+00> : vector<32x128xf32>
    %61 = tpu.matmul %60, %59, %cst_49 {dimension_numbers = #tpu.dot_dimension_numbers<[1], [0], [0], [1], [0, 0, 1, 1], [], []>} : vector<32x128xbf16>, vector<128x128xbf16>, vector<32x128xf32> -> vector<32x128xf32>
    %c1_50 = arith.constant 1 : index
    %c0_51 = arith.constant 0 : index
    %c0_52 = arith.constant 0 : index
    %62 = vector.load %arg7[%c1_50, %c0_51, %c0_52] : memref<3x1x128xf32, #tpu.memory_space<vmem>>, vector<1x1x128xf32>
    %63 = vector.shape_cast %62 : vector<1x1x128xf32> to vector<1x128xf32>
    %64 = vector.broadcast %63 : vector<1x128xf32> to vector<32x128xf32>
    %65 = arith.addf %61, %64 : vector<32x128xf32>
    %66 = arith.addf %40, %65 : vector<32x128xf32>
    %cst_53 = arith.constant 0.000000e+00 : f32
    %67 = vector.broadcast %cst_53 : f32 to vector<32x128xf32>
    %68 = arith.maximumf %66, %67 : vector<32x128xf32>
    %c16_54 = arith.constant 16 : index
    %c0_55 = arith.constant 0 : index
    %69 = vector.load %arg9[%c16_54, %c0_55] : memref<64x128xf32, #tpu.memory_space<vmem>>, vector<32x128xf32>
    tpu.vector_store %arg9[%c16_54, %c0_55], %68 {strides = array<i32>} : memref<64x128xf32, #tpu.memory_space<vmem>>, vector<32x128xf32>,
    %c2 = arith.constant 2 : index
    %c0_56 = arith.constant 0 : index
    %c0_57 = arith.constant 0 : index
    %70 = vector.load %arg4[%c2, %c0_56, %c0_57] : memref<3x384x128xbf16, #tpu.memory_space<vmem>>, vector<1x384x128xbf16>
    %71 = vector.shape_cast %70 : vector<1x384x128xbf16> to vector<384x128xbf16>
    %c15 = arith.constant 15 : index
    %c0_58 = arith.constant 0 : index
    %72 = vector.load %arg9[%c15, %c0_58] : memref<64x128xf32, #tpu.memory_space<vmem>>, vector<32x128xf32>
    %c16_59 = arith.constant 16 : index
    %c0_60 = arith.constant 0 : index
    %73 = vector.load %arg9[%c16_59, %c0_60] : memref<64x128xf32, #tpu.memory_space<vmem>>, vector<32x128xf32>
    %c17 = arith.constant 17 : index
    %c0_61 = arith.constant 0 : index
    %74 = vector.load %arg9[%c17, %c0_61] : memref<64x128xf32, #tpu.memory_space<vmem>>, vector<32x128xf32>
    %75 = tpu.concatenate %72, %73, %74 in 1 : vector<32x128xf32>, vector<32x128xf32>, vector<32x128xf32> -> vector<32x384xf32>
    %76 = arith.truncf %75 : vector<32x384xf32> to vector<32x384xbf16>
    %cst_62 = arith.constant dense<0.000000e+00> : vector<32x128xf32>
    %77 = tpu.matmul %76, %71, %cst_62 {dimension_numbers = #tpu.dot_dimension_numbers<[1], [0], [0], [1], [0, 0, 1, 1], [], []>} : vector<32x384xbf16>, vector<384x128xbf16>, vector<32x128xf32> -> vector<32x128xf32>
    %c2_63 = arith.constant 2 : index
    %c0_64 = arith.constant 0 : index
    %c0_65 = arith.constant 0 : index
    %78 = vector.load %arg5[%c2_63, %c0_64, %c0_65] : memref<3x1x128xf32, #tpu.memory_space<vmem>>, vector<1x1x128xf32>
    %79 = vector.shape_cast %78 : vector<1x1x128xf32> to vector<1x128xf32>
    %80 = vector.broadcast %79 : vector<1x128xf32> to vector<32x128xf32>
    %81 = arith.addf %77, %80 : vector<32x128xf32>
    %cst_66 = arith.constant 0.000000e+00 : f32
    %82 = vector.broadcast %cst_66 : f32 to vector<32x128xf32>
    %83 = arith.maximumf %81, %82 : vector<32x128xf32>
    %c2_67 = arith.constant 2 : index
    %c0_68 = arith.constant 0 : index
    %c0_69 = arith.constant 0 : index
    %84 = vector.load %arg6[%c2_67, %c0_68, %c0_69] : memref<3x128x128xbf16, #tpu.memory_space<vmem>>, vector<1x128x128xbf16>
    %85 = vector.shape_cast %84 : vector<1x128x128xbf16> to vector<128x128xbf16>
    %86 = arith.truncf %83 : vector<32x128xf32> to vector<32x128xbf16>
    %cst_70 = arith.constant dense<0.000000e+00> : vector<32x128xf32>
    %87 = tpu.matmul %86, %85, %cst_70 {dimension_numbers = #tpu.dot_dimension_numbers<[1], [0], [0], [1], [0, 0, 1, 1], [], []>} : vector<32x128xbf16>, vector<128x128xbf16>, vector<32x128xf32> -> vector<32x128xf32>
    %c2_71 = arith.constant 2 : index
    %c0_72 = arith.constant 0 : index
    %c0_73 = arith.constant 0 : index
    %88 = vector.load %arg7[%c2_71, %c0_72, %c0_73] : memref<3x1x128xf32, #tpu.memory_space<vmem>>, vector<1x1x128xf32>
    %89 = vector.shape_cast %88 : vector<1x1x128xf32> to vector<1x128xf32>
    %90 = vector.broadcast %89 : vector<1x128xf32> to vector<32x128xf32>
    %91 = arith.addf %87, %90 : vector<32x128xf32>
    %92 = arith.addf %66, %91 : vector<32x128xf32>
    %cst_74 = arith.constant 0.000000e+00 : f32
    %93 = vector.broadcast %cst_74 : f32 to vector<1x128xf32>
    %94 = tpu.concatenate %93, %92, %93 in 0 : vector<1x128xf32>, vector<32x128xf32>, vector<1x128xf32> -> vector<34x128xf32>
    %c0_75 = arith.constant 0 : index
    %c0_76 = arith.constant 0 : index
    %c0_77 = arith.constant 0 : index
    %95 = vector.load %arg8[%c0_75, %c0_76, %c0_77] : memref<1x34x128xf32, #tpu.memory_space<vmem>>, vector<1x34x128xf32>
    %96 = vector.shape_cast %95 : vector<1x34x128xf32> to vector<34x128xf32>
    %97 = vector.shape_cast %94 : vector<34x128xf32> to vector<1x34x128xf32>
    tpu.vector_store %arg8[%c0_75, %c0_76, %c0_77], %97 {strides = array<i32>} : memref<1x34x128xf32, #tpu.memory_space<vmem>>, vector<1x34x128xf32>,
    return
  }
  func.func @transform_0(%arg0: i32) -> (i32, i32, i32) {
    %c0_i32 = arith.constant 0 : i32
    %c0_i32_0 = arith.constant 0 : i32
    %c0_i32_1 = arith.constant 0 : i32
    return %arg0, %c0_i32, %c0_i32_0 : i32, i32, i32
  }
  func.func @transform_1(%arg0: i32) -> (i32, i32) {
    %c0_i32 = arith.constant 0 : i32
    %c0_i32_0 = arith.constant 0 : i32
    %c0_i32_1 = arith.constant 0 : i32
    return %c0_i32, %c0_i32_0 : i32, i32
  }
  func.func @transform_2(%arg0: i32) -> (i32, i32) {
    %c0_i32 = arith.constant 0 : i32
    %c0_i32_0 = arith.constant 0 : i32
    %c0_i32_1 = arith.constant 0 : i32
    return %c0_i32, %c0_i32_0 : i32, i32
  }
  func.func @transform_3(%arg0: i32) -> (i32, i32, i32) {
    %c0_i32 = arith.constant 0 : i32
    %c0_i32_0 = arith.constant 0 : i32
    %c0_i32_1 = arith.constant 0 : i32
    %c0_i32_2 = arith.constant 0 : i32
    return %c0_i32, %c0_i32_0, %c0_i32_1 : i32, i32, i32
  }
  func.func @transform_4(%arg0: i32) -> (i32, i32, i32) {
    %c0_i32 = arith.constant 0 : i32
    %c0_i32_0 = arith.constant 0 : i32
    %c0_i32_1 = arith.constant 0 : i32
    %c0_i32_2 = arith.constant 0 : i32
    return %c0_i32, %c0_i32_0, %c0_i32_1 : i32, i32, i32
  }
  func.func @transform_5(%arg0: i32) -> (i32, i32, i32) {
    %c0_i32 = arith.constant 0 : i32
    %c0_i32_0 = arith.constant 0 : i32
    %c0_i32_1 = arith.constant 0 : i32
    %c0_i32_2 = arith.constant 0 : i32
    return %c0_i32, %c0_i32_0, %c0_i32_1 : i32, i32, i32
  }
  func.func @transform_6(%arg0: i32) -> (i32, i32, i32) {
    %c0_i32 = arith.constant 0 : i32
    %c0_i32_0 = arith.constant 0 : i32
    %c0_i32_1 = arith.constant 0 : i32
    %c0_i32_2 = arith.constant 0 : i32
    return %c0_i32, %c0_i32_0, %c0_i32_1 : i32, i32, i32
  }
  func.func @transform_7(%arg0: i32) -> (i32, i32, i32) {
    %c0_i32 = arith.constant 0 : i32
    %c0_i32_0 = arith.constant 0 : i32
    %c0_i32_1 = arith.constant 0 : i32
    return %arg0, %c0_i32, %c0_i32_0 : i32, i32, i32
  }
}

module attributes {stable_mosaic.version = 11 : i64} {
  func.func @_level_kernel(%arg0: i32, %arg1: memref<1x17x256xf32, #tpu.memory_space<vmem>>, %arg2: memref<512x128xbf16, #tpu.memory_space<vmem>>, %arg3: memref<1x128xf32, #tpu.memory_space<vmem>>, %arg4: memref<3x384x128xbf16, #tpu.memory_space<vmem>>, %arg5: memref<3x1x128xf32, #tpu.memory_space<vmem>>, %arg6: memref<3x128x128xbf16, #tpu.memory_space<vmem>>, %arg7: memref<3x1x128xf32, #tpu.memory_space<vmem>>, %arg8: memref<384x128xbf16, #tpu.memory_space<vmem>>, %arg9: memref<1x128xf32, #tpu.memory_space<vmem>>, %arg10: memref<1x16x128xf32, #tpu.memory_space<vmem>>, %arg11: memref<48x128xf32, #tpu.memory_space<vmem>>) attributes {dimension_semantics = [#tpu.dimension_semantics<parallel>], iteration_bounds = array<i64: 2>, scalar_prefetch = 0 : i64, scratch_operands = 1 : i64, tpu.core_type = #tpu.core_type<tc>, window_params = [{transform_indices = @transform_0, window_bounds = array<i64: 1, 17, 256>}, {pipeline_mode = #tpu.pipeline_mode<synchronous>, transform_indices = @transform_1, window_bounds = array<i64: 512, 128>}, {pipeline_mode = #tpu.pipeline_mode<synchronous>, transform_indices = @transform_2, window_bounds = array<i64: 1, 128>}, {pipeline_mode = #tpu.pipeline_mode<synchronous>, transform_indices = @transform_3, window_bounds = array<i64: 3, 384, 128>}, {pipeline_mode = #tpu.pipeline_mode<synchronous>, transform_indices = @transform_4, window_bounds = array<i64: 3, 1, 128>}, {pipeline_mode = #tpu.pipeline_mode<synchronous>, transform_indices = @transform_5, window_bounds = array<i64: 3, 128, 128>}, {pipeline_mode = #tpu.pipeline_mode<synchronous>, transform_indices = @transform_6, window_bounds = array<i64: 3, 1, 128>}, {pipeline_mode = #tpu.pipeline_mode<synchronous>, transform_indices = @transform_7, window_bounds = array<i64: 384, 128>}, {pipeline_mode = #tpu.pipeline_mode<synchronous>, transform_indices = @transform_8, window_bounds = array<i64: 1, 128>}, {transform_indices = @transform_9, window_bounds = array<i64: 1, 16, 128>}]} {
    %c0 = arith.constant 0 : index
    %c0_0 = arith.constant 0 : index
    %c0_1 = arith.constant 0 : index
    %0 = vector.load %arg1[%c0, %c0_0, %c0_1] : memref<1x17x256xf32, #tpu.memory_space<vmem>>, vector<1x17x256xf32>
    %1 = vector.shape_cast %0 : vector<1x17x256xf32> to vector<17x256xf32>
    %c0_2 = arith.constant 0 : index
    %c0_3 = arith.constant 0 : index
    %2 = vector.load %arg2[%c0_2, %c0_3] : memref<512x128xbf16, #tpu.memory_space<vmem>>, vector<512x128xbf16>
    %3 = vector.extract_strided_slice %1 {offsets = [0, 0], sizes = [16, 256], strides = [1, 1]} : vector<17x256xf32> to vector<16x256xf32>
    %4 = vector.extract_strided_slice %1 {offsets = [1, 0], sizes = [16, 256], strides = [1, 1]} : vector<17x256xf32> to vector<16x256xf32>
    %5 = tpu.concatenate %3, %4 in 1 : vector<16x256xf32>, vector<16x256xf32> -> vector<16x512xf32>
    %6 = arith.truncf %5 : vector<16x512xf32> to vector<16x512xbf16>
    %cst = arith.constant dense<0.000000e+00> : vector<16x128xf32>
    %7 = tpu.matmul %6, %2, %cst {dimension_numbers = #tpu.dot_dimension_numbers<[1], [0], [0], [1], [0, 0, 1, 1], [], []>} : vector<16x512xbf16>, vector<512x128xbf16>, vector<16x128xf32> -> vector<16x128xf32>
    %c0_4 = arith.constant 0 : index
    %c0_5 = arith.constant 0 : index
    %8 = vector.load %arg3[%c0_4, %c0_5] : memref<1x128xf32, #tpu.memory_space<vmem>>, vector<1x128xf32>
    %9 = vector.broadcast %8 : vector<1x128xf32> to vector<16x128xf32>
    %10 = arith.addf %7, %9 : vector<16x128xf32>
    %cst_6 = arith.constant 0.000000e+00 : f32
    %11 = vector.broadcast %cst_6 : f32 to vector<16x128xf32>
    %c0_7 = arith.constant 0 : index
    %c0_8 = arith.constant 0 : index
    %12 = vector.load %arg11[%c0_7, %c0_8] : memref<48x128xf32, #tpu.memory_space<vmem>>, vector<16x128xf32>
    tpu.vector_store %arg11[%c0_7, %c0_8], %11 {strides = array<i32>} : memref<48x128xf32, #tpu.memory_space<vmem>>, vector<16x128xf32>,
    %cst_9 = arith.constant 0.000000e+00 : f32
    %13 = vector.broadcast %cst_9 : f32 to vector<16x128xf32>
    %c32 = arith.constant 32 : index
    %c0_10 = arith.constant 0 : index
    %14 = vector.load %arg11[%c32, %c0_10] : memref<48x128xf32, #tpu.memory_space<vmem>>, vector<16x128xf32>
    tpu.vector_store %arg11[%c32, %c0_10], %13 {strides = array<i32>} : memref<48x128xf32, #tpu.memory_space<vmem>>, vector<16x128xf32>,
    %cst_11 = arith.constant 0.000000e+00 : f32
    %15 = vector.broadcast %cst_11 : f32 to vector<16x128xf32>
    %16 = arith.maximumf %10, %15 : vector<16x128xf32>
    %c16 = arith.constant 16 : index
    %c0_12 = arith.constant 0 : index
    %17 = vector.load %arg11[%c16, %c0_12] : memref<48x128xf32, #tpu.memory_space<vmem>>, vector<16x128xf32>
    tpu.vector_store %arg11[%c16, %c0_12], %16 {strides = array<i32>} : memref<48x128xf32, #tpu.memory_space<vmem>>, vector<16x128xf32>,
    %c0_13 = arith.constant 0 : index
    %c0_14 = arith.constant 0 : index
    %c0_15 = arith.constant 0 : index
    %18 = vector.load %arg4[%c0_13, %c0_14, %c0_15] : memref<3x384x128xbf16, #tpu.memory_space<vmem>>, vector<1x384x128xbf16>
    %19 = vector.shape_cast %18 : vector<1x384x128xbf16> to vector<384x128xbf16>
    %c7 = arith.constant 7 : index
    %c0_16 = arith.constant 0 : index
    %20 = vector.load %arg11[%c7, %c0_16] : memref<48x128xf32, #tpu.memory_space<vmem>>, vector<16x128xf32>
    %c16_17 = arith.constant 16 : index
    %c0_18 = arith.constant 0 : index
    %21 = vector.load %arg11[%c16_17, %c0_18] : memref<48x128xf32, #tpu.memory_space<vmem>>, vector<16x128xf32>
    %c25 = arith.constant 25 : index
    %c0_19 = arith.constant 0 : index
    %22 = vector.load %arg11[%c25, %c0_19] : memref<48x128xf32, #tpu.memory_space<vmem>>, vector<16x128xf32>
    %23 = tpu.concatenate %20, %21, %22 in 1 : vector<16x128xf32>, vector<16x128xf32>, vector<16x128xf32> -> vector<16x384xf32>
    %24 = arith.truncf %23 : vector<16x384xf32> to vector<16x384xbf16>
    %cst_20 = arith.constant dense<0.000000e+00> : vector<16x128xf32>
    %25 = tpu.matmul %24, %19, %cst_20 {dimension_numbers = #tpu.dot_dimension_numbers<[1], [0], [0], [1], [0, 0, 1, 1], [], []>} : vector<16x384xbf16>, vector<384x128xbf16>, vector<16x128xf32> -> vector<16x128xf32>
    %c0_21 = arith.constant 0 : index
    %c0_22 = arith.constant 0 : index
    %c0_23 = arith.constant 0 : index
    %26 = vector.load %arg5[%c0_21, %c0_22, %c0_23] : memref<3x1x128xf32, #tpu.memory_space<vmem>>, vector<1x1x128xf32>
    %27 = vector.shape_cast %26 : vector<1x1x128xf32> to vector<1x128xf32>
    %28 = vector.broadcast %27 : vector<1x128xf32> to vector<16x128xf32>
    %29 = arith.addf %25, %28 : vector<16x128xf32>
    %cst_24 = arith.constant 0.000000e+00 : f32
    %30 = vector.broadcast %cst_24 : f32 to vector<16x128xf32>
    %31 = arith.maximumf %29, %30 : vector<16x128xf32>
    %c0_25 = arith.constant 0 : index
    %c0_26 = arith.constant 0 : index
    %c0_27 = arith.constant 0 : index
    %32 = vector.load %arg6[%c0_25, %c0_26, %c0_27] : memref<3x128x128xbf16, #tpu.memory_space<vmem>>, vector<1x128x128xbf16>
    %33 = vector.shape_cast %32 : vector<1x128x128xbf16> to vector<128x128xbf16>
    %34 = arith.truncf %31 : vector<16x128xf32> to vector<16x128xbf16>
    %cst_28 = arith.constant dense<0.000000e+00> : vector<16x128xf32>
    %35 = tpu.matmul %34, %33, %cst_28 {dimension_numbers = #tpu.dot_dimension_numbers<[1], [0], [0], [1], [0, 0, 1, 1], [], []>} : vector<16x128xbf16>, vector<128x128xbf16>, vector<16x128xf32> -> vector<16x128xf32>
    %c0_29 = arith.constant 0 : index
    %c0_30 = arith.constant 0 : index
    %c0_31 = arith.constant 0 : index
    %36 = vector.load %arg7[%c0_29, %c0_30, %c0_31] : memref<3x1x128xf32, #tpu.memory_space<vmem>>, vector<1x1x128xf32>
    %37 = vector.shape_cast %36 : vector<1x1x128xf32> to vector<1x128xf32>
    %38 = vector.broadcast %37 : vector<1x128xf32> to vector<16x128xf32>
    %39 = arith.addf %35, %38 : vector<16x128xf32>
    %40 = arith.addf %10, %39 : vector<16x128xf32>
    %cst_32 = arith.constant 0.000000e+00 : f32
    %41 = vector.broadcast %cst_32 : f32 to vector<16x128xf32>
    %42 = arith.maximumf %40, %41 : vector<16x128xf32>
    %c16_33 = arith.constant 16 : index
    %c0_34 = arith.constant 0 : index
    %43 = vector.load %arg11[%c16_33, %c0_34] : memref<48x128xf32, #tpu.memory_space<vmem>>, vector<16x128xf32>
    tpu.vector_store %arg11[%c16_33, %c0_34], %42 {strides = array<i32>} : memref<48x128xf32, #tpu.memory_space<vmem>>, vector<16x128xf32>,
    %c1 = arith.constant 1 : index
    %c0_35 = arith.constant 0 : index
    %c0_36 = arith.constant 0 : index
    %44 = vector.load %arg4[%c1, %c0_35, %c0_36] : memref<3x384x128xbf16, #tpu.memory_space<vmem>>, vector<1x384x128xbf16>
    %45 = vector.shape_cast %44 : vector<1x384x128xbf16> to vector<384x128xbf16>
    %c13 = arith.constant 13 : index
    %c0_37 = arith.constant 0 : index
    %46 = vector.load %arg11[%c13, %c0_37] : memref<48x128xf32, #tpu.memory_space<vmem>>, vector<16x128xf32>
    %c16_38 = arith.constant 16 : index
    %c0_39 = arith.constant 0 : index
    %47 = vector.load %arg11[%c16_38, %c0_39] : memref<48x128xf32, #tpu.memory_space<vmem>>, vector<16x128xf32>
    %c19 = arith.constant 19 : index
    %c0_40 = arith.constant 0 : index
    %48 = vector.load %arg11[%c19, %c0_40] : memref<48x128xf32, #tpu.memory_space<vmem>>, vector<16x128xf32>
    %49 = tpu.concatenate %46, %47, %48 in 1 : vector<16x128xf32>, vector<16x128xf32>, vector<16x128xf32> -> vector<16x384xf32>
    %50 = arith.truncf %49 : vector<16x384xf32> to vector<16x384xbf16>
    %cst_41 = arith.constant dense<0.000000e+00> : vector<16x128xf32>
    %51 = tpu.matmul %50, %45, %cst_41 {dimension_numbers = #tpu.dot_dimension_numbers<[1], [0], [0], [1], [0, 0, 1, 1], [], []>} : vector<16x384xbf16>, vector<384x128xbf16>, vector<16x128xf32> -> vector<16x128xf32>
    %c1_42 = arith.constant 1 : index
    %c0_43 = arith.constant 0 : index
    %c0_44 = arith.constant 0 : index
    %52 = vector.load %arg5[%c1_42, %c0_43, %c0_44] : memref<3x1x128xf32, #tpu.memory_space<vmem>>, vector<1x1x128xf32>
    %53 = vector.shape_cast %52 : vector<1x1x128xf32> to vector<1x128xf32>
    %54 = vector.broadcast %53 : vector<1x128xf32> to vector<16x128xf32>
    %55 = arith.addf %51, %54 : vector<16x128xf32>
    %cst_45 = arith.constant 0.000000e+00 : f32
    %56 = vector.broadcast %cst_45 : f32 to vector<16x128xf32>
    %57 = arith.maximumf %55, %56 : vector<16x128xf32>
    %c1_46 = arith.constant 1 : index
    %c0_47 = arith.constant 0 : index
    %c0_48 = arith.constant 0 : index
    %58 = vector.load %arg6[%c1_46, %c0_47, %c0_48] : memref<3x128x128xbf16, #tpu.memory_space<vmem>>, vector<1x128x128xbf16>
    %59 = vector.shape_cast %58 : vector<1x128x128xbf16> to vector<128x128xbf16>
    %60 = arith.truncf %57 : vector<16x128xf32> to vector<16x128xbf16>
    %cst_49 = arith.constant dense<0.000000e+00> : vector<16x128xf32>
    %61 = tpu.matmul %60, %59, %cst_49 {dimension_numbers = #tpu.dot_dimension_numbers<[1], [0], [0], [1], [0, 0, 1, 1], [], []>} : vector<16x128xbf16>, vector<128x128xbf16>, vector<16x128xf32> -> vector<16x128xf32>
    %c1_50 = arith.constant 1 : index
    %c0_51 = arith.constant 0 : index
    %c0_52 = arith.constant 0 : index
    %62 = vector.load %arg7[%c1_50, %c0_51, %c0_52] : memref<3x1x128xf32, #tpu.memory_space<vmem>>, vector<1x1x128xf32>
    %63 = vector.shape_cast %62 : vector<1x1x128xf32> to vector<1x128xf32>
    %64 = vector.broadcast %63 : vector<1x128xf32> to vector<16x128xf32>
    %65 = arith.addf %61, %64 : vector<16x128xf32>
    %66 = arith.addf %40, %65 : vector<16x128xf32>
    %cst_53 = arith.constant 0.000000e+00 : f32
    %67 = vector.broadcast %cst_53 : f32 to vector<16x128xf32>
    %68 = arith.maximumf %66, %67 : vector<16x128xf32>
    %c16_54 = arith.constant 16 : index
    %c0_55 = arith.constant 0 : index
    %69 = vector.load %arg11[%c16_54, %c0_55] : memref<48x128xf32, #tpu.memory_space<vmem>>, vector<16x128xf32>
    tpu.vector_store %arg11[%c16_54, %c0_55], %68 {strides = array<i32>} : memref<48x128xf32, #tpu.memory_space<vmem>>, vector<16x128xf32>,
    %c2 = arith.constant 2 : index
    %c0_56 = arith.constant 0 : index
    %c0_57 = arith.constant 0 : index
    %70 = vector.load %arg4[%c2, %c0_56, %c0_57] : memref<3x384x128xbf16, #tpu.memory_space<vmem>>, vector<1x384x128xbf16>
    %71 = vector.shape_cast %70 : vector<1x384x128xbf16> to vector<384x128xbf16>
    %c15 = arith.constant 15 : index
    %c0_58 = arith.constant 0 : index
    %72 = vector.load %arg11[%c15, %c0_58] : memref<48x128xf32, #tpu.memory_space<vmem>>, vector<16x128xf32>
    %c16_59 = arith.constant 16 : index
    %c0_60 = arith.constant 0 : index
    %73 = vector.load %arg11[%c16_59, %c0_60] : memref<48x128xf32, #tpu.memory_space<vmem>>, vector<16x128xf32>
    %c17 = arith.constant 17 : index
    %c0_61 = arith.constant 0 : index
    %74 = vector.load %arg11[%c17, %c0_61] : memref<48x128xf32, #tpu.memory_space<vmem>>, vector<16x128xf32>
    %75 = tpu.concatenate %72, %73, %74 in 1 : vector<16x128xf32>, vector<16x128xf32>, vector<16x128xf32> -> vector<16x384xf32>
    %76 = arith.truncf %75 : vector<16x384xf32> to vector<16x384xbf16>
    %cst_62 = arith.constant dense<0.000000e+00> : vector<16x128xf32>
    %77 = tpu.matmul %76, %71, %cst_62 {dimension_numbers = #tpu.dot_dimension_numbers<[1], [0], [0], [1], [0, 0, 1, 1], [], []>} : vector<16x384xbf16>, vector<384x128xbf16>, vector<16x128xf32> -> vector<16x128xf32>
    %c2_63 = arith.constant 2 : index
    %c0_64 = arith.constant 0 : index
    %c0_65 = arith.constant 0 : index
    %78 = vector.load %arg5[%c2_63, %c0_64, %c0_65] : memref<3x1x128xf32, #tpu.memory_space<vmem>>, vector<1x1x128xf32>
    %79 = vector.shape_cast %78 : vector<1x1x128xf32> to vector<1x128xf32>
    %80 = vector.broadcast %79 : vector<1x128xf32> to vector<16x128xf32>
    %81 = arith.addf %77, %80 : vector<16x128xf32>
    %cst_66 = arith.constant 0.000000e+00 : f32
    %82 = vector.broadcast %cst_66 : f32 to vector<16x128xf32>
    %83 = arith.maximumf %81, %82 : vector<16x128xf32>
    %c2_67 = arith.constant 2 : index
    %c0_68 = arith.constant 0 : index
    %c0_69 = arith.constant 0 : index
    %84 = vector.load %arg6[%c2_67, %c0_68, %c0_69] : memref<3x128x128xbf16, #tpu.memory_space<vmem>>, vector<1x128x128xbf16>
    %85 = vector.shape_cast %84 : vector<1x128x128xbf16> to vector<128x128xbf16>
    %86 = arith.truncf %83 : vector<16x128xf32> to vector<16x128xbf16>
    %cst_70 = arith.constant dense<0.000000e+00> : vector<16x128xf32>
    %87 = tpu.matmul %86, %85, %cst_70 {dimension_numbers = #tpu.dot_dimension_numbers<[1], [0], [0], [1], [0, 0, 1, 1], [], []>} : vector<16x128xbf16>, vector<128x128xbf16>, vector<16x128xf32> -> vector<16x128xf32>
    %c2_71 = arith.constant 2 : index
    %c0_72 = arith.constant 0 : index
    %c0_73 = arith.constant 0 : index
    %88 = vector.load %arg7[%c2_71, %c0_72, %c0_73] : memref<3x1x128xf32, #tpu.memory_space<vmem>>, vector<1x1x128xf32>
    %89 = vector.shape_cast %88 : vector<1x1x128xf32> to vector<1x128xf32>
    %90 = vector.broadcast %89 : vector<1x128xf32> to vector<16x128xf32>
    %91 = arith.addf %87, %90 : vector<16x128xf32>
    %92 = arith.addf %66, %91 : vector<16x128xf32>
    %c16_74 = arith.constant 16 : index
    %c0_75 = arith.constant 0 : index
    %93 = vector.load %arg11[%c16_74, %c0_75] : memref<48x128xf32, #tpu.memory_space<vmem>>, vector<16x128xf32>
    tpu.vector_store %arg11[%c16_74, %c0_75], %92 {strides = array<i32>} : memref<48x128xf32, #tpu.memory_space<vmem>>, vector<16x128xf32>,
    %c0_76 = arith.constant 0 : index
    %c0_77 = arith.constant 0 : index
    %94 = vector.load %arg8[%c0_76, %c0_77] : memref<384x128xbf16, #tpu.memory_space<vmem>>, vector<384x128xbf16>
    %c15_78 = arith.constant 15 : index
    %c0_79 = arith.constant 0 : index
    %95 = vector.load %arg11[%c15_78, %c0_79] : memref<48x128xf32, #tpu.memory_space<vmem>>, vector<16x128xf32>
    %c16_80 = arith.constant 16 : index
    %c0_81 = arith.constant 0 : index
    %96 = vector.load %arg11[%c16_80, %c0_81] : memref<48x128xf32, #tpu.memory_space<vmem>>, vector<16x128xf32>
    %c17_82 = arith.constant 17 : index
    %c0_83 = arith.constant 0 : index
    %97 = vector.load %arg11[%c17_82, %c0_83] : memref<48x128xf32, #tpu.memory_space<vmem>>, vector<16x128xf32>
    %98 = tpu.concatenate %95, %96, %97 in 1 : vector<16x128xf32>, vector<16x128xf32>, vector<16x128xf32> -> vector<16x384xf32>
    %99 = arith.truncf %98 : vector<16x384xf32> to vector<16x384xbf16>
    %cst_84 = arith.constant dense<0.000000e+00> : vector<16x128xf32>
    %100 = tpu.matmul %99, %94, %cst_84 {dimension_numbers = #tpu.dot_dimension_numbers<[1], [0], [0], [1], [0, 0, 1, 1], [], []>} : vector<16x384xbf16>, vector<384x128xbf16>, vector<16x128xf32> -> vector<16x128xf32>
    %c0_85 = arith.constant 0 : index
    %c0_86 = arith.constant 0 : index
    %101 = vector.load %arg9[%c0_85, %c0_86] : memref<1x128xf32, #tpu.memory_space<vmem>>, vector<1x128xf32>
    %102 = vector.broadcast %101 : vector<1x128xf32> to vector<16x128xf32>
    %103 = arith.addf %100, %102 : vector<16x128xf32>
    %c0_87 = arith.constant 0 : index
    %c0_88 = arith.constant 0 : index
    %c0_89 = arith.constant 0 : index
    %104 = vector.load %arg10[%c0_87, %c0_88, %c0_89] : memref<1x16x128xf32, #tpu.memory_space<vmem>>, vector<1x16x128xf32>
    %105 = vector.shape_cast %104 : vector<1x16x128xf32> to vector<16x128xf32>
    %106 = vector.shape_cast %103 : vector<16x128xf32> to vector<1x16x128xf32>
    tpu.vector_store %arg10[%c0_87, %c0_88, %c0_89], %106 {strides = array<i32>} : memref<1x16x128xf32, #tpu.memory_space<vmem>>, vector<1x16x128xf32>,
    return
  }
  func.func @transform_0(%arg0: i32) -> (i32, i32, i32) {
    %c0_i32 = arith.constant 0 : i32
    %c0_i32_0 = arith.constant 0 : i32
    %c0_i32_1 = arith.constant 0 : i32
    return %arg0, %c0_i32, %c0_i32_0 : i32, i32, i32
  }
  func.func @transform_1(%arg0: i32) -> (i32, i32) {
    %c0_i32 = arith.constant 0 : i32
    %c0_i32_0 = arith.constant 0 : i32
    %c0_i32_1 = arith.constant 0 : i32
    return %c0_i32, %c0_i32_0 : i32, i32
  }
  func.func @transform_2(%arg0: i32) -> (i32, i32) {
    %c0_i32 = arith.constant 0 : i32
    %c0_i32_0 = arith.constant 0 : i32
    %c0_i32_1 = arith.constant 0 : i32
    return %c0_i32, %c0_i32_0 : i32, i32
  }
  func.func @transform_3(%arg0: i32) -> (i32, i32, i32) {
    %c0_i32 = arith.constant 0 : i32
    %c0_i32_0 = arith.constant 0 : i32
    %c0_i32_1 = arith.constant 0 : i32
    %c0_i32_2 = arith.constant 0 : i32
    return %c0_i32, %c0_i32_0, %c0_i32_1 : i32, i32, i32
  }
  func.func @transform_4(%arg0: i32) -> (i32, i32, i32) {
    %c0_i32 = arith.constant 0 : i32
    %c0_i32_0 = arith.constant 0 : i32
    %c0_i32_1 = arith.constant 0 : i32
    %c0_i32_2 = arith.constant 0 : i32
    return %c0_i32, %c0_i32_0, %c0_i32_1 : i32, i32, i32
  }
  func.func @transform_5(%arg0: i32) -> (i32, i32, i32) {
    %c0_i32 = arith.constant 0 : i32
    %c0_i32_0 = arith.constant 0 : i32
    %c0_i32_1 = arith.constant 0 : i32
    %c0_i32_2 = arith.constant 0 : i32
    return %c0_i32, %c0_i32_0, %c0_i32_1 : i32, i32, i32
  }
  func.func @transform_6(%arg0: i32) -> (i32, i32, i32) {
    %c0_i32 = arith.constant 0 : i32
    %c0_i32_0 = arith.constant 0 : i32
    %c0_i32_1 = arith.constant 0 : i32
    %c0_i32_2 = arith.constant 0 : i32
    return %c0_i32, %c0_i32_0, %c0_i32_1 : i32, i32, i32
  }
  func.func @transform_7(%arg0: i32) -> (i32, i32) {
    %c0_i32 = arith.constant 0 : i32
    %c0_i32_0 = arith.constant 0 : i32
    %c0_i32_1 = arith.constant 0 : i32
    return %c0_i32, %c0_i32_0 : i32, i32
  }
  func.func @transform_8(%arg0: i32) -> (i32, i32) {
    %c0_i32 = arith.constant 0 : i32
    %c0_i32_0 = arith.constant 0 : i32
    %c0_i32_1 = arith.constant 0 : i32
    return %c0_i32, %c0_i32_0 : i32, i32
  }
  func.func @transform_9(%arg0: i32) -> (i32, i32, i32) {
    %c0_i32 = arith.constant 0 : i32
    %c0_i32_0 = arith.constant 0 : i32
    %c0_i32_1 = arith.constant 0 : i32
    return %arg0, %c0_i32, %c0_i32_0 : i32, i32, i32
  }
}

</mosaic_0001>

<llo_original>
// kernel: encoder_apply_pallas.3
$region0: #{encoder_apply_pallas.3}
  #allocation0 [shape = 'u32[]', space=smem, size = 0x4, offset = 0x4, fixed_abs, tag = 'smem constant byte address 0x4 - core index']
  #allocation1 [shape = 'u32[144,128]{1,0:T(1,128)}', space=vmem, size = 0x12000, scoped, tag = 'internal scratch']
  %s0 = inlined_call_operand.vmem [shape: f32[2,64,9], index: 0, kind: input, shape index: {}]
  %s1 = inlined_call_operand.vmem [shape: bf16[9,128], index: 1, kind: input, shape index: {}]
  %s2 = inlined_call_operand.vmem [shape: f32[1,128], index: 2, kind: input, shape index: {}]
  %s3 = inlined_call_operand.vmem [shape: f32[2,66,128], index: 3, kind: output, shape index: {}]
  %s4 = sld [smem:[#allocation0]]
  $region45: #{encoder_apply_pallas.3} parent=0
    _
  %s6 = ssub.s32 1, %s4
  %s7 = scalar_select 0, %s6, %s4
  loop: start=0, step=1, limit=4
  $region2: #{encoder_apply_pallas.3} parent=0 // loop_pre_header
    _
  $region3: #{encoder_apply_pallas.3} parent=0 // loop_header
    %s9 = sphi 0, %s13
    %p10 = scmp.ge.s32.totalorder %s9, 4
    %s19 = sphi 0, %s21
    %s22 = sphi 0, %s19
    %s23 = sphi 0, %s22
    %s39 = sphi 0, %s23
    %s43 = sphi 0, %s43
    %s45 = sphi 0, %s43
    %s46 = sphi 0, %s45
    %s60 = sphi 0, %s46
    %s64 = sphi 0, %s64
    %s66 = sphi 0, %s64
    %s67 = sphi 0, %s66
    %s81 = sphi 0, %s67
    %s87 = sphi 0, %s89
    %s90 = sphi 0, %s87
    %s91 = sphi 0, %s90
    %s107 = sphi 0, %s91
  $region4: #{encoder_apply_pallas.3} parent=0 // loop_header_branch
    %12 = sbr.rel (%p10) target = $region8
  $region5: #{encoder_apply_pallas.3} parent=0 // loop_body
    %s14 = ssub.s32 %s9, 1
    %s15 = ssub.s32 %s9, 2
    %s16 = sadd.s32 %s9, 1
    %s17 = ssub.s32 %s9, %s16
    %p18 = scmp.eq.s32.totalorder %s17, 0
    %s20 = sadd.s32 %s19, 1
    %s21 = scalar_select %p18, %s19, %s20
    %p24 = pneg %p18
    %p25 = scmp.eq.s32.totalorder %s9, 1
    %p26 = por %p24, %p25
    %p27 = scmp.ne.s32.totalorder %s19, %s22
    %p28 = scmp.eq.s32.totalorder %s9, 0
    %p29 = por %p27, %p28
    %p30 = scmp.ne.s32.totalorder %s19, %s22
    %p31 = scmp.eq.s32.totalorder %s14, 1
    %p32 = por %p30, %p31
    %p33 = scmp.ne.s32.totalorder %s22, %s23
    %p34 = scmp.eq.s32.totalorder %s14, 0
    %p35 = por %p33, %p34
    %p36 = scmp.ne.s32.totalorder %s22, %s23
    %p37 = scmp.eq.s32.totalorder %s15, 1
    %p38 = por %p36, %p37
    %p40 = scmp.ne.s32.totalorder %s23, %s39
    %p41 = scmp.eq.s32.totalorder %s15, 0
    %p42 = por %p40, %p41
    %s44 = sadd.s32 %s43, 1
    %p47 = scmp.eq.s32.totalorder %s9, 1
    %p48 = scmp.ne.s32.totalorder %s43, %s45
    %p49 = scmp.eq.s32.totalorder %s9, 0
    %p50 = por %p48, %p49
    %p51 = scmp.ne.s32.totalorder %s43, %s45
    %p52 = scmp.eq.s32.totalorder %s14, 1
    %p53 = por %p51, %p52
    %p54 = scmp.ne.s32.totalorder %s45, %s46
    %p55 = scmp.eq.s32.totalorder %s14, 0
    %p56 = por %p54, %p55
    %p57 = scmp.ne.s32.totalorder %s45, %s46
    %p58 = scmp.eq.s32.totalorder %s15, 1
    %p59 = por %p57, %p58
    %p61 = scmp.ne.s32.totalorder %s46, %s60
    %p62 = scmp.eq.s32.totalorder %s15, 0
    %p63 = por %p61, %p62
    %s65 = sadd.s32 %s64, 1
    %p68 = scmp.eq.s32.totalorder %s9, 1
    %p69 = scmp.ne.s32.totalorder %s64, %s66
    %p70 = scmp.eq.s32.totalorder %s9, 0
    %p71 = por %p69, %p70
    %p72 = scmp.ne.s32.totalorder %s64, %s66
    %p73 = scmp.eq.s32.totalorder %s14, 1
    %p74 = por %p72, %p73
    %p75 = scmp.ne.s32.totalorder %s66, %s67
    %p76 = scmp.eq.s32.totalorder %s14, 0
    %p77 = por %p75, %p76
    %p78 = scmp.ne.s32.totalorder %s66, %s67
    %p79 = scmp.eq.s32.totalorder %s15, 1
    %p80 = por %p78, %p79
    %p82 = scmp.ne.s32.totalorder %s67, %s81
    %p83 = scmp.eq.s32.totalorder %s15, 0
    %p84 = por %p82, %p83
    %s85 = ssub.s32 %s9, %s16
    %p86 = scmp.eq.s32.totalorder %s85, 0
    %s88 = sadd.s32 %s87, 1
    %s89 = scalar_select %p86, %s87, %s88
    %p92 = pneg %p86
    %p93 = scmp.eq.s32.totalorder %s9, 1
    %p94 = por %p92, %p93
    %p95 = scmp.ne.s32.totalorder %s87, %s90
    %p96 = scmp.eq.s32.totalorder %s9, 0
    %p97 = por %p95, %p96
    %p98 = scmp.ne.s32.totalorder %s87, %s90
    %p99 = scmp.eq.s32.totalorder %s14, 1
    %p100 = por %p98, %p99
    %p101 = scmp.ne.s32.totalorder %s90, %s91
    %p102 = scmp.eq.s32.totalorder %s14, 0
    %p103 = por %p101, %p102
    %p104 = scmp.ne.s32.totalorder %s90, %s91
    %p105 = scmp.eq.s32.totalorder %s15, 1
    %p106 = por %p104, %p105
    %p108 = scmp.ne.s32.totalorder %s91, %s107
    %p109 = scmp.eq.s32.totalorder %s15, 0
    %p110 = por %p108, %p109
    %p111 = scmp.le.s32.totalorder 1, %s9
    %p112 = scmp.lt.s32.totalorder %s9, 3
    %p113 = pnand %p111, %p112
    %p114 = pneg %p113
    // Predicated region
    $region9: #{encoder_apply_pallas.3} parent=5 // pred_check
      _
    $region10: #{encoder_apply_pallas.3} parent=5 // pred_check_branch
      %116 = sbr.rel (%p113) target = $region12
    $region11: #{encoder_apply_pallas.3} parent=5 // pred_region
      %s117 = ssub.s32 %s9, 1
      // Predicated region
      $region13: #{encoder_apply_pallas.3} parent=11 // pred_check
        %p118 = pneg %p56
      $region14: #{encoder_apply_pallas.3} parent=11 // pred_check_branch
        %120 = sbr.rel (%p118) target = $region16
      $region15: #{encoder_apply_pallas.3} parent=11 // pred_region
        _
      $region16: #{encoder_apply_pallas.3} parent=11 // pred_fallthru
        _
      // Predicated region
      $region17: #{encoder_apply_pallas.3} parent=11 // pred_check
        %p121 = pneg %p77
      $region18: #{encoder_apply_pallas.3} parent=11 // pred_check_branch
        %123 = sbr.rel (%p121) target = $region20
      $region19: #{encoder_apply_pallas.3} parent=11 // pred_region
        _
      $region20: #{encoder_apply_pallas.3} parent=11 // pred_fallthru
        _
    $region12: #{encoder_apply_pallas.3} parent=5 // pred_fallthru
      _
    %p124 = scmp.lt.s32.totalorder %s9, 2
    // Predicated region
    $region21: #{encoder_apply_pallas.3} parent=5 // pred_check
      %p125 = pneg %p124
    $region22: #{encoder_apply_pallas.3} parent=5 // pred_check_branch
      %127 = sbr.rel (%p125) target = $region24
    $region23: #{encoder_apply_pallas.3} parent=5 // pred_region
      // Predicated region
      $region25: #{encoder_apply_pallas.3} parent=23 // pred_check
        %p128 = pneg %p29
      $region26: #{encoder_apply_pallas.3} parent=23 // pred_check_branch
        %130 = sbr.rel (%p128) target = $region28
      $region27: #{encoder_apply_pallas.3} parent=23 // pred_region
        %p131 = scmp.lt.s32.totalorder %s9, 1
        %s132 = scalar_select %p131, %s9, 1
        %s133 = smul.addr %s132, 8
        %s134 = smul.addr %s133, 8
        %s135 = scalar_lea.vmem %s0, %s134
      $region28: #{encoder_apply_pallas.3} parent=23 // pred_fallthru
        _
    $region24: #{encoder_apply_pallas.3} parent=5 // pred_fallthru
      _
    %p136 = scmp.le.s32.totalorder 1, %s9
    %p137 = scmp.lt.s32.totalorder %s9, 3
    %p138 = pnand %p136, %p137
    %p139 = pneg %p138
    // Predicated region
    $region29: #{encoder_apply_pallas.3} parent=5 // pred_check
      _
    $region30: #{encoder_apply_pallas.3} parent=5 // pred_check_branch
      %141 = sbr.rel (%p138) target = $region32
    $region31: #{encoder_apply_pallas.3} parent=5 // pred_region
      %s142 = ssub.s32 %s9, 1
      %p143 = scmp.lt.s32.totalorder %s14, 1
      %s144 = scalar_select %p143, %s14, 1
      %s145 = smul.addr %s144, 8
      %s146 = smul.addr %s145, 8
      %s147 = scalar_lea.vmem %s0, %s146
      %p148 = pneg %p35
      %p149 = pneg %p32
      %p150 = pneg %p56
      %p151 = pneg %p53
      %p152 = pneg %p77
      %p153 = pneg %p74
      %p154 = pneg %p103
      %p155 = pneg %p100
      %p156 = scmp.lt.s32.totalorder %s14, 1
      %s157 = scalar_select %p156, %s14, 1
      %s158 = smul.addr %s157, 9
      %s159 = smul.addr %s158, 8
      %s160 = scalar_lea.vmem %s3, %s159
      %p161 = scmp.lt.s32.totalorder %s14, 1
      %s162 = scalar_select %p161, %s14, 1
      %s163 = smul.addr %s162, 8
      %s164 = smul.addr %s163, 8
      %s165 = scalar_lea.vmem %s0, %s164
      %p166 = scmp.lt.s32.totalorder %s14, 1
      %s167 = scalar_select %p166, %s14, 1
      %s168 = smul.addr %s167, 9
      %s169 = smul.addr %s168, 8
      %s170 = scalar_lea.vmem %s3, %s169
      %v172 = vld [vmem:[%s1] sm:$0xf]
      %v173 = vld [vmem:[%s1 + $0x4] sm:$0x1]
      %v174 = vld [vmem:[%s165] sm:$0xff]
      %v175 = vld [vmem:[%s165 + $0x8] sm:$0xff]
      %v176 = vld [vmem:[%s165 + $0x10] sm:$0xff]
      %v177 = vld [vmem:[%s165 + $0x18] sm:$0xff]
      %v178 = vld [vmem:[%s165 + $0x20] sm:$0xff]
      %v179 = vld [vmem:[%s165 + $0x28] sm:$0xff]
      %v180 = vld [vmem:[%s165 + $0x30] sm:$0xff]
      %v181 = vld [vmem:[%s165 + $0x38] sm:$0xff]
      %v182 = vpack.c.bf16 %v175, %v174
      %v183 = vpack.c.bf16 %v177, %v176
      %v184 = vpack.c.bf16 %v179, %v178
      %v185 = vpack.c.bf16 %v181, %v180
      %v186 = vld [vmem:[%s2] sm:$0x1]
      %v188 = vlaneseq
      %v189 = vshrl.u32 %v188, 7
      %v190 = vsub.s32 0, %v189
      %v191 = vrot.slane %v186, %v190
      %v195 = vunpack.c.l.b16 %v172
      %v196 = vunpack.c.l.b16 %v173
      %v197 = vpack.c.b16 %v196, %v195
      %vm198 = vcmask 72704
      %v200 = vsel %vm198, %v182, 0
      %v203 = vsel %vm198, %v183, 0
      %v206 = vsel %vm198, %v184, 0
      %v209 = vsel %vm198, %v185, 0
      %vm211 = vcmask 1043456
      %vm212 = vcmask 1044480
      %v213 = vsel %vm211, 4294967295, 65535
      %v214 = vsel %vm212, %v213, 0
      %v216 = vand.u32 %v197, %v214
      %218 = vmatprep.subr.bf16.mxu0 0
      %219 = vmatpush1.bf16.msra.mxu0 %v216
      %220 = vmatprep.subr.bf16.mxu0 0
      %221 = vmatpush1.bf16.msra.mxu0 0
      %222 = vmatprep.subr.bf16.mxu0 0
      %223 = vmatpush1.bf16.msra.mxu0 0
      %224 = vmatprep.subr.bf16.mxu0 0
      %225 = vmatpush1.bf16.msra.mxu0 0
      %226 = vmatprep.subr.bf16.mxu0 0
      %227 = vmatpush1.bf16.msra.mxu0 0
      %228 = vmatprep.subr.bf16.mxu0 0
      %229 = vmatpush1.bf16.msra.mxu0 0
      %230 = vmatprep.subr.bf16.mxu0 0
      %231 = vmatpush1.bf16.msra.mxu0 0
      %232 = vmatprep.subr.bf16.mxu0 0
      %233 = vmatpush1.bf16.msra.mxu0 0
      %234 = vmatprep.subr.bf16.mxu0 0
      %235 = vmatpush1.bf16.msra.mxu0 0
      %236 = vmatprep.subr.bf16.mxu0 0
      %237 = vmatpush1.bf16.msra.mxu0 0
      %238 = vmatprep.subr.bf16.mxu0 0
      %239 = vmatpush1.bf16.msra.mxu0 0
      %240 = vmatprep.subr.bf16.mxu0 0
      %241 = vmatpush1.bf16.msra.mxu0 0
      %242 = vmatprep.subr.bf16.mxu0 0
      %243 = vmatpush1.bf16.msra.mxu0 0
      %244 = vmatprep.subr.bf16.mxu0 0
      %245 = vmatpush1.bf16.msra.mxu0 0
      %246 = vmatprep.subr.bf16.mxu0 0
      %247 = vmatpush1.bf16.msra.mxu0 0
      %248 = vmatprep.subr.bf16.mxu0 0
      %249 = vmatpush1.bf16.msra.mxu0 0
      %250 = vmatprep.mubr.bf16.mxu0 0
      %251 = vmatmul.mubr.bf16.gmra.mrb[0].mxu0 %v200
      %v252 = vpop.f32.mrb[0].mxu0
      %v253 = vadd.f32 %v191, %v252
      %v254 = vpop.f32.mrb[0].mxu0
      %v255 = vpop.f32.mrb[0].mxu0
      %v256 = vadd.f32 %v191, %v255
      %v257 = vpop.f32.mrb[0].mxu0
      %258 = vmatprep.mubr.bf16.mxu0 0
      %259 = vmatmul.mubr.bf16.gmra.mrb[0].mxu0 %v203
      %v260 = vpop.f32.mrb[0].mxu0
      %v261 = vadd.f32 %v191, %v260
      %v262 = vpop.f32.mrb[0].mxu0
      %v263 = vpop.f32.mrb[0].mxu0
      %v264 = vadd.f32 %v191, %v263
      %v265 = vpop.f32.mrb[0].mxu0
      %266 = vmatprep.mubr.bf16.mxu0 0
      %267 = vmatmul.mubr.bf16.gmra.mrb[0].mxu0 %v206
      %v268 = vpop.f32.mrb[0].mxu0
      %v269 = vadd.f32 %v191, %v268
      %v270 = vpop.f32.mrb[0].mxu0
      %v271 = vpop.f32.mrb[0].mxu0
      %v272 = vadd.f32 %v191, %v271
      %v273 = vpop.f32.mrb[0].mxu0
      %274 = vmatprep.mubr.bf16.mxu0 0
      %275 = vmatmul.mubr.bf16.gmra.mrb[0].mxu0 %v209
      %v276 = vpop.f32.mrb[0].mxu0
      %v277 = vadd.f32 %v191, %v276
      %v278 = vpop.f32.mrb[0].mxu0
      %v279 = vpop.f32.mrb[0].mxu0
      %v280 = vadd.f32 %v191, %v279
      %v281 = vpop.f32.mrb[0].mxu0
      %282 = vdwg.mxu0
      %v283 = vmax.f32 %v253, 0.0
      %v284 = vmax.f32 %v256, 0.0
      %v285 = vmax.f32 %v261, 0.0
      %v286 = vmax.f32 %v264, 0.0
      %v287 = vmax.f32 %v269, 0.0
      %v288 = vmax.f32 %v272, 0.0
      %v289 = vmax.f32 %v277, 0.0
      %v290 = vmax.f32 %v280, 0.0
      %vm299 = vcmask 1040384
      %v300 = vrot.slane %v283, 7
      %v301 = vrot.slane %v284, 7
      %v302 = vsel %vm299, %v300, %v301
      %v303 = vrot.slane %v285, 7
      %v304 = vsel %vm299, %v301, %v303
      %v305 = vrot.slane %v286, 7
      %v306 = vsel %vm299, %v303, %v305
      %v307 = vrot.slane %v287, 7
      %v308 = vsel %vm299, %v305, %v307
      %v309 = vrot.slane %v288, 7
      %v310 = vsel %vm299, %v307, %v309
      %v311 = vrot.slane %v289, 7
      %v312 = vsel %vm299, %v309, %v311
      %v313 = vrot.slane %v290, 7
      %v314 = vsel %vm299, %v311, %v313
      %v324 = vsel %vm299, 0.0, %v300
      %v325 = vsel %vm299, %v313, 0.0
      %326 = vst [vmem:[%s170] sm:$0xff] %v324
      %327 = vst [vmem:[%s170 + $0x8] sm:$0xff] %v302
      %328 = vst [vmem:[%s170 + $0x10] sm:$0xff] %v304
      %329 = vst [vmem:[%s170 + $0x18] sm:$0xff] %v306
      %330 = vst [vmem:[%s170 + $0x20] sm:$0xff] %v308
      %331 = vst [vmem:[%s170 + $0x28] sm:$0xff] %v310
      %332 = vst [vmem:[%s170 + $0x30] sm:$0xff] %v312
      %333 = vst [vmem:[%s170 + $0x38] sm:$0xff] %v314
      %334 = vst [vmem:[%s170 + $0x40] sm:$0x3] %v325
      %p335 = scmp.lt.s32.totalorder %s14, 1
      %s336 = scalar_select %p335, %s14, 1
      %s337 = smul.addr %s336, 9
      %s338 = smul.addr %s337, 8
      %s339 = scalar_lea.vmem %s3, %s338
      // Predicated region
      $region33: #{encoder_apply_pallas.3} parent=31 // pred_check
        %p340 = pneg %p100
      $region34: #{encoder_apply_pallas.3} parent=31 // pred_check_branch
        %342 = sbr.rel (%p340) target = $region36
      $region35: #{encoder_apply_pallas.3} parent=31 // pred_region
        _
      $region36: #{encoder_apply_pallas.3} parent=31 // pred_fallthru
        _
    $region32: #{encoder_apply_pallas.3} parent=5 // pred_fallthru
      _
    %p343 = scmp.le.s32.totalorder 2, %s9
    // Predicated region
    $region37: #{encoder_apply_pallas.3} parent=5 // pred_check
      %p344 = pneg %p343
    $region38: #{encoder_apply_pallas.3} parent=5 // pred_check_branch
      %346 = sbr.rel (%p344) target = $region40
    $region39: #{encoder_apply_pallas.3} parent=5 // pred_region
      %s347 = ssub.s32 %s9, 2
      // Predicated region
      $region41: #{encoder_apply_pallas.3} parent=39 // pred_check
        %p348 = pneg %p106
      $region42: #{encoder_apply_pallas.3} parent=39 // pred_check_branch
        %350 = sbr.rel (%p348) target = $region44
      $region43: #{encoder_apply_pallas.3} parent=39 // pred_region
        %p351 = scmp.lt.s32.totalorder %s15, 1
        %s352 = scalar_select %p351, %s15, 1
        %s353 = smul.addr %s352, 9
        %s354 = smul.addr %s353, 8
        %s355 = scalar_lea.vmem %s3, %s354
      $region44: #{encoder_apply_pallas.3} parent=39 // pred_fallthru
        _
    $region40: #{encoder_apply_pallas.3} parent=5 // pred_fallthru
      _
  $region6: #{encoder_apply_pallas.3} parent=0 // loop_footer
    %s13 = sadd.s32 1, %s9
  $region7: #{encoder_apply_pallas.3} parent=0 // loop_footer_branch
    %8 = sbr.rel target = $region3
  $region8: #{encoder_apply_pallas.3} parent=0 // loop_exit
    _

// kernel: encoder_apply_pallas.4
$region0: #{encoder_apply_pallas.4}
  #allocation0 [shape = 'u32[]', space=smem, size = 0x4, offset = 0x4, fixed_abs, tag = 'smem constant byte address 0x4 - core index']
  #allocation1 [shape = 'u32[144,128]{1,0:T(1,128)}', space=vmem, size = 0x12000, scoped, tag = 'internal scratch']
  #allocation2 [shape = 'f32[64,128]{1,0:T(8,128)}', space=vmem, size = 0x8000, scoped, tag = 'scratch operand']
  %s0 = inlined_call_operand.vmem [shape: f32[2,33,256], index: 0, kind: input, shape index: {}]
  %s1 = inlined_call_operand.vmem [shape: bf16[512,128], index: 1, kind: input, shape index: {}]
  %s2 = inlined_call_operand.vmem [shape: f32[1,128], index: 2, kind: input, shape index: {}]
  %s3 = inlined_call_operand.vmem [shape: bf16[3,384,128], index: 3, kind: input, shape index: {}]
  %s4 = inlined_call_operand.vmem [shape: f32[3,1,128], index: 4, kind: input, shape index: {}]
  %s5 = inlined_call_operand.vmem [shape: bf16[3,128,128], index: 5, kind: input, shape index: {}]
  %s6 = inlined_call_operand.vmem [shape: f32[3,1,128], index: 6, kind: input, shape index: {}]
  %s7 = inlined_call_operand.vmem [shape: f32[2,34,128], index: 7, kind: output, shape index: {}]
  %s8 = sld [smem:[#allocation0]]
  $region61: #{encoder_apply_pallas.4} parent=0
    _
  %s10 = ssub.s32 1, %s8
  %s11 = scalar_select 0, %s10, %s8
  loop: start=0, step=1, limit=4
  $region2: #{encoder_apply_pallas.4} parent=0 // loop_pre_header
    _
  $region3: #{encoder_apply_pallas.4} parent=0 // loop_header
    %s13 = sphi 0, %s17
    %p14 = scmp.ge.s32.totalorder %s13, 4
    %s23 = sphi 0, %s25
    %s26 = sphi 0, %s23
    %s27 = sphi 0, %s26
    %s43 = sphi 0, %s27
    %s47 = sphi 0, %s47
    %s49 = sphi 0, %s47
    %s50 = sphi 0, %s49
    %s64 = sphi 0, %s50
    %s68 = sphi 0, %s68
    %s70 = sphi 0, %s68
    %s71 = sphi 0, %s70
    %s85 = sphi 0, %s71
    %s89 = sphi 0, %s89
    %s91 = sphi 0, %s89
    %s92 = sphi 0, %s91
    %s106 = sphi 0, %s92
    %s110 = sphi 0, %s110
    %s112 = sphi 0, %s110
    %s113 = sphi 0, %s112
    %s127 = sphi 0, %s113
    %s131 = sphi 0, %s131
    %s133 = sphi 0, %s131
    %s134 = sphi 0, %s133
    %s148 = sphi 0, %s134
    %s152 = sphi 0, %s152
    %s154 = sphi 0, %s152
    %s155 = sphi 0, %s154
    %s169 = sphi 0, %s155
    %s175 = sphi 0, %s177
    %s178 = sphi 0, %s175
    %s179 = sphi 0, %s178
    %s195 = sphi 0, %s179
  $region4: #{encoder_apply_pallas.4} parent=0 // loop_header_branch
    %16 = sbr.rel (%p14) target = $region8
  $region5: #{encoder_apply_pallas.4} parent=0 // loop_body
    %s18 = ssub.s32 %s13, 1
    %s19 = ssub.s32 %s13, 2
    %s20 = sadd.s32 %s13, 1
    %s21 = ssub.s32 %s13, %s20
    %p22 = scmp.eq.s32.totalorder %s21, 0
    %s24 = sadd.s32 %s23, 1
    %s25 = scalar_select %p22, %s23, %s24
    %p28 = pneg %p22
    %p29 = scmp.eq.s32.totalorder %s13, 1
    %p30 = por %p28, %p29
    %p31 = scmp.ne.s32.totalorder %s23, %s26
    %p32 = scmp.eq.s32.totalorder %s13, 0
    %p33 = por %p31, %p32
    %p34 = scmp.ne.s32.totalorder %s23, %s26
    %p35 = scmp.eq.s32.totalorder %s18, 1
    %p36 = por %p34, %p35
    %p37 = scmp.ne.s32.totalorder %s26, %s27
    %p38 = scmp.eq.s32.totalorder %s18, 0
    %p39 = por %p37, %p38
    %p40 = scmp.ne.s32.totalorder %s26, %s27
    %p41 = scmp.eq.s32.totalorder %s19, 1
    %p42 = por %p40, %p41
    %p44 = scmp.ne.s32.totalorder %s27, %s43
    %p45 = scmp.eq.s32.totalorder %s19, 0
    %p46 = por %p44, %p45
    %s48 = sadd.s32 %s47, 1
    %p51 = scmp.eq.s32.totalorder %s13, 1
    %p52 = scmp.ne.s32.totalorder %s47, %s49
    %p53 = scmp.eq.s32.totalorder %s13, 0
    %p54 = por %p52, %p53
    %p55 = scmp.ne.s32.totalorder %s47, %s49
    %p56 = scmp.eq.s32.totalorder %s18, 1
    %p57 = por %p55, %p56
    %p58 = scmp.ne.s32.totalorder %s49, %s50
    %p59 = scmp.eq.s32.totalorder %s18, 0
    %p60 = por %p58, %p59
    %p61 = scmp.ne.s32.totalorder %s49, %s50
    %p62 = scmp.eq.s32.totalorder %s19, 1
    %p63 = por %p61, %p62
    %p65 = scmp.ne.s32.totalorder %s50, %s64
    %p66 = scmp.eq.s32.totalorder %s19, 0
    %p67 = por %p65, %p66
    %s69 = sadd.s32 %s68, 1
    %p72 = scmp.eq.s32.totalorder %s13, 1
    %p73 = scmp.ne.s32.totalorder %s68, %s70
    %p74 = scmp.eq.s32.totalorder %s13, 0
    %p75 = por %p73, %p74
    %p76 = scmp.ne.s32.totalorder %s68, %s70
    %p77 = scmp.eq.s32.totalorder %s18, 1
    %p78 = por %p76, %p77
    %p79 = scmp.ne.s32.totalorder %s70, %s71
    %p80 = scmp.eq.s32.totalorder %s18, 0
    %p81 = por %p79, %p80
    %p82 = scmp.ne.s32.totalorder %s70, %s71
    %p83 = scmp.eq.s32.totalorder %s19, 1
    %p84 = por %p82, %p83
    %p86 = scmp.ne.s32.totalorder %s71, %s85
    %p87 = scmp.eq.s32.totalorder %s19, 0
    %p88 = por %p86, %p87
    %s90 = sadd.s32 %s89, 1
    %p93 = scmp.eq.s32.totalorder %s13, 1
    %p94 = scmp.ne.s32.totalorder %s89, %s91
    %p95 = scmp.eq.s32.totalorder %s13, 0
    %p96 = por %p94, %p95
    %p97 = scmp.ne.s32.totalorder %s89, %s91
    %p98 = scmp.eq.s32.totalorder %s18, 1
    %p99 = por %p97, %p98
    %p100 = scmp.ne.s32.totalorder %s91, %s92
    %p101 = scmp.eq.s32.totalorder %s18, 0
    %p102 = por %p100, %p101
    %p103 = scmp.ne.s32.totalorder %s91, %s92
    %p104 = scmp.eq.s32.totalorder %s19, 1
    %p105 = por %p103, %p104
    %p107 = scmp.ne.s32.totalorder %s92, %s106
    %p108 = scmp.eq.s32.totalorder %s19, 0
    %p109 = por %p107, %p108
    %s111 = sadd.s32 %s110, 1
    %p114 = scmp.eq.s32.totalorder %s13, 1
    %p115 = scmp.ne.s32.totalorder %s110, %s112
    %p116 = scmp.eq.s32.totalorder %s13, 0
    %p117 = por %p115, %p116
    %p118 = scmp.ne.s32.totalorder %s110, %s112
    %p119 = scmp.eq.s32.totalorder %s18, 1
    %p120 = por %p118, %p119
    %p121 = scmp.ne.s32.totalorder %s112, %s113
    %p122 = scmp.eq.s32.totalorder %s18, 0
    %p123 = por %p121, %p122
    %p124 = scmp.ne.s32.totalorder %s112, %s113
    %p125 = scmp.eq.s32.totalorder %s19, 1
    %p126 = por %p124, %p125
    %p128 = scmp.ne.s32.totalorder %s113, %s127
    %p129 = scmp.eq.s32.totalorder %s19, 0
    %p130 = por %p128, %p129
    %s132 = sadd.s32 %s131, 1
    %p135 = scmp.eq.s32.totalorder %s13, 1
    %p136 = scmp.ne.s32.totalorder %s131, %s133
    %p137 = scmp.eq.s32.totalorder %s13, 0
    %p138 = por %p136, %p137
    %p139 = scmp.ne.s32.totalorder %s131, %s133
    %p140 = scmp.eq.s32.totalorder %s18, 1
    %p141 = por %p139, %p140
    %p142 = scmp.ne.s32.totalorder %s133, %s134
    %p143 = scmp.eq.s32.totalorder %s18, 0
    %p144 = por %p142, %p143
    %p145 = scmp.ne.s32.totalorder %s133, %s134
    %p146 = scmp.eq.s32.totalorder %s19, 1
    %p147 = por %p145, %p146
    %p149 = scmp.ne.s32.totalorder %s134, %s148
    %p150 = scmp.eq.s32.totalorder %s19, 0
    %p151 = por %p149, %p150
    %s153 = sadd.s32 %s152, 1
    %p156 = scmp.eq.s32.totalorder %s13, 1
    %p157 = scmp.ne.s32.totalorder %s152, %s154
    %p158 = scmp.eq.s32.totalorder %s13, 0
    %p159 = por %p157, %p158
    %p160 = scmp.ne.s32.totalorder %s152, %s154
    %p161 = scmp.eq.s32.totalorder %s18, 1
    %p162 = por %p160, %p161
    %p163 = scmp.ne.s32.totalorder %s154, %s155
    %p164 = scmp.eq.s32.totalorder %s18, 0
    %p165 = por %p163, %p164
    %p166 = scmp.ne.s32.totalorder %s154, %s155
    %p167 = scmp.eq.s32.totalorder %s19, 1
    %p168 = por %p166, %p167
    %p170 = scmp.ne.s32.totalorder %s155, %s169
    %p171 = scmp.eq.s32.totalorder %s19, 0
    %p172 = por %p170, %p171
    %s173 = ssub.s32 %s13, %s20
    %p174 = scmp.eq.s32.totalorder %s173, 0
    %s176 = sadd.s32 %s175, 1
    %s177 = scalar_select %p174, %s175, %s176
    %p180 = pneg %p174
    %p181 = scmp.eq.s32.totalorder %s13, 1
    %p182 = por %p180, %p181
    %p183 = scmp.ne.s32.totalorder %s175, %s178
    %p184 = scmp.eq.s32.totalorder %s13, 0
    %p185 = por %p183, %p184
    %p186 = scmp.ne.s32.totalorder %s175, %s178
    %p187 = scmp.eq.s32.totalorder %s18, 1
    %p188 = por %p186, %p187
    %p189 = scmp.ne.s32.totalorder %s178, %s179
    %p190 = scmp.eq.s32.totalorder %s18, 0
    %p191 = por %p189, %p190
    %p192 = scmp.ne.s32.totalorder %s178, %s179
    %p193 = scmp.eq.s32.totalorder %s19, 1
    %p194 = por %p192, %p193
    %p196 = scmp.ne.s32.totalorder %s179, %s195
    %p197 = scmp.eq.s32.totalorder %s19, 0
    %p198 = por %p196, %p197
    %p199 = scmp.le.s32.totalorder 1, %s13
    %p200 = scmp.lt.s32.totalorder %s13, 3
    %p201 = pnand %p199, %p200
    %p202 = pneg %p201
    // Predicated region
    $region9: #{encoder_apply_pallas.4} parent=5 // pred_check
      _
    $region10: #{encoder_apply_pallas.4} parent=5 // pred_check_branch
      %204 = sbr.rel (%p201) target = $region12
    $region11: #{encoder_apply_pallas.4} parent=5 // pred_region
      %s205 = ssub.s32 %s13, 1
      // Predicated region
      $region13: #{encoder_apply_pallas.4} parent=11 // pred_check
        %p206 = pneg %p60
      $region14: #{encoder_apply_pallas.4} parent=11 // pred_check_branch
        %208 = sbr.rel (%p206) target = $region16
      $region15: #{encoder_apply_pallas.4} parent=11 // pred_region
        _
      $region16: #{encoder_apply_pallas.4} parent=11 // pred_fallthru
        _
      // Predicated region
      $region17: #{encoder_apply_pallas.4} parent=11 // pred_check
        %p209 = pneg %p81
      $region18: #{encoder_apply_pallas.4} parent=11 // pred_check_branch
        %211 = sbr.rel (%p209) target = $region20
      $region19: #{encoder_apply_pallas.4} parent=11 // pred_region
        _
      $region20: #{encoder_apply_pallas.4} parent=11 // pred_fallthru
        _
      // Predicated region
      $region21: #{encoder_apply_pallas.4} parent=11 // pred_check
        %p212 = pneg %p102
      $region22: #{encoder_apply_pallas.4} parent=11 // pred_check_branch
        %214 = sbr.rel (%p212) target = $region24
      $region23: #{encoder_apply_pallas.4} parent=11 // pred_region
        _
      $region24: #{encoder_apply_pallas.4} parent=11 // pred_fallthru
        _
      // Predicated region
      $region25: #{encoder_apply_pallas.4} parent=11 // pred_check
        %p215 = pneg %p123
      $region26: #{encoder_apply_pallas.4} parent=11 // pred_check_branch
        %217 = sbr.rel (%p215) target = $region28
      $region27: #{encoder_apply_pallas.4} parent=11 // pred_region
        _
      $region28: #{encoder_apply_pallas.4} parent=11 // pred_fallthru
        _
      // Predicated region
      $region29: #{encoder_apply_pallas.4} parent=11 // pred_check
        %p218 = pneg %p144
      $region30: #{encoder_apply_pallas.4} parent=11 // pred_check_branch
        %220 = sbr.rel (%p218) target = $region32
      $region31: #{encoder_apply_pallas.4} parent=11 // pred_region
        _
      $region32: #{encoder_apply_pallas.4} parent=11 // pred_fallthru
        _
      // Predicated region
      $region33: #{encoder_apply_pallas.4} parent=11 // pred_check
        %p221 = pneg %p165
      $region34: #{encoder_apply_pallas.4} parent=11 // pred_check_branch
        %223 = sbr.rel (%p221) target = $region36
      $region35: #{encoder_apply_pallas.4} parent=11 // pred_region
        _
      $region36: #{encoder_apply_pallas.4} parent=11 // pred_fallthru
        _
    $region12: #{encoder_apply_pallas.4} parent=5 // pred_fallthru
      _
    %p224 = scmp.lt.s32.totalorder %s13, 2
    // Predicated region
    $region37: #{encoder_apply_pallas.4} parent=5 // pred_check
      %p225 = pneg %p224
    $region38: #{encoder_apply_pallas.4} parent=5 // pred_check_branch
      %227 = sbr.rel (%p225) target = $region40
    $region39: #{encoder_apply_pallas.4} parent=5 // pred_region
      // Predicated region
      $region41: #{encoder_apply_pallas.4} parent=39 // pred_check
        %p228 = pneg %p33
      $region42: #{encoder_apply_pallas.4} parent=39 // pred_check_branch
        %230 = sbr.rel (%p228) target = $region44
      $region43: #{encoder_apply_pallas.4} parent=39 // pred_region
        %p231 = scmp.lt.s32.totalorder %s13, 1
        %s232 = scalar_select %p231, %s13, 1
        %s233 = smul.addr %s232, 10
        %s234 = smul.addr %s233, 8
        %s235 = scalar_lea.vmem %s0, %s234
      $region44: #{encoder_apply_pallas.4} parent=39 // pred_fallthru
        _
    $region40: #{encoder_apply_pallas.4} parent=5 // pred_fallthru
      _
    %p236 = scmp.le.s32.totalorder 1, %s13
    %p237 = scmp.lt.s32.totalorder %s13, 3
    %p238 = pnand %p236, %p237
    %p239 = pneg %p238
    // Predicated region
    $region45: #{encoder_apply_pallas.4} parent=5 // pred_check
      _
    $region46: #{encoder_apply_pallas.4} parent=5 // pred_check_branch
      %241 = sbr.rel (%p238) target = $region48
    $region47: #{encoder_apply_pallas.4} parent=5 // pred_region
      %s242 = ssub.s32 %s13, 1
      %p243 = scmp.lt.s32.totalorder %s18, 1
      %s244 = scalar_select %p243, %s18, 1
      %s245 = smul.addr %s244, 10
      %s246 = smul.addr %s245, 8
      %s247 = scalar_lea.vmem %s0, %s246
      %p248 = pneg %p39
      %p249 = pneg %p36
      %p250 = pneg %p60
      %p251 = pneg %p57
      %p252 = pneg %p81
      %p253 = pneg %p78
      %p254 = pneg %p102
      %p255 = pneg %p99
      %p256 = pneg %p123
      %p257 = pneg %p120
      %p258 = pneg %p144
      %p259 = pneg %p141
      %p260 = pneg %p165
      %p261 = pneg %p162
      %p262 = pneg %p191
      %p263 = pneg %p188
      %p264 = scmp.lt.s32.totalorder %s18, 1
      %s265 = scalar_select %p264, %s18, 1
      %s266 = smul.addr %s265, 5
      %s267 = smul.addr %s266, 8
      %s268 = scalar_lea.vmem %s7, %s267
      %p269 = scmp.lt.s32.totalorder %s18, 1
      %s270 = scalar_select %p269, %s18, 1
      %s271 = smul.addr %s270, 10
      %s272 = smul.addr %s271, 8
      %s273 = scalar_lea.vmem %s0, %s272
      %p274 = scmp.lt.s32.totalorder %s18, 1
      %s275 = scalar_select %p274, %s18, 1
      %s276 = smul.addr %s275, 5
      %s277 = smul.addr %s276, 8
      %s278 = scalar_lea.vmem %s7, %s277
      %v280 = vld [vmem:[%s273] sm:$0xff]
      %v281 = vld [vmem:[%s273 + $0x8] sm:$0xff]
      %v282 = vld [vmem:[%s273 + $0x10] sm:$0xff]
      %v283 = vld [vmem:[%s273 + $0x18] sm:$0xff]
      %v284 = vld [vmem:[%s273 + $0x20] sm:$0xff]
      %v285 = vld [vmem:[%s273 + $0x28] sm:$0xff]
      %v286 = vld [vmem:[%s273 + $0x30] sm:$0xff]
      %v287 = vld [vmem:[%s273 + $0x38] sm:$0xff]
      %v288 = vld [vmem:[%s273 + $0x40] sm:$0x1]
      %v289 = vld [vmem:[%s273 + $0x48] sm:$0x1]
      %v290 = vld [vmem:[%s1] sm:$0xf]
      %v291 = vld [vmem:[%s1 + $0x4] sm:$0xf]
      %v292 = vld [vmem:[%s1 + $0x8] sm:$0xf]
      %v293 = vld [vmem:[%s1 + $0xc] sm:$0xf]
      %v294 = vld [vmem:[%s1 + $0x10] sm:$0xf]
      %v295 = vld [vmem:[%s1 + $0x14] sm:$0xf]
      %v296 = vld [vmem:[%s1 + $0x18] sm:$0xf]
      %v297 = vld [vmem:[%s1 + $0x1c] sm:$0xf]
      %v298 = vld [vmem:[%s1 + $0x20] sm:$0xf]
      %v299 = vld [vmem:[%s1 + $0x24] sm:$0xf]
      %v300 = vld [vmem:[%s1 + $0x28] sm:$0xf]
      %v301 = vld [vmem:[%s1 + $0x2c] sm:$0xf]
      %v302 = vld [vmem:[%s1 + $0x30] sm:$0xf]
      %v303 = vld [vmem:[%s1 + $0x34] sm:$0xf]
      %v304 = vld [vmem:[%s1 + $0x38] sm:$0xf]
      %v305 = vld [vmem:[%s1 + $0x3c] sm:$0xf]
      %v306 = vld [vmem:[%s1 + $0x40] sm:$0xf]
      %v307 = vld [vmem:[%s1 + $0x44] sm:$0xf]
      %v308 = vld [vmem:[%s1 + $0x48] sm:$0xf]
      %v309 = vld [vmem:[%s1 + $0x4c] sm:$0xf]
      %v310 = vld [vmem:[%s1 + $0x50] sm:$0xf]
      %v311 = vld [vmem:[%s1 + $0x54] sm:$0xf]
      %v312 = vld [vmem:[%s1 + $0x58] sm:$0xf]
      %v313 = vld [vmem:[%s1 + $0x5c] sm:$0xf]
      %v314 = vld [vmem:[%s1 + $0x60] sm:$0xf]
      %v315 = vld [vmem:[%s1 + $0x64] sm:$0xf]
      %v316 = vld [vmem:[%s1 + $0x68] sm:$0xf]
      %v317 = vld [vmem:[%s1 + $0x6c] sm:$0xf]
      %v318 = vld [vmem:[%s1 + $0x70] sm:$0xf]
      %v319 = vld [vmem:[%s1 + $0x74] sm:$0xf]
      %v320 = vld [vmem:[%s1 + $0x78] sm:$0xf]
      %v321 = vld [vmem:[%s1 + $0x7c] sm:$0xf]
      %v322 = vld [vmem:[%s1 + $0x80] sm:$0xf]
      %v323 = vld [vmem:[%s1 + $0x84] sm:$0xf]
      %v324 = vld [vmem:[%s1 + $0x88] sm:$0xf]
      %v325 = vld [vmem:[%s1 + $0x8c] sm:$0xf]
      %v326 = vld [vmem:[%s1 + $0x90] sm:$0xf]
      %v327 = vld [vmem:[%s1 + $0x94] sm:$0xf]
      %v328 = vld [vmem:[%s1 + $0x98] sm:$0xf]
      %v329 = vld [vmem:[%s1 + $0x9c] sm:$0xf]
      %v330 = vld [vmem:[%s1 + $0xa0] sm:$0xf]
      %v331 = vld [vmem:[%s1 + $0xa4] sm:$0xf]
      %v332 = vld [vmem:[%s1 + $0xa8] sm:$0xf]
      %v333 = vld [vmem:[%s1 + $0xac] sm:$0xf]
      %v334 = vld [vmem:[%s1 + $0xb0] sm:$0xf]
      %v335 = vld [vmem:[%s1 + $0xb4] sm:$0xf]
      %v336 = vld [vmem:[%s1 + $0xb8] sm:$0xf]
      %v337 = vld [vmem:[%s1 + $0xbc] sm:$0xf]
      %v338 = vld [vmem:[%s1 + $0xc0] sm:$0xf]
      %v339 = vld [vmem:[%s1 + $0xc4] sm:$0xf]
      %v340 = vld [vmem:[%s1 + $0xc8] sm:$0xf]
      %v341 = vld [vmem:[%s1 + $0xcc] sm:$0xf]
      %v342 = vld [vmem:[%s1 + $0xd0] sm:$0xf]
      %v343 = vld [vmem:[%s1 + $0xd4] sm:$0xf]
      %v344 = vld [vmem:[%s1 + $0xd8] sm:$0xf]
      %v345 = vld [vmem:[%s1 + $0xdc] sm:$0xf]
      %v346 = vld [vmem:[%s1 + $0xe0] sm:$0xf]
      %v347 = vld [vmem:[%s1 + $0xe4] sm:$0xf]
      %v348 = vld [vmem:[%s1 + $0xe8] sm:$0xf]
      %v349 = vld [vmem:[%s1 + $0xec] sm:$0xf]
      %v350 = vld [vmem:[%s1 + $0xf0] sm:$0xf]
      %v351 = vld [vmem:[%s1 + $0xf4] sm:$0xf]
      %v352 = vld [vmem:[%s1 + $0xf8] sm:$0xf]
      %v353 = vld [vmem:[%s1 + $0xfc] sm:$0xf]
      %vm364 = vcmask 1046528
      %v365 = vrot.slane %v280, 1
      %v366 = vrot.slane %v282, 1
      %v367 = vsel %vm364, %v365, %v366
      %v368 = vrot.slane %v281, 1
      %v369 = vrot.slane %v283, 1
      %v370 = vsel %vm364, %v368, %v369
      %v371 = vrot.slane %v284, 1
      %v372 = vsel %vm364, %v366, %v371
      %v373 = vrot.slane %v285, 1
      %v374 = vsel %vm364, %v369, %v373
      %v375 = vrot.slane %v286, 1
      %v376 = vsel %vm364, %v371, %v375
      %v377 = vrot.slane %v287, 1
      %v378 = vsel %vm364, %v373, %v377
      %v379 = vrot.slane %v288, 1
      %v380 = vsel %vm364, %v375, %v379
      %v381 = vrot.slane %v289, 1
      %v382 = vsel %vm364, %v377, %v381
      %v391 = vpack.c.bf16 %v282, %v280
      %v392 = vpack.c.bf16 %v283, %v281
      %v393 = vpack.c.bf16 %v372, %v367
      %v394 = vpack.c.bf16 %v374, %v370
      %v395 = vpack.c.bf16 %v286, %v284
      %v396 = vpack.c.bf16 %v287, %v285
      %v397 = vpack.c.bf16 %v380, %v376
      %v398 = vpack.c.bf16 %v382, %v378
      %v399 = vld [vmem:[%s2] sm:$0x1]
      %v401 = vlaneseq
      %v402 = vshrl.u32 %v401, 7
      %v403 = vsub.s32 0, %v402
      %v404 = vrot.slane %v399, %v403
      %v470 = vunpack.c.l.b16 %v290
      %v471 = vunpack.c.l.b16 %v291
      %v472 = vunpack.c.l.b16 %v292
      %v473 = vunpack.c.l.b16 %v293
      %v474 = vunpack.c.l.b16 %v294
      %v475 = vunpack.c.l.b16 %v295
      %v476 = vunpack.c.l.b16 %v296
      %v477 = vunpack.c.l.b16 %v297
      %v478 = vunpack.c.l.b16 %v298
      %v479 = vunpack.c.l.b16 %v299
      %v480 = vunpack.c.l.b16 %v300
      %v481 = vunpack.c.l.b16 %v301
      %v482 = vunpack.c.l.b16 %v302
      %v483 = vunpack.c.l.b16 %v303
      %v484 = vunpack.c.l.b16 %v304
      %v485 = vunpack.c.l.b16 %v305
      %v486 = vunpack.c.l.b16 %v306
      %v487 = vunpack.c.l.b16 %v307
      %v488 = vunpack.c.l.b16 %v308
      %v489 = vunpack.c.l.b16 %v309
      %v490 = vunpack.c.l.b16 %v310
      %v491 = vunpack.c.l.b16 %v311
      %v492 = vunpack.c.l.b16 %v312
      %v493 = vunpack.c.l.b16 %v313
      %v494 = vunpack.c.l.b16 %v314
      %v495 = vunpack.c.l.b16 %v315
      %v496 = vunpack.c.l.b16 %v316
      %v497 = vunpack.c.l.b16 %v317
      %v498 = vunpack.c.l.b16 %v318
      %v499 = vunpack.c.l.b16 %v319
      %v500 = vunpack.c.l.b16 %v320
      %v501 = vunpack.c.l.b16 %v321
      %v502 = vunpack.c.l.b16 %v322
      %v503 = vunpack.c.l.b16 %v323
      %v504 = vunpack.c.l.b16 %v324
      %v505 = vunpack.c.l.b16 %v325
      %v506 = vunpack.c.l.b16 %v326
      %v507 = vunpack.c.l.b16 %v327
      %v508 = vunpack.c.l.b16 %v328
      %v509 = vunpack.c.l.b16 %v329
      %v510 = vunpack.c.l.b16 %v330
      %v511 = vunpack.c.l.b16 %v331
      %v512 = vunpack.c.l.b16 %v332
      %v513 = vunpack.c.l.b16 %v333
      %v514 = vunpack.c.l.b16 %v334
      %v515 = vunpack.c.l.b16 %v335
      %v516 = vunpack.c.l.b16 %v336
      %v517 = vunpack.c.l.b16 %v337
      %v518 = vunpack.c.l.b16 %v338
      %v519 = vunpack.c.l.b16 %v339
      %v520 = vunpack.c.l.b16 %v340
      %v521 = vunpack.c.l.b16 %v341
      %v522 = vunpack.c.l.b16 %v342
      %v523 = vunpack.c.l.b16 %v343
      %v524 = vunpack.c.l.b16 %v344
      %v525 = vunpack.c.l.b16 %v345
      %v526 = vunpack.c.l.b16 %v346
      %v527 = vunpack.c.l.b16 %v347
      %v528 = vunpack.c.l.b16 %v348
      %v529 = vunpack.c.l.b16 %v349
      %v530 = vunpack.c.l.b16 %v350
      %v531 = vunpack.c.l.b16 %v351
      %v532 = vunpack.c.l.b16 %v352
      %v533 = vunpack.c.l.b16 %v353
      %v534 = vpack.c.b16 %v471, %v470
      %v535 = vpack.c.b16 %v473, %v472
      %v536 = vpack.c.b16 %v475, %v474
      %v537 = vpack.c.b16 %v477, %v476
      %v538 = vpack.c.b16 %v479, %v478
      %v539 = vpack.c.b16 %v481, %v480
      %v540 = vpack.c.b16 %v483, %v482
      %v541 = vpack.c.b16 %v485, %v484
      %v542 = vpack.c.b16 %v487, %v486
      %v543 = vpack.c.b16 %v489, %v488
      %v544 = vpack.c.b16 %v491, %v490
      %v545 = vpack.c.b16 %v493, %v492
      %v546 = vpack.c.b16 %v495, %v494
      %v547 = vpack.c.b16 %v497, %v496
      %v548 = vpack.c.b16 %v499, %v498
      %v549 = vpack.c.b16 %v501, %v500
      %v550 = vpack.c.b16 %v503, %v502
      %v551 = vpack.c.b16 %v505, %v504
      %v552 = vpack.c.b16 %v507, %v506
      %v553 = vpack.c.b16 %v509, %v508
      %v554 = vpack.c.b16 %v511, %v510
      %v555 = vpack.c.b16 %v513, %v512
      %v556 = vpack.c.b16 %v515, %v514
      %v557 = vpack.c.b16 %v517, %v516
      %v558 = vpack.c.b16 %v519, %v518
      %v559 = vpack.c.b16 %v521, %v520
      %v560 = vpack.c.b16 %v523, %v522
      %v561 = vpack.c.b16 %v525, %v524
      %v562 = vpack.c.b16 %v527, %v526
      %v563 = vpack.c.b16 %v529, %v528
      %v564 = vpack.c.b16 %v531, %v530
      %v565 = vpack.c.b16 %v533, %v532
      %598 = vmatprep.subr.bf16.mxu0 0
      %599 = vmatpush1.bf16.msra.mxu0 %v534
      %600 = vmatprep.subr.bf16.mxu0 0
      %601 = vmatpush1.bf16.msra.mxu0 %v535
      %602 = vmatprep.subr.bf16.mxu0 0
      %603 = vmatpush1.bf16.msra.mxu0 %v536
      %604 = vmatprep.subr.bf16.mxu0 0
      %605 = vmatpush1.bf16.msra.mxu0 %v537
      %606 = vmatprep.subr.bf16.mxu0 0
      %607 = vmatpush1.bf16.msra.mxu0 %v538
      %608 = vmatprep.subr.bf16.mxu0 0
      %609 = vmatpush1.bf16.msra.mxu0 %v539
      %610 = vmatprep.subr.bf16.mxu0 0
      %611 = vmatpush1.bf16.msra.mxu0 %v540
      %612 = vmatprep.subr.bf16.mxu0 0
      %613 = vmatpush1.bf16.msra.mxu0 %v541
      %614 = vmatprep.subr.bf16.mxu0 0
      %615 = vmatpush1.bf16.msra.mxu0 %v542
      %616 = vmatprep.subr.bf16.mxu0 0
      %617 = vmatpush1.bf16.msra.mxu0 %v543
      %618 = vmatprep.subr.bf16.mxu0 0
      %619 = vmatpush1.bf16.msra.mxu0 %v544
      %620 = vmatprep.subr.bf16.mxu0 0
      %621 = vmatpush1.bf16.msra.mxu0 %v545
      %622 = vmatprep.subr.bf16.mxu0 0
      %623 = vmatpush1.bf16.msra.mxu0 %v546
      %624 = vmatprep.subr.bf16.mxu0 0
      %625 = vmatpush1.bf16.msra.mxu0 %v547
      %626 = vmatprep.subr.bf16.mxu0 0
      %627 = vmatpush1.bf16.msra.mxu0 %v548
      %628 = vmatprep.subr.bf16.mxu0 0
      %629 = vmatpush1.bf16.msra.mxu0 %v549
      %630 = vmatprep.mubr.bf16.mxu0 %v392
      %631 = vmatmul.mubr.bf16.gmra.mrb[0].mxu0 %v391
      %v632 = vpop.f32.mrb[0].mxu0
      %v633 = vadd.f32 %v404, %v632
      %v634 = vpop.f32.mrb[0].mxu0
      %v635 = vpop.f32.mrb[0].mxu0
      %v636 = vadd.f32 %v404, %v635
      %v637 = vpop.f32.mrb[0].mxu0
      %638 = vmatprep.mubr.bf16.mxu0 %v396
      %639 = vmatmul.mubr.bf16.gmra.mrb[0].mxu0 %v395
      %v640 = vpop.f32.mrb[0].mxu0
      %v641 = vadd.f32 %v404, %v640
      %v642 = vpop.f32.mrb[0].mxu0
      %v643 = vpop.f32.mrb[0].mxu0
      %v644 = vadd.f32 %v404, %v643
      %v645 = vpop.f32.mrb[0].mxu0
      %646 = vdwg.mxu0
      %647 = vmatprep.subr.bf16.mxu0 0
      %648 = vmatpush1.bf16.msra.mxu0 %v550
      %649 = vmatprep.subr.bf16.mxu0 0
      %650 = vmatpush1.bf16.msra.mxu0 %v551
      %651 = vmatprep.subr.bf16.mxu0 0
      %652 = vmatpush1.bf16.msra.mxu0 %v552
      %653 = vmatprep.subr.bf16.mxu0 0
      %654 = vmatpush1.bf16.msra.mxu0 %v553
      %655 = vmatprep.subr.bf16.mxu0 0
      %656 = vmatpush1.bf16.msra.mxu0 %v554
      %657 = vmatprep.subr.bf16.mxu0 0
      %658 = vmatpush1.bf16.msra.mxu0 %v555
      %659 = vmatprep.subr.bf16.mxu0 0
      %660 = vmatpush1.bf16.msra.mxu0 %v556
      %661 = vmatprep.subr.bf16.mxu0 0
      %662 = vmatpush1.bf16.msra.mxu0 %v557
      %663 = vmatprep.subr.bf16.mxu0 0
      %664 = vmatpush1.bf16.msra.mxu0 %v558
      %665 = vmatprep.subr.bf16.mxu0 0
      %666 = vmatpush1.bf16.msra.mxu0 %v559
      %667 = vmatprep.subr.bf16.mxu0 0
      %668 = vmatpush1.bf16.msra.mxu0 %v560
      %669 = vmatprep.subr.bf16.mxu0 0
      %670 = vmatpush1.bf16.msra.mxu0 %v561
      %671 = vmatprep.subr.bf16.mxu0 0
      %672 = vmatpush1.bf16.msra.mxu0 %v562
      %673 = vmatprep.subr.bf16.mxu0 0
      %674 = vmatpush1.bf16.msra.mxu0 %v563
      %675 = vmatprep.subr.bf16.mxu0 0
      %676 = vmatpush1.bf16.msra.mxu0 %v564
      %677 = vmatprep.subr.bf16.mxu0 0
      %678 = vmatpush1.bf16.msra.mxu0 %v565
      %679 = vmatprep.mubr.bf16.mxu0 %v394
      %680 = vmatmul.mubr.bf16.gmra.mrb[0].mxu0 %v393
      %v681 = vpop.f32.mrb[0].mxu0
      %v682 = vadd.f32 %v633, %v681
      %v683 = vpop.f32.mrb[0].mxu0
      %v684 = vpop.f32.mrb[0].mxu0
      %v685 = vadd.f32 %v636, %v684
      %v686 = vpop.f32.mrb[0].mxu0
      %687 = vmatprep.mubr.bf16.mxu0 %v398
      %688 = vmatmul.mubr.bf16.gmra.mrb[0].mxu0 %v397
      %v689 = vpop.f32.mrb[0].mxu0
      %v690 = vadd.f32 %v641, %v689
      %v691 = vpop.f32.mrb[0].mxu0
      %v692 = vpop.f32.mrb[0].mxu0
      %v693 = vadd.f32 %v644, %v692
      %v694 = vpop.f32.mrb[0].mxu0
      %695 = vdwg.mxu0
      %696 = vst [vmem:[#allocation2] sm:$0xff] 0.0
      %697 = vst [vmem:[#allocation2 + $0x8] sm:$0xff] 0.0
      %698 = vst [vmem:[#allocation2 + $0x30] sm:$0xff] 0.0
      %699 = vst [vmem:[#allocation2 + $0x38] sm:$0xff] 0.0
      %v700 = vmax.f32 %v682, 0.0
      %v701 = vmax.f32 %v685, 0.0
      %v702 = vmax.f32 %v690, 0.0
      %v703 = vmax.f32 %v693, 0.0
      %704 = vst [vmem:[#allocation2 + $0x10] sm:$0xff] %v700
      %705 = vst [vmem:[#allocation2 + $0x18] sm:$0xff] %v701
      %706 = vst [vmem:[#allocation2 + $0x20] sm:$0xff] %v702
      %707 = vst [vmem:[#allocation2 + $0x28] sm:$0xff] %v703
      %v708 = vld [vmem:[%s3] sm:$0xf]
      %v709 = vld [vmem:[%s3 + $0x4] sm:$0xf]
      %v710 = vld [vmem:[%s3 + $0x8] sm:$0xf]
      %v711 = vld [vmem:[%s3 + $0xc] sm:$0xf]
      %v712 = vld [vmem:[%s3 + $0x10] sm:$0xf]
      %v713 = vld [vmem:[%s3 + $0x14] sm:$0xf]
      %v714 = vld [vmem:[%s3 + $0x18] sm:$0xf]
      %v715 = vld [vmem:[%s3 + $0x1c] sm:$0xf]
      %v716 = vld [vmem:[%s3 + $0x20] sm:$0xf]
      %v717 = vld [vmem:[%s3 + $0x24] sm:$0xf]
      %v718 = vld [vmem:[%s3 + $0x28] sm:$0xf]
      %v719 = vld [vmem:[%s3 + $0x2c] sm:$0xf]
      %v720 = vld [vmem:[%s3 + $0x30] sm:$0xf]
      %v721 = vld [vmem:[%s3 + $0x34] sm:$0xf]
      %v722 = vld [vmem:[%s3 + $0x38] sm:$0xf]
      %v723 = vld [vmem:[%s3 + $0x3c] sm:$0xf]
      %v724 = vld [vmem:[%s3 + $0x40] sm:$0xf]
      %v725 = vld [vmem:[%s3 + $0x44] sm:$0xf]
      %v726 = vld [vmem:[%s3 + $0x48] sm:$0xf]
      %v727 = vld [vmem:[%s3 + $0x4c] sm:$0xf]
      %v728 = vld [vmem:[%s3 + $0x50] sm:$0xf]
      %v729 = vld [vmem:[%s3 + $0x54] sm:$0xf]
      %v730 = vld [vmem:[%s3 + $0x58] sm:$0xf]
      %v731 = vld [vmem:[%s3 + $0x5c] sm:$0xf]
      %v732 = vld [vmem:[%s3 + $0x60] sm:$0xf]
      %v733 = vld [vmem:[%s3 + $0x64] sm:$0xf]
      %v734 = vld [vmem:[%s3 + $0x68] sm:$0xf]
      %v735 = vld [vmem:[%s3 + $0x6c] sm:$0xf]
      %v736 = vld [vmem:[%s3 + $0x70] sm:$0xf]
      %v737 = vld [vmem:[%s3 + $0x74] sm:$0xf]
      %v738 = vld [vmem:[%s3 + $0x78] sm:$0xf]
      %v739 = vld [vmem:[%s3 + $0x7c] sm:$0xf]
      %v740 = vld [vmem:[%s3 + $0x80] sm:$0xf]
      %v741 = vld [vmem:[%s3 + $0x84] sm:$0xf]
      %v742 = vld [vmem:[%s3 + $0x88] sm:$0xf]
      %v743 = vld [vmem:[%s3 + $0x8c] sm:$0xf]
      %v744 = vld [vmem:[%s3 + $0x90] sm:$0xf]
      %v745 = vld [vmem:[%s3 + $0x94] sm:$0xf]
      %v746 = vld [vmem:[%s3 + $0x98] sm:$0xf]
      %v747 = vld [vmem:[%s3 + $0x9c] sm:$0xf]
      %v748 = vld [vmem:[%s3 + $0xa0] sm:$0xf]
      %v749 = vld [vmem:[%s3 + $0xa4] sm:$0xf]
      %v750 = vld [vmem:[%s3 + $0xa8] sm:$0xf]
      %v751 = vld [vmem:[%s3 + $0xac] sm:$0xf]
      %v752 = vld [vmem:[%s3 + $0xb0] sm:$0xf]
      %v753 = vld [vmem:[%s3 + $0xb4] sm:$0xf]
      %v754 = vld [vmem:[%s3 + $0xb8] sm:$0xf]
      %v755 = vld [vmem:[%s3 + $0xbc] sm:$0xf]
      %v756 = vld [vmem:[#allocation2 + $0x7] sm:$0xff]
      %v757 = vld [vmem:[#allocation2 + $0xf] sm:$0xff]
      %v758 = vld [vmem:[#allocation2 + $0x17] sm:$0xff]
      %v759 = vld [vmem:[#allocation2 + $0x1f] sm:$0xff]
      %v760 = vld [vmem:[#allocation2 + $0x10] sm:$0xff]
      %v761 = vld [vmem:[#allocation2 + $0x18] sm:$0xff]
      %v762 = vld [vmem:[#allocation2 + $0x20] sm:$0xff]
      %v763 = vld [vmem:[#allocation2 + $0x28] sm:$0xff]
      %v764 = vld [vmem:[#allocation2 + $0x19] sm:$0xff]
      %v765 = vld [vmem:[#allocation2 + $0x21] sm:$0xff]
      %v766 = vld [vmem:[#allocation2 + $0x29] sm:$0xff]
      %v767 = vld [vmem:[#allocation2 + $0x31] sm:$0xff]
      %v768 = vpack.c.bf16 %v757, %v756
      %v769 = vpack.c.bf16 %v761, %v760
      %v770 = vpack.c.bf16 %v765, %v764
      %v771 = vpack.c.bf16 %v759, %v758
      %v772 = vpack.c.bf16 %v763, %v762
      %v773 = vpack.c.bf16 %v767, %v766
      %v774 = vld [vmem:[%s4] sm:$0x1]
      %v776 = vlaneseq
      %v777 = vshrl.u32 %v776, 7
      %v778 = vsub.s32 0, %v777
      %v779 = vrot.slane %v774, %v778
      %v829 = vunpack.c.l.b16 %v708
      %v830 = vunpack.c.l.b16 %v709
      %v831 = vunpack.c.l.b16 %v710
      %v832 = vunpack.c.l.b16 %v711
      %v833 = vunpack.c.l.b16 %v712
      %v834 = vunpack.c.l.b16 %v713
      %v835 = vunpack.c.l.b16 %v714
      %v836 = vunpack.c.l.b16 %v715
      %v837 = vunpack.c.l.b16 %v716
      %v838 = vunpack.c.l.b16 %v717
      %v839 = vunpack.c.l.b16 %v718
      %v840 = vunpack.c.l.b16 %v719
      %v841 = vunpack.c.l.b16 %v720
      %v842 = vunpack.c.l.b16 %v721
      %v843 = vunpack.c.l.b16 %v722
      %v844 = vunpack.c.l.b16 %v723
      %v845 = vunpack.c.l.b16 %v724
      %v846 = vunpack.c.l.b16 %v725
      %v847 = vunpack.c.l.b16 %v726
      %v848 = vunpack.c.l.b16 %v727
      %v849 = vunpack.c.l.b16 %v728
      %v850 = vunpack.c.l.b16 %v729
      %v851 = vunpack.c.l.b16 %v730
      %v852 = vunpack.c.l.b16 %v731
      %v853 = vunpack.c.l.b16 %v732
      %v854 = vunpack.c.l.b16 %v733
      %v855 = vunpack.c.l.b16 %v734
      %v856 = vunpack.c.l.b16 %v735
      %v857 = vunpack.c.l.b16 %v736
      %v858 = vunpack.c.l.b16 %v737
      %v859 = vunpack.c.l.b16 %v738
      %v860 = vunpack.c.l.b16 %v739
      %v861 = vunpack.c.l.b16 %v740
      %v862 = vunpack.c.l.b16 %v741
      %v863 = vunpack.c.l.b16 %v742
      %v864 = vunpack.c.l.b16 %v743
      %v865 = vunpack.c.l.b16 %v744
      %v866 = vunpack.c.l.b16 %v745
      %v867 = vunpack.c.l.b16 %v746
      %v868 = vunpack.c.l.b16 %v747
      %v869 = vunpack.c.l.b16 %v748
      %v870 = vunpack.c.l.b16 %v749
      %v871 = vunpack.c.l.b16 %v750
      %v872 = vunpack.c.l.b16 %v751
      %v873 = vunpack.c.l.b16 %v752
      %v874 = vunpack.c.l.b16 %v753
      %v875 = vunpack.c.l.b16 %v754
      %v876 = vunpack.c.l.b16 %v755
      %v877 = vpack.c.b16 %v830, %v829
      %v878 = vpack.c.b16 %v832, %v831
      %v879 = vpack.c.b16 %v834, %v833
      %v880 = vpack.c.b16 %v836, %v835
      %v881 = vpack.c.b16 %v838, %v837
      %v882 = vpack.c.b16 %v840, %v839
      %v883 = vpack.c.b16 %v842, %v841
      %v884 = vpack.c.b16 %v844, %v843
      %v885 = vpack.c.b16 %v846, %v845
      %v886 = vpack.c.b16 %v848, %v847
      %v887 = vpack.c.b16 %v850, %v849
      %v888 = vpack.c.b16 %v852, %v851
      %v889 = vpack.c.b16 %v854, %v853
      %v890 = vpack.c.b16 %v856, %v855
      %v891 = vpack.c.b16 %v858, %v857
      %v892 = vpack.c.b16 %v860, %v859
      %v893 = vpack.c.b16 %v862, %v861
      %v894 = vpack.c.b16 %v864, %v863
      %v895 = vpack.c.b16 %v866, %v865
      %v896 = vpack.c.b16 %v868, %v867
      %v897 = vpack.c.b16 %v870, %v869
      %v898 = vpack.c.b16 %v872, %v871
      %v899 = vpack.c.b16 %v874, %v873
      %v900 = vpack.c.b16 %v876, %v875
      %925 = vmatprep.subr.bf16.mxu0 0
      %926 = vmatpush1.bf16.msra.mxu0 %v877
      %927 = vmatprep.subr.bf16.mxu0 0
      %928 = vmatpush1.bf16.msra.mxu0 %v878
      %929 = vmatprep.subr.bf16.mxu0 0
      %930 = vmatpush1.bf16.msra.mxu0 %v879
      %931 = vmatprep.subr.bf16.mxu0 0
      %932 = vmatpush1.bf16.msra.mxu0 %v880
      %933 = vmatprep.subr.bf16.mxu0 0
      %934 = vmatpush1.bf16.msra.mxu0 %v881
      %935 = vmatprep.subr.bf16.mxu0 0
      %936 = vmatpush1.bf16.msra.mxu0 %v882
      %937 = vmatprep.subr.bf16.mxu0 0
      %938 = vmatpush1.bf16.msra.mxu0 %v883
      %939 = vmatprep.subr.bf16.mxu0 0
      %940 = vmatpush1.bf16.msra.mxu0 %v884
      %941 = vmatprep.subr.bf16.mxu0 0
      %942 = vmatpush1.bf16.msra.mxu0 %v885
      %943 = vmatprep.subr.bf16.mxu0 0
      %944 = vmatpush1.bf16.msra.mxu0 %v886
      %945 = vmatprep.subr.bf16.mxu0 0
      %946 = vmatpush1.bf16.msra.mxu0 %v887
      %947 = vmatprep.subr.bf16.mxu0 0
      %948 = vmatpush1.bf16.msra.mxu0 %v888
      %949 = vmatprep.subr.bf16.mxu0 0
      %950 = vmatpush1.bf16.msra.mxu0 %v889
      %951 = vmatprep.subr.bf16.mxu0 0
      %952 = vmatpush1.bf16.msra.mxu0 %v890
      %953 = vmatprep.subr.bf16.mxu0 0
      %954 = vmatpush1.bf16.msra.mxu0 %v891
      %955 = vmatprep.subr.bf16.mxu0 0
      %956 = vmatpush1.bf16.msra.mxu0 %v892
      %957 = vmatprep.mubr.bf16.mxu0 %v769
      %958 = vmatmul.mubr.bf16.gmra.mrb[0].mxu0 %v768
      %v959 = vpop.f32.mrb[0].mxu0
      %v960 = vadd.f32 %v779, %v959
      %v961 = vpop.f32.mrb[0].mxu0
      %v962 = vpop.f32.mrb[0].mxu0
      %v963 = vadd.f32 %v779, %v962
      %v964 = vpop.f32.mrb[0].mxu0
      %965 = vmatprep.mubr.bf16.mxu0 %v772
      %966 = vmatmul.mubr.bf16.gmra.mrb[0].mxu0 %v771
      %v967 = vpop.f32.mrb[0].mxu0
      %v968 = vadd.f32 %v779, %v967
      %v969 = vpop.f32.mrb[0].mxu0
      %v970 = vpop.f32.mrb[0].mxu0
      %v971 = vadd.f32 %v779, %v970
      %v972 = vpop.f32.mrb[0].mxu0
      %973 = vdwg.mxu0
      %974 = vmatprep.subr.bf16.mxu0 0
      %975 = vmatpush1.bf16.msra.mxu0 %v893
      %976 = vmatprep.subr.bf16.mxu0 0
      %977 = vmatpush1.bf16.msra.mxu0 %v894
      %978 = vmatprep.subr.bf16.mxu0 0
      %979 = vmatpush1.bf16.msra.mxu0 %v895
      %980 = vmatprep.subr.bf16.mxu0 0
      %981 = vmatpush1.bf16.msra.mxu0 %v896
      %982 = vmatprep.subr.bf16.mxu0 0
      %983 = vmatpush1.bf16.msra.mxu0 %v897
      %984 = vmatprep.subr.bf16.mxu0 0
      %985 = vmatpush1.bf16.msra.mxu0 %v898
      %986 = vmatprep.subr.bf16.mxu0 0
      %987 = vmatpush1.bf16.msra.mxu0 %v899
      %988 = vmatprep.subr.bf16.mxu0 0
      %989 = vmatpush1.bf16.msra.mxu0 %v900
      %990 = vmatprep.subr.bf16.mxu0 0
      %991 = vmatpush1.bf16.msra.mxu0 0
      %992 = vmatprep.subr.bf16.mxu0 0
      %993 = vmatpush1.bf16.msra.mxu0 0
      %994 = vmatprep.subr.bf16.mxu0 0
      %995 = vmatpush1.bf16.msra.mxu0 0
      %996 = vmatprep.subr.bf16.mxu0 0
      %997 = vmatpush1.bf16.msra.mxu0 0
      %998 = vmatprep.subr.bf16.mxu0 0
      %999 = vmatpush1.bf16.msra.mxu0 0
      %1000 = vmatprep.subr.bf16.mxu0 0
      %1001 = vmatpush1.bf16.msra.mxu0 0
      %1002 = vmatprep.subr.bf16.mxu0 0
      %1003 = vmatpush1.bf16.msra.mxu0 0
      %1004 = vmatprep.subr.bf16.mxu0 0
      %1005 = vmatpush1.bf16.msra.mxu0 0
      %1006 = vmatprep.mubr.bf16.mxu0 0
      %1007 = vmatmul.mubr.bf16.gmra.mrb[0].mxu0 %v770
      %v1008 = vpop.f32.mrb[0].mxu0
      %v1009 = vadd.f32 %v960, %v1008
      %v1010 = vpop.f32.mrb[0].mxu0
      %v1011 = vpop.f32.mrb[0].mxu0
      %v1012 = vadd.f32 %v963, %v1011
      %v1013 = vpop.f32.mrb[0].mxu0
      %1014 = vmatprep.mubr.bf16.mxu0 0
      %1015 = vmatmul.mubr.bf16.gmra.mrb[0].mxu0 %v773
      %v1016 = vpop.f32.mrb[0].mxu0
      %v1017 = vadd.f32 %v968, %v1016
      %v1018 = vpop.f32.mrb[0].mxu0
      %v1019 = vpop.f32.mrb[0].mxu0
      %v1020 = vadd.f32 %v971, %v1019
      %v1021 = vpop.f32.mrb[0].mxu0
      %1022 = vdwg.mxu0
      %v1023 = vmax.f32 %v1009, 0.0
      %v1024 = vmax.f32 %v1012, 0.0
      %v1025 = vmax.f32 %v1017, 0.0
      %v1026 = vmax.f32 %v1020, 0.0
      %v1027 = vld [vmem:[%s5] sm:$0xf]
      %v1028 = vld [vmem:[%s5 + $0x4] sm:$0xf]
      %v1029 = vld [vmem:[%s5 + $0x8] sm:$0xf]
      %v1030 = vld [vmem:[%s5 + $0xc] sm:$0xf]
      %v1031 = vld [vmem:[%s5 + $0x10] sm:$0xf]
      %v1032 = vld [vmem:[%s5 + $0x14] sm:$0xf]
      %v1033 = vld [vmem:[%s5 + $0x18] sm:$0xf]
      %v1034 = vld [vmem:[%s5 + $0x1c] sm:$0xf]
      %v1035 = vld [vmem:[%s5 + $0x20] sm:$0xf]
      %v1036 = vld [vmem:[%s5 + $0x24] sm:$0xf]
      %v1037 = vld [vmem:[%s5 + $0x28] sm:$0xf]
      %v1038 = vld [vmem:[%s5 + $0x2c] sm:$0xf]
      %v1039 = vld [vmem:[%s5 + $0x30] sm:$0xf]
      %v1040 = vld [vmem:[%s5 + $0x34] sm:$0xf]
      %v1041 = vld [vmem:[%s5 + $0x38] sm:$0xf]
      %v1042 = vld [vmem:[%s5 + $0x3c] sm:$0xf]
      %v1043 = vpack.c.bf16 %v1024, %v1023
      %v1044 = vpack.c.bf16 %v1026, %v1025
      %v1045 = vld [vmem:[%s6] sm:$0x1]
      %v1047 = vlaneseq
      %v1048 = vshrl.u32 %v1047, 7
      %v1049 = vsub.s32 0, %v1048
      %v1050 = vrot.slane %v1045, %v1049
      %v1068 = vunpack.c.l.b16 %v1027
      %v1069 = vunpack.c.l.b16 %v1028
      %v1070 = vunpack.c.l.b16 %v1029
      %v1071 = vunpack.c.l.b16 %v1030
      %v1072 = vunpack.c.l.b16 %v1031
      %v1073 = vunpack.c.l.b16 %v1032
      %v1074 = vunpack.c.l.b16 %v1033
      %v1075 = vunpack.c.l.b16 %v1034
      %v1076 = vunpack.c.l.b16 %v1035
      %v1077 = vunpack.c.l.b16 %v1036
      %v1078 = vunpack.c.l.b16 %v1037
      %v1079 = vunpack.c.l.b16 %v1038
      %v1080 = vunpack.c.l.b16 %v1039
      %v1081 = vunpack.c.l.b16 %v1040
      %v1082 = vunpack.c.l.b16 %v1041
      %v1083 = vunpack.c.l.b16 %v1042
      %v1084 = vpack.c.b16 %v1069, %v1068
      %v1085 = vpack.c.b16 %v1071, %v1070
      %v1086 = vpack.c.b16 %v1073, %v1072
      %v1087 = vpack.c.b16 %v1075, %v1074
      %v1088 = vpack.c.b16 %v1077, %v1076
      %v1089 = vpack.c.b16 %v1079, %v1078
      %v1090 = vpack.c.b16 %v1081, %v1080
      %v1091 = vpack.c.b16 %v1083, %v1082
      %1100 = vmatprep.subr.bf16.mxu0 0
      %1101 = vmatpush1.bf16.msra.mxu0 %v1084
      %1102 = vmatprep.subr.bf16.mxu0 0
      %1103 = vmatpush1.bf16.msra.mxu0 %v1085
      %1104 = vmatprep.subr.bf16.mxu0 0
      %1105 = vmatpush1.bf16.msra.mxu0 %v1086
      %1106 = vmatprep.subr.bf16.mxu0 0
      %1107 = vmatpush1.bf16.msra.mxu0 %v1087
      %1108 = vmatprep.subr.bf16.mxu0 0
      %1109 = vmatpush1.bf16.msra.mxu0 %v1088
      %1110 = vmatprep.subr.bf16.mxu0 0
      %1111 = vmatpush1.bf16.msra.mxu0 %v1089
      %1112 = vmatprep.subr.bf16.mxu0 0
      %1113 = vmatpush1.bf16.msra.mxu0 %v1090
      %1114 = vmatprep.subr.bf16.mxu0 0
      %1115 = vmatpush1.bf16.msra.mxu0 %v1091
      %1116 = vmatprep.subr.bf16.mxu0 0
      %1117 = vmatpush1.bf16.msra.mxu0 0
      %1118 = vmatprep.subr.bf16.mxu0 0
      %1119 = vmatpush1.bf16.msra.mxu0 0
      %1120 = vmatprep.subr.bf16.mxu0 0
      %1121 = vmatpush1.bf16.msra.mxu0 0
      %1122 = vmatprep.subr.bf16.mxu0 0
      %1123 = vmatpush1.bf16.msra.mxu0 0
      %1124 = vmatprep.subr.bf16.mxu0 0
      %1125 = vmatpush1.bf16.msra.mxu0 0
      %1126 = vmatprep.subr.bf16.mxu0 0
      %1127 = vmatpush1.bf16.msra.mxu0 0
      %1128 = vmatprep.subr.bf16.mxu0 0
      %1129 = vmatpush1.bf16.msra.mxu0 0
      %1130 = vmatprep.subr.bf16.mxu0 0
      %1131 = vmatpush1.bf16.msra.mxu0 0
      %1132 = vmatprep.mubr.bf16.mxu0 0
      %1133 = vmatmul.mubr.bf16.gmra.mrb[0].mxu0 %v1043
      %v1134 = vpop.f32.mrb[0].mxu0
      %v1135 = vadd.f32 %v1050, %v1134
      %v1136 = vpop.f32.mrb[0].mxu0
      %v1137 = vpop.f32.mrb[0].mxu0
      %v1138 = vadd.f32 %v1050, %v1137
      %v1139 = vpop.f32.mrb[0].mxu0
      %1140 = vmatprep.mubr.bf16.mxu0 0
      %1141 = vmatmul.mubr.bf16.gmra.mrb[0].mxu0 %v1044
      %v1142 = vpop.f32.mrb[0].mxu0
      %v1143 = vadd.f32 %v1050, %v1142
      %v1144 = vpop.f32.mrb[0].mxu0
      %v1145 = vpop.f32.mrb[0].mxu0
      %v1146 = vadd.f32 %v1050, %v1145
      %v1147 = vpop.f32.mrb[0].mxu0
      %1148 = vdwg.mxu0
      %v1149 = vadd.f32 %v682, %v1135
      %v1150 = vadd.f32 %v685, %v1138
      %v1151 = vadd.f32 %v690, %v1143
      %v1152 = vadd.f32 %v693, %v1146
      %v1153 = vmax.f32 %v1149, 0.0
      %v1154 = vmax.f32 %v1150, 0.0
      %v1155 = vmax.f32 %v1151, 0.0
      %v1156 = vmax.f32 %v1152, 0.0
      %1157 = vst [vmem:[#allocation2 + $0x10] sm:$0xff] %v1153
      %1158 = vst [vmem:[#allocation2 + $0x18] sm:$0xff] %v1154
      %1159 = vst [vmem:[#allocation2 + $0x20] sm:$0xff] %v1155
      %1160 = vst [vmem:[#allocation2 + $0x28] sm:$0xff] %v1156
      %s1161 = scalar_lea.vmem %s3, 192
      %v1162 = vld [vmem:[%s1161] sm:$0xf]
      %v1163 = vld [vmem:[%s1161 + $0x4] sm:$0xf]
      %v1164 = vld [vmem:[%s1161 + $0x8] sm:$0xf]
      %v1165 = vld [vmem:[%s1161 + $0xc] sm:$0xf]
      %v1166 = vld [vmem:[%s1161 + $0x10] sm:$0xf]
      %v1167 = vld [vmem:[%s1161 + $0x14] sm:$0xf]
      %v1168 = vld [vmem:[%s1161 + $0x18] sm:$0xf]
      %v1169 = vld [vmem:[%s1161 + $0x1c] sm:$0xf]
      %v1170 = vld [vmem:[%s1161 + $0x20] sm:$0xf]
      %v1171 = vld [vmem:[%s1161 + $0x24] sm:$0xf]
      %v1172 = vld [vmem:[%s1161 + $0x28] sm:$0xf]
      %v1173 = vld [vmem:[%s1161 + $0x2c] sm:$0xf]
      %v1174 = vld [vmem:[%s1161 + $0x30] sm:$0xf]
      %v1175 = vld [vmem:[%s1161 + $0x34] sm:$0xf]
      %v1176 = vld [vmem:[%s1161 + $0x38] sm:$0xf]
      %v1177 = vld [vmem:[%s1161 + $0x3c] sm:$0xf]
      %v1178 = vld [vmem:[%s1161 + $0x40] sm:$0xf]
      %v1179 = vld [vmem:[%s1161 + $0x44] sm:$0xf]
      %v1180 = vld [vmem:[%s1161 + $0x48] sm:$0xf]
      %v1181 = vld [vmem:[%s1161 + $0x4c] sm:$0xf]
      %v1182 = vld [vmem:[%s1161 + $0x50] sm:$0xf]
      %v1183 = vld [vmem:[%s1161 + $0x54] sm:$0xf]
      %v1184 = vld [vmem:[%s1161 + $0x58] sm:$0xf]
      %v1185 = vld [vmem:[%s1161 + $0x5c] sm:$0xf]
      %v1186 = vld [vmem:[%s1161 + $0x60] sm:$0xf]
      %v1187 = vld [vmem:[%s1161 + $0x64] sm:$0xf]
      %v1188 = vld [vmem:[%s1161 + $0x68] sm:$0xf]
      %v1189 = vld [vmem:[%s1161 + $0x6c] sm:$0xf]
      %v1190 = vld [vmem:[%s1161 + $0x70] sm:$0xf]
      %v1191 = vld [vmem:[%s1161 + $0x74] sm:$0xf]
      %v1192 = vld [vmem:[%s1161 + $0x78] sm:$0xf]
      %v1193 = vld [vmem:[%s1161 + $0x7c] sm:$0xf]
      %v1194 = vld [vmem:[%s1161 + $0x80] sm:$0xf]
      %v1195 = vld [vmem:[%s1161 + $0x84] sm:$0xf]
      %v1196 = vld [vmem:[%s1161 + $0x88] sm:$0xf]
      %v1197 = vld [vmem:[%s1161 + $0x8c] sm:$0xf]
      %v1198 = vld [vmem:[%s1161 + $0x90] sm:$0xf]
      %v1199 = vld [vmem:[%s1161 + $0x94] sm:$0xf]
      %v1200 = vld [vmem:[%s1161 + $0x98] sm:$0xf]
      %v1201 = vld [vmem:[%s1161 + $0x9c] sm:$0xf]
      %v1202 = vld [vmem:[%s1161 + $0xa0] sm:$0xf]
      %v1203 = vld [vmem:[%s1161 + $0xa4] sm:$0xf]
      %v1204 = vld [vmem:[%s1161 + $0xa8] sm:$0xf]
      %v1205 = vld [vmem:[%s1161 + $0xac] sm:$0xf]
      %v1206 = vld [vmem:[%s1161 + $0xb0] sm:$0xf]
      %v1207 = vld [vmem:[%s1161 + $0xb4] sm:$0xf]
      %v1208 = vld [vmem:[%s1161 + $0xb8] sm:$0xf]
      %v1209 = vld [vmem:[%s1161 + $0xbc] sm:$0xf]
      %v1210 = vld [vmem:[#allocation2 + $0xd] sm:$0xff]
      %v1211 = vld [vmem:[#allocation2 + $0x15] sm:$0xff]
      %v1212 = vld [vmem:[#allocation2 + $0x1d] sm:$0xff]
      %v1213 = vld [vmem:[#allocation2 + $0x25] sm:$0xff]
      %v1214 = vld [vmem:[#allocation2 + $0x10] sm:$0xff]
      %v1215 = vld [vmem:[#allocation2 + $0x18] sm:$0xff]
      %v1216 = vld [vmem:[#allocation2 + $0x20] sm:$0xff]
      %v1217 = vld [vmem:[#allocation2 + $0x28] sm:$0xff]
      %v1218 = vld [vmem:[#allocation2 + $0x13] sm:$0xff]
      %v1219 = vld [vmem:[#allocation2 + $0x1b] sm:$0xff]
      %v1220 = vld [vmem:[#allocation2 + $0x23] sm:$0xff]
      %v1221 = vld [vmem:[#allocation2 + $0x2b] sm:$0xff]
      %v1222 = vpack.c.bf16 %v1211, %v1210
      %v1223 = vpack.c.bf16 %v1215, %v1214
      %v1224 = vpack.c.bf16 %v1219, %v1218
      %v1225 = vpack.c.bf16 %v1213, %v1212
      %v1226 = vpack.c.bf16 %v1217, %v1216
      %v1227 = vpack.c.bf16 %v1221, %v1220
      %s1228 = scalar_lea.vmem %s4, 1
      %v1229 = vld [vmem:[%s1228] sm:$0x1]
      %v1231 = vlaneseq
      %v1232 = vshrl.u32 %v1231, 7
      %v1233 = vsub.s32 0, %v1232
      %v1234 = vrot.slane %v1229, %v1233
      %v1284 = vunpack.c.l.b16 %v1162
      %v1285 = vunpack.c.l.b16 %v1163
      %v1286 = vunpack.c.l.b16 %v1164
      %v1287 = vunpack.c.l.b16 %v1165
      %v1288 = vunpack.c.l.b16 %v1166
      %v1289 = vunpack.c.l.b16 %v1167
      %v1290 = vunpack.c.l.b16 %v1168
      %v1291 = vunpack.c.l.b16 %v1169
      %v1292 = vunpack.c.l.b16 %v1170
      %v1293 = vunpack.c.l.b16 %v1171
      %v1294 = vunpack.c.l.b16 %v1172
      %v1295 = vunpack.c.l.b16 %v1173
      %v1296 = vunpack.c.l.b16 %v1174
      %v1297 = vunpack.c.l.b16 %v1175
      %v1298 = vunpack.c.l.b16 %v1176
      %v1299 = vunpack.c.l.b16 %v1177
      %v1300 = vunpack.c.l.b16 %v1178
      %v1301 = vunpack.c.l.b16 %v1179
      %v1302 = vunpack.c.l.b16 %v1180
      %v1303 = vunpack.c.l.b16 %v1181
      %v1304 = vunpack.c.l.b16 %v1182
      %v1305 = vunpack.c.l.b16 %v1183
      %v1306 = vunpack.c.l.b16 %v1184
      %v1307 = vunpack.c.l.b16 %v1185
      %v1308 = vunpack.c.l.b16 %v1186
      %v1309 = vunpack.c.l.b16 %v1187
      %v1310 = vunpack.c.l.b16 %v1188
      %v1311 = vunpack.c.l.b16 %v1189
      %v1312 = vunpack.c.l.b16 %v1190
      %v1313 = vunpack.c.l.b16 %v1191
      %v1314 = vunpack.c.l.b16 %v1192
      %v1315 = vunpack.c.l.b16 %v1193
      %v1316 = vunpack.c.l.b16 %v1194
      %v1317 = vunpack.c.l.b16 %v1195
      %v1318 = vunpack.c.l.b16 %v1196
      %v1319 = vunpack.c.l.b16 %v1197
      %v1320 = vunpack.c.l.b16 %v1198
      %v1321 = vunpack.c.l.b16 %v1199
      %v1322 = vunpack.c.l.b16 %v1200
      %v1323 = vunpack.c.l.b16 %v1201
      %v1324 = vunpack.c.l.b16 %v1202
      %v1325 = vunpack.c.l.b16 %v1203
      %v1326 = vunpack.c.l.b16 %v1204
      %v1327 = vunpack.c.l.b16 %v1205
      %v1328 = vunpack.c.l.b16 %v1206
      %v1329 = vunpack.c.l.b16 %v1207
      %v1330 = vunpack.c.l.b16 %v1208
      %v1331 = vunpack.c.l.b16 %v1209
      %v1332 = vpack.c.b16 %v1285, %v1284
      %v1333 = vpack.c.b16 %v1287, %v1286
      %v1334 = vpack.c.b16 %v1289, %v1288
      %v1335 = vpack.c.b16 %v1291, %v1290
      %v1336 = vpack.c.b16 %v1293, %v1292
      %v1337 = vpack.c.b16 %v1295, %v1294
      %v1338 = vpack.c.b16 %v1297, %v1296
      %v1339 = vpack.c.b16 %v1299, %v1298
      %v1340 = vpack.c.b16 %v1301, %v1300
      %v1341 = vpack.c.b16 %v1303, %v1302
      %v1342 = vpack.c.b16 %v1305, %v1304
      %v1343 = vpack.c.b16 %v1307, %v1306
      %v1344 = vpack.c.b16 %v1309, %v1308
      %v1345 = vpack.c.b16 %v1311, %v1310
      %v1346 = vpack.c.b16 %v1313, %v1312
      %v1347 = vpack.c.b16 %v1315, %v1314
      %v1348 = vpack.c.b16 %v1317, %v1316
      %v1349 = vpack.c.b16 %v1319, %v1318
      %v1350 = vpack.c.b16 %v1321, %v1320
      %v1351 = vpack.c.b16 %v1323, %v1322
      %v1352 = vpack.c.b16 %v1325, %v1324
      %v1353 = vpack.c.b16 %v1327, %v1326
      %v1354 = vpack.c.b16 %v1329, %v1328
      %v1355 = vpack.c.b16 %v1331, %v1330
      %1380 = vmatprep.subr.bf16.mxu0 0
      %1381 = vmatpush1.bf16.msra.mxu0 %v1332
      %1382 = vmatprep.subr.bf16.mxu0 0
      %1383 = vmatpush1.bf16.msra.mxu0 %v1333
      %1384 = vmatprep.subr.bf16.mxu0 0
      %1385 = vmatpush1.bf16.msra.mxu0 %v1334
      %1386 = vmatprep.subr.bf16.mxu0 0
      %1387 = vmatpush1.bf16.msra.mxu0 %v1335
      %1388 = vmatprep.subr.bf16.mxu0 0
      %1389 = vmatpush1.bf16.msra.mxu0 %v1336
      %1390 = vmatprep.subr.bf16.mxu0 0
      %1391 = vmatpush1.bf16.msra.mxu0 %v1337
      %1392 = vmatprep.subr.bf16.mxu0 0
      %1393 = vmatpush1.bf16.msra.mxu0 %v1338
      %1394 = vmatprep.subr.bf16.mxu0 0
      %1395 = vmatpush1.bf16.msra.mxu0 %v1339
      %1396 = vmatprep.subr.bf16.mxu0 0
      %1397 = vmatpush1.bf16.msra.mxu0 %v1340
      %1398 = vmatprep.subr.bf16.mxu0 0
      %1399 = vmatpush1.bf16.msra.mxu0 %v1341
      %1400 = vmatprep.subr.bf16.mxu0 0
      %1401 = vmatpush1.bf16.msra.mxu0 %v1342
      %1402 = vmatprep.subr.bf16.mxu0 0
      %1403 = vmatpush1.bf16.msra.mxu0 %v1343
      %1404 = vmatprep.subr.bf16.mxu0 0
      %1405 = vmatpush1.bf16.msra.mxu0 %v1344
      %1406 = vmatprep.subr.bf16.mxu0 0
      %1407 = vmatpush1.bf16.msra.mxu0 %v1345
      %1408 = vmatprep.subr.bf16.mxu0 0
      %1409 = vmatpush1.bf16.msra.mxu0 %v1346
      %1410 = vmatprep.subr.bf16.mxu0 0
      %1411 = vmatpush1.bf16.msra.mxu0 %v1347
      %1412 = vmatprep.mubr.bf16.mxu0 %v1223
      %1413 = vmatmul.mubr.bf16.gmra.mrb[0].mxu0 %v1222
      %v1414 = vpop.f32.mrb[0].mxu0
      %v1415 = vadd.f32 %v1234, %v1414
      %v1416 = vpop.f32.mrb[0].mxu0
      %v1417 = vpop.f32.mrb[0].mxu0
      %v1418 = vadd.f32 %v1234, %v1417
      %v1419 = vpop.f32.mrb[0].mxu0
      %1420 = vmatprep.mubr.bf16.mxu0 %v1226
      %1421 = vmatmul.mubr.bf16.gmra.mrb[0].mxu0 %v1225
      %v1422 = vpop.f32.mrb[0].mxu0
      %v1423 = vadd.f32 %v1234, %v1422
      %v1424 = vpop.f32.mrb[0].mxu0
      %v1425 = vpop.f32.mrb[0].mxu0
      %v1426 = vadd.f32 %v1234, %v1425
      %v1427 = vpop.f32.mrb[0].mxu0
      %1428 = vdwg.mxu0
      %1429 = vmatprep.subr.bf16.mxu0 0
      %1430 = vmatpush1.bf16.msra.mxu0 %v1348
      %1431 = vmatprep.subr.bf16.mxu0 0
      %1432 = vmatpush1.bf16.msra.mxu0 %v1349
      %1433 = vmatprep.subr.bf16.mxu0 0
      %1434 = vmatpush1.bf16.msra.mxu0 %v1350
      %1435 = vmatprep.subr.bf16.mxu0 0
      %1436 = vmatpush1.bf16.msra.mxu0 %v1351
      %1437 = vmatprep.subr.bf16.mxu0 0
      %1438 = vmatpush1.bf16.msra.mxu0 %v1352
      %1439 = vmatprep.subr.bf16.mxu0 0
      %1440 = vmatpush1.bf16.msra.mxu0 %v1353
      %1441 = vmatprep.subr.bf16.mxu0 0
      %1442 = vmatpush1.bf16.msra.mxu0 %v1354
      %1443 = vmatprep.subr.bf16.mxu0 0
      %1444 = vmatpush1.bf16.msra.mxu0 %v1355
      %1445 = vmatprep.subr.bf16.mxu0 0
      %1446 = vmatpush1.bf16.msra.mxu0 0
      %1447 = vmatprep.subr.bf16.mxu0 0
      %1448 = vmatpush1.bf16.msra.mxu0 0
      %1449 = vmatprep.subr.bf16.mxu0 0
      %1450 = vmatpush1.bf16.msra.mxu0 0
      %1451 = vmatprep.subr.bf16.mxu0 0
      %1452 = vmatpush1.bf16.msra.mxu0 0
      %1453 = vmatprep.subr.bf16.mxu0 0
      %1454 = vmatpush1.bf16.msra.mxu0 0
      %1455 = vmatprep.subr.bf16.mxu0 0
      %1456 = vmatpush1.bf16.msra.mxu0 0
      %1457 = vmatprep.subr.bf16.mxu0 0
      %1458 = vmatpush1.bf16.msra.mxu0 0
      %1459 = vmatprep.subr.bf16.mxu0 0
      %1460 = vmatpush1.bf16.msra.mxu0 0
      %1461 = vmatprep.mubr.bf16.mxu0 0
      %1462 = vmatmul.mubr.bf16.gmra.mrb[0].mxu0 %v1224
      %v1463 = vpop.f32.mrb[0].mxu0
      %v1464 = vadd.f32 %v1415, %v1463
      %v1465 = vpop.f32.mrb[0].mxu0
      %v1466 = vpop.f32.mrb[0].mxu0
      %v1467 = vadd.f32 %v1418, %v1466
      %v1468 = vpop.f32.mrb[0].mxu0
      %1469 = vmatprep.mubr.bf16.mxu0 0
      %1470 = vmatmul.mubr.bf16.gmra.mrb[0].mxu0 %v1227
      %v1471 = vpop.f32.mrb[0].mxu0
      %v1472 = vadd.f32 %v1423, %v1471
      %v1473 = vpop.f32.mrb[0].mxu0
      %v1474 = vpop.f32.mrb[0].mxu0
      %v1475 = vadd.f32 %v1426, %v1474
      %v1476 = vpop.f32.mrb[0].mxu0
      %1477 = vdwg.mxu0
      %v1478 = vmax.f32 %v1464, 0.0
      %v1479 = vmax.f32 %v1467, 0.0
      %v1480 = vmax.f32 %v1472, 0.0
      %v1481 = vmax.f32 %v1475, 0.0
      %s1482 = scalar_lea.vmem %s5, 64
      %v1483 = vld [vmem:[%s1482] sm:$0xf]
      %v1484 = vld [vmem:[%s1482 + $0x4] sm:$0xf]
      %v1485 = vld [vmem:[%s1482 + $0x8] sm:$0xf]
      %v1486 = vld [vmem:[%s1482 + $0xc] sm:$0xf]
      %v1487 = vld [vmem:[%s1482 + $0x10] sm:$0xf]
      %v1488 = vld [vmem:[%s1482 + $0x14] sm:$0xf]
      %v1489 = vld [vmem:[%s1482 + $0x18] sm:$0xf]
      %v1490 = vld [vmem:[%s1482 + $0x1c] sm:$0xf]
      %v1491 = vld [vmem:[%s1482 + $0x20] sm:$0xf]
      %v1492 = vld [vmem:[%s1482 + $0x24] sm:$0xf]
      %v1493 = vld [vmem:[%s1482 + $0x28] sm:$0xf]
      %v1494 = vld [vmem:[%s1482 + $0x2c] sm:$0xf]
      %v1495 = vld [vmem:[%s1482 + $0x30] sm:$0xf]
      %v1496 = vld [vmem:[%s1482 + $0x34] sm:$0xf]
      %v1497 = vld [vmem:[%s1482 + $0x38] sm:$0xf]
      %v1498 = vld [vmem:[%s1482 + $0x3c] sm:$0xf]
      %v1499 = vpack.c.bf16 %v1479, %v1478
      %v1500 = vpack.c.bf16 %v1481, %v1480
      %s1501 = scalar_lea.vmem %s6, 1
      %v1502 = vld [vmem:[%s1501] sm:$0x1]
      %v1504 = vlaneseq
      %v1505 = vshrl.u32 %v1504, 7
      %v1506 = vsub.s32 0, %v1505
      %v1507 = vrot.slane %v1502, %v1506
      %v1525 = vunpack.c.l.b16 %v1483
      %v1526 = vunpack.c.l.b16 %v1484
      %v1527 = vunpack.c.l.b16 %v1485
      %v1528 = vunpack.c.l.b16 %v1486
      %v1529 = vunpack.c.l.b16 %v1487
      %v1530 = vunpack.c.l.b16 %v1488
      %v1531 = vunpack.c.l.b16 %v1489
      %v1532 = vunpack.c.l.b16 %v1490
      %v1533 = vunpack.c.l.b16 %v1491
      %v1534 = vunpack.c.l.b16 %v1492
      %v1535 = vunpack.c.l.b16 %v1493
      %v1536 = vunpack.c.l.b16 %v1494
      %v1537 = vunpack.c.l.b16 %v1495
      %v1538 = vunpack.c.l.b16 %v1496
      %v1539 = vunpack.c.l.b16 %v1497
      %v1540 = vunpack.c.l.b16 %v1498
      %v1541 = vpack.c.b16 %v1526, %v1525
      %v1542 = vpack.c.b16 %v1528, %v1527
      %v1543 = vpack.c.b16 %v1530, %v1529
      %v1544 = vpack.c.b16 %v1532, %v1531
      %v1545 = vpack.c.b16 %v1534, %v1533
      %v1546 = vpack.c.b16 %v1536, %v1535
      %v1547 = vpack.c.b16 %v1538, %v1537
      %v1548 = vpack.c.b16 %v1540, %v1539
      %1557 = vmatprep.subr.bf16.mxu0 0
      %1558 = vmatpush1.bf16.msra.mxu0 %v1541
      %1559 = vmatprep.subr.bf16.mxu0 0
      %1560 = vmatpush1.bf16.msra.mxu0 %v1542
      %1561 = vmatprep.subr.bf16.mxu0 0
      %1562 = vmatpush1.bf16.msra.mxu0 %v1543
      %1563 = vmatprep.subr.bf16.mxu0 0
      %1564 = vmatpush1.bf16.msra.mxu0 %v1544
      %1565 = vmatprep.subr.bf16.mxu0 0
      %1566 = vmatpush1.bf16.msra.mxu0 %v1545
      %1567 = vmatprep.subr.bf16.mxu0 0
      %1568 = vmatpush1.bf16.msra.mxu0 %v1546
      %1569 = vmatprep.subr.bf16.mxu0 0
      %1570 = vmatpush1.bf16.msra.mxu0 %v1547
      %1571 = vmatprep.subr.bf16.mxu0 0
      %1572 = vmatpush1.bf16.msra.mxu0 %v1548
      %1573 = vmatprep.subr.bf16.mxu0 0
      %1574 = vmatpush1.bf16.msra.mxu0 0
      %1575 = vmatprep.subr.bf16.mxu0 0
      %1576 = vmatpush1.bf16.msra.mxu0 0
      %1577 = vmatprep.subr.bf16.mxu0 0
      %1578 = vmatpush1.bf16.msra.mxu0 0
      %1579 = vmatprep.subr.bf16.mxu0 0
      %1580 = vmatpush1.bf16.msra.mxu0 0
      %1581 = vmatprep.subr.bf16.mxu0 0
      %1582 = vmatpush1.bf16.msra.mxu0 0
      %1583 = vmatprep.subr.bf16.mxu0 0
      %1584 = vmatpush1.bf16.msra.mxu0 0
      %1585 = vmatprep.subr.bf16.mxu0 0
      %1586 = vmatpush1.bf16.msra.mxu0 0
      %1587 = vmatprep.subr.bf16.mxu0 0
      %1588 = vmatpush1.bf16.msra.mxu0 0
      %1589 = vmatprep.mubr.bf16.mxu0 0
      %1590 = vmatmul.mubr.bf16.gmra.mrb[0].mxu0 %v1499
      %v1591 = vpop.f32.mrb[0].mxu0
      %v1592 = vadd.f32 %v1507, %v1591
      %v1593 = vpop.f32.mrb[0].mxu0
      %v1594 = vpop.f32.mrb[0].mxu0
      %v1595 = vadd.f32 %v1507, %v1594
      %v1596 = vpop.f32.mrb[0].mxu0
      %1597 = vmatprep.mubr.bf16.mxu0 0
      %1598 = vmatmul.mubr.bf16.gmra.mrb[0].mxu0 %v1500
      %v1599 = vpop.f32.mrb[0].mxu0
      %v1600 = vadd.f32 %v1507, %v1599
      %v1601 = vpop.f32.mrb[0].mxu0
      %v1602 = vpop.f32.mrb[0].mxu0
      %v1603 = vadd.f32 %v1507, %v1602
      %v1604 = vpop.f32.mrb[0].mxu0
      %1605 = vdwg.mxu0
      %v1606 = vadd.f32 %v1149, %v1592
      %v1607 = vadd.f32 %v1150, %v1595
      %v1608 = vadd.f32 %v1151, %v1600
      %v1609 = vadd.f32 %v1152, %v1603
      %v1610 = vmax.f32 %v1606, 0.0
      %v1611 = vmax.f32 %v1607, 0.0
      %v1612 = vmax.f32 %v1608, 0.0
      %v1613 = vmax.f32 %v1609, 0.0
      %1614 = vst [vmem:[#allocation2 + $0x10] sm:$0xff] %v1610
      %1615 = vst [vmem:[#allocation2 + $0x18] sm:$0xff] %v1611
      %1616 = vst [vmem:[#allocation2 + $0x20] sm:$0xff] %v1612
      %1617 = vst [vmem:[#allocation2 + $0x28] sm:$0xff] %v1613
      %s1618 = scalar_lea.vmem %s3, 384
      %v1619 = vld [vmem:[%s1618] sm:$0xf]
      %v1620 = vld [vmem:[%s1618 + $0x4] sm:$0xf]
      %v1621 = vld [vmem:[%s1618 + $0x8] sm:$0xf]
      %v1622 = vld [vmem:[%s1618 + $0xc] sm:$0xf]
      %v1623 = vld [vmem:[%s1618 + $0x10] sm:$0xf]
      %v1624 = vld [vmem:[%s1618 + $0x14] sm:$0xf]
      %v1625 = vld [vmem:[%s1618 + $0x18] sm:$0xf]
      %v1626 = vld [vmem:[%s1618 + $0x1c] sm:$0xf]
      %v1627 = vld [vmem:[%s1618 + $0x20] sm:$0xf]
      %v1628 = vld [vmem:[%s1618 + $0x24] sm:$0xf]
      %v1629 = vld [vmem:[%s1618 + $0x28] sm:$0xf]
      %v1630 = vld [vmem:[%s1618 + $0x2c] sm:$0xf]
      %v1631 = vld [vmem:[%s1618 + $0x30] sm:$0xf]
      %v1632 = vld [vmem:[%s1618 + $0x34] sm:$0xf]
      %v1633 = vld [vmem:[%s1618 + $0x38] sm:$0xf]
      %v1634 = vld [vmem:[%s1618 + $0x3c] sm:$0xf]
      %v1635 = vld [vmem:[%s1618 + $0x40] sm:$0xf]
      %v1636 = vld [vmem:[%s1618 + $0x44] sm:$0xf]
      %v1637 = vld [vmem:[%s1618 + $0x48] sm:$0xf]
      %v1638 = vld [vmem:[%s1618 + $0x4c] sm:$0xf]
      %v1639 = vld [vmem:[%s1618 + $0x50] sm:$0xf]
      %v1640 = vld [vmem:[%s1618 + $0x54] sm:$0xf]
      %v1641 = vld [vmem:[%s1618 + $0x58] sm:$0xf]
      %v1642 = vld [vmem:[%s1618 + $0x5c] sm:$0xf]
      %v1643 = vld [vmem:[%s1618 + $0x60] sm:$0xf]
      %v1644 = vld [vmem:[%s1618 + $0x64] sm:$0xf]
      %v1645 = vld [vmem:[%s1618 + $0x68] sm:$0xf]
      %v1646 = vld [vmem:[%s1618 + $0x6c] sm:$0xf]
      %v1647 = vld [vmem:[%s1618 + $0x70] sm:$0xf]
      %v1648 = vld [vmem:[%s1618 + $0x74] sm:$0xf]
      %v1649 = vld [vmem:[%s1618 + $0x78] sm:$0xf]
      %v1650 = vld [vmem:[%s1618 + $0x7c] sm:$0xf]
      %v1651 = vld [vmem:[%s1618 + $0x80] sm:$0xf]
      %v1652 = vld [vmem:[%s1618 + $0x84] sm:$0xf]
      %v1653 = vld [vmem:[%s1618 + $0x88] sm:$0xf]
      %v1654 = vld [vmem:[%s1618 + $0x8c] sm:$0xf]
      %v1655 = vld [vmem:[%s1618 + $0x90] sm:$0xf]
      %v1656 = vld [vmem:[%s1618 + $0x94] sm:$0xf]
      %v1657 = vld [vmem:[%s1618 + $0x98] sm:$0xf]
      %v1658 = vld [vmem:[%s1618 + $0x9c] sm:$0xf]
      %v1659 = vld [vmem:[%s1618 + $0xa0] sm:$0xf]
      %v1660 = vld [vmem:[%s1618 + $0xa4] sm:$0xf]
      %v1661 = vld [vmem:[%s1618 + $0xa8] sm:$0xf]
      %v1662 = vld [vmem:[%s1618 + $0xac] sm:$0xf]
      %v1663 = vld [vmem:[%s1618 + $0xb0] sm:$0xf]
      %v1664 = vld [vmem:[%s1618 + $0xb4] sm:$0xf]
      %v1665 = vld [vmem:[%s1618 + $0xb8] sm:$0xf]
      %v1666 = vld [vmem:[%s1618 + $0xbc] sm:$0xf]
      %v1667 = vld [vmem:[#allocation2 + $0xf] sm:$0xff]
      %v1668 = vld [vmem:[#allocation2 + $0x17] sm:$0xff]
      %v1669 = vld [vmem:[#allocation2 + $0x1f] sm:$0xff]
      %v1670 = vld [vmem:[#allocation2 + $0x27] sm:$0xff]
      %v1671 = vld [vmem:[#allocation2 + $0x10] sm:$0xff]
      %v1672 = vld [vmem:[#allocation2 + $0x18] sm:$0xff]
      %v1673 = vld [vmem:[#allocation2 + $0x20] sm:$0xff]
      %v1674 = vld [vmem:[#allocation2 + $0x28] sm:$0xff]
      %v1675 = vld [vmem:[#allocation2 + $0x11] sm:$0xff]
      %v1676 = vld [vmem:[#allocation2 + $0x19] sm:$0xff]
      %v1677 = vld [vmem:[#allocation2 + $0x21] sm:$0xff]
      %v1678 = vld [vmem:[#allocation2 + $0x29] sm:$0xff]
      %v1679 = vpack.c.bf16 %v1668, %v1667
      %v1680 = vpack.c.bf16 %v1672, %v1671
      %v1681 = vpack.c.bf16 %v1676, %v1675
      %v1682 = vpack.c.bf16 %v1670, %v1669
      %v1683 = vpack.c.bf16 %v1674, %v1673
      %v1684 = vpack.c.bf16 %v1678, %v1677
      %s1685 = scalar_lea.vmem %s4, 2
      %v1686 = vld [vmem:[%s1685] sm:$0x1]
      %v1688 = vlaneseq
      %v1689 = vshrl.u32 %v1688, 7
      %v1690 = vsub.s32 0, %v1689
      %v1691 = vrot.slane %v1686, %v1690
      %v1741 = vunpack.c.l.b16 %v1619
      %v1742 = vunpack.c.l.b16 %v1620
      %v1743 = vunpack.c.l.b16 %v1621
      %v1744 = vunpack.c.l.b16 %v1622
      %v1745 = vunpack.c.l.b16 %v1623
      %v1746 = vunpack.c.l.b16 %v1624
      %v1747 = vunpack.c.l.b16 %v1625
      %v1748 = vunpack.c.l.b16 %v1626
      %v1749 = vunpack.c.l.b16 %v1627
      %v1750 = vunpack.c.l.b16 %v1628
      %v1751 = vunpack.c.l.b16 %v1629
      %v1752 = vunpack.c.l.b16 %v1630
      %v1753 = vunpack.c.l.b16 %v1631
      %v1754 = vunpack.c.l.b16 %v1632
      %v1755 = vunpack.c.l.b16 %v1633
      %v1756 = vunpack.c.l.b16 %v1634
      %v1757 = vunpack.c.l.b16 %v1635
      %v1758 = vunpack.c.l.b16 %v1636
      %v1759 = vunpack.c.l.b16 %v1637
      %v1760 = vunpack.c.l.b16 %v1638
      %v1761 = vunpack.c.l.b16 %v1639
      %v1762 = vunpack.c.l.b16 %v1640
      %v1763 = vunpack.c.l.b16 %v1641
      %v1764 = vunpack.c.l.b16 %v1642
      %v1765 = vunpack.c.l.b16 %v1643
      %v1766 = vunpack.c.l.b16 %v1644
      %v1767 = vunpack.c.l.b16 %v1645
      %v1768 = vunpack.c.l.b16 %v1646
      %v1769 = vunpack.c.l.b16 %v1647
      %v1770 = vunpack.c.l.b16 %v1648
      %v1771 = vunpack.c.l.b16 %v1649
      %v1772 = vunpack.c.l.b16 %v1650
      %v1773 = vunpack.c.l.b16 %v1651
      %v1774 = vunpack.c.l.b16 %v1652
      %v1775 = vunpack.c.l.b16 %v1653
      %v1776 = vunpack.c.l.b16 %v1654
      %v1777 = vunpack.c.l.b16 %v1655
      %v1778 = vunpack.c.l.b16 %v1656
      %v1779 = vunpack.c.l.b16 %v1657
      %v1780 = vunpack.c.l.b16 %v1658
      %v1781 = vunpack.c.l.b16 %v1659
      %v1782 = vunpack.c.l.b16 %v1660
      %v1783 = vunpack.c.l.b16 %v1661
      %v1784 = vunpack.c.l.b16 %v1662
      %v1785 = vunpack.c.l.b16 %v1663
      %v1786 = vunpack.c.l.b16 %v1664
      %v1787 = vunpack.c.l.b16 %v1665
      %v1788 = vunpack.c.l.b16 %v1666
      %v1789 = vpack.c.b16 %v1742, %v1741
      %v1790 = vpack.c.b16 %v1744, %v1743
      %v1791 = vpack.c.b16 %v1746, %v1745
      %v1792 = vpack.c.b16 %v1748, %v1747
      %v1793 = vpack.c.b16 %v1750, %v1749
      %v1794 = vpack.c.b16 %v1752, %v1751
      %v1795 = vpack.c.b16 %v1754, %v1753
      %v1796 = vpack.c.b16 %v1756, %v1755
      %v1797 = vpack.c.b16 %v1758, %v1757
      %v1798 = vpack.c.b16 %v1760, %v1759
      %v1799 = vpack.c.b16 %v1762, %v1761
      %v1800 = vpack.c.b16 %v1764, %v1763
      %v1801 = vpack.c.b16 %v1766, %v1765
      %v1802 = vpack.c.b16 %v1768, %v1767
      %v1803 = vpack.c.b16 %v1770, %v1769
      %v1804 = vpack.c.b16 %v1772, %v1771
      %v1805 = vpack.c.b16 %v1774, %v1773
      %v1806 = vpack.c.b16 %v1776, %v1775
      %v1807 = vpack.c.b16 %v1778, %v1777
      %v1808 = vpack.c.b16 %v1780, %v1779
      %v1809 = vpack.c.b16 %v1782, %v1781
      %v1810 = vpack.c.b16 %v1784, %v1783
      %v1811 = vpack.c.b16 %v1786, %v1785
      %v1812 = vpack.c.b16 %v1788, %v1787
      %1837 = vmatprep.subr.bf16.mxu0 0
      %1838 = vmatpush1.bf16.msra.mxu0 %v1789
      %1839 = vmatprep.subr.bf16.mxu0 0
      %1840 = vmatpush1.bf16.msra.mxu0 %v1790
      %1841 = vmatprep.subr.bf16.mxu0 0
      %1842 = vmatpush1.bf16.msra.mxu0 %v1791
      %1843 = vmatprep.subr.bf16.mxu0 0
      %1844 = vmatpush1.bf16.msra.mxu0 %v1792
      %1845 = vmatprep.subr.bf16.mxu0 0
      %1846 = vmatpush1.bf16.msra.mxu0 %v1793
      %1847 = vmatprep.subr.bf16.mxu0 0
      %1848 = vmatpush1.bf16.msra.mxu0 %v1794
      %1849 = vmatprep.subr.bf16.mxu0 0
      %1850 = vmatpush1.bf16.msra.mxu0 %v1795
      %1851 = vmatprep.subr.bf16.mxu0 0
      %1852 = vmatpush1.bf16.msra.mxu0 %v1796
      %1853 = vmatprep.subr.bf16.mxu0 0
      %1854 = vmatpush1.bf16.msra.mxu0 %v1797
      %1855 = vmatprep.subr.bf16.mxu0 0
      %1856 = vmatpush1.bf16.msra.mxu0 %v1798
      %1857 = vmatprep.subr.bf16.mxu0 0
      %1858 = vmatpush1.bf16.msra.mxu0 %v1799
      %1859 = vmatprep.subr.bf16.mxu0 0
      %1860 = vmatpush1.bf16.msra.mxu0 %v1800
      %1861 = vmatprep.subr.bf16.mxu0 0
      %1862 = vmatpush1.bf16.msra.mxu0 %v1801
      %1863 = vmatprep.subr.bf16.mxu0 0
      %1864 = vmatpush1.bf16.msra.mxu0 %v1802
      %1865 = vmatprep.subr.bf16.mxu0 0
      %1866 = vmatpush1.bf16.msra.mxu0 %v1803
      %1867 = vmatprep.subr.bf16.mxu0 0
      %1868 = vmatpush1.bf16.msra.mxu0 %v1804
      %1869 = vmatprep.mubr.bf16.mxu0 %v1680
      %1870 = vmatmul.mubr.bf16.gmra.mrb[0].mxu0 %v1679
      %v1871 = vpop.f32.mrb[0].mxu0
      %v1872 = vadd.f32 %v1691, %v1871
      %v1873 = vpop.f32.mrb[0].mxu0
      %v1874 = vpop.f32.mrb[0].mxu0
      %v1875 = vadd.f32 %v1691, %v1874
      %v1876 = vpop.f32.mrb[0].mxu0
      %1877 = vmatprep.mubr.bf16.mxu0 %v1683
      %1878 = vmatmul.mubr.bf16.gmra.mrb[0].mxu0 %v1682
      %v1879 = vpop.f32.mrb[0].mxu0
      %v1880 = vadd.f32 %v1691, %v1879
      %v1881 = vpop.f32.mrb[0].mxu0
      %v1882 = vpop.f32.mrb[0].mxu0
      %v1883 = vadd.f32 %v1691, %v1882
      %v1884 = vpop.f32.mrb[0].mxu0
      %1885 = vdwg.mxu0
      %1886 = vmatprep.subr.bf16.mxu0 0
      %1887 = vmatpush1.bf16.msra.mxu0 %v1805
      %1888 = vmatprep.subr.bf16.mxu0 0
      %1889 = vmatpush1.bf16.msra.mxu0 %v1806
      %1890 = vmatprep.subr.bf16.mxu0 0
      %1891 = vmatpush1.bf16.msra.mxu0 %v1807
      %1892 = vmatprep.subr.bf16.mxu0 0
      %1893 = vmatpush1.bf16.msra.mxu0 %v1808
      %1894 = vmatprep.subr.bf16.mxu0 0
      %1895 = vmatpush1.bf16.msra.mxu0 %v1809
      %1896 = vmatprep.subr.bf16.mxu0 0
      %1897 = vmatpush1.bf16.msra.mxu0 %v1810
      %1898 = vmatprep.subr.bf16.mxu0 0
      %1899 = vmatpush1.bf16.msra.mxu0 %v1811
      %1900 = vmatprep.subr.bf16.mxu0 0
      %1901 = vmatpush1.bf16.msra.mxu0 %v1812
      %1902 = vmatprep.subr.bf16.mxu0 0
      %1903 = vmatpush1.bf16.msra.mxu0 0
      %1904 = vmatprep.subr.bf16.mxu0 0
      %1905 = vmatpush1.bf16.msra.mxu0 0
      %1906 = vmatprep.subr.bf16.mxu0 0
      %1907 = vmatpush1.bf16.msra.mxu0 0
      %1908 = vmatprep.subr.bf16.mxu0 0
      %1909 = vmatpush1.bf16.msra.mxu0 0
      %1910 = vmatprep.subr.bf16.mxu0 0
      %1911 = vmatpush1.bf16.msra.mxu0 0
      %1912 = vmatprep.subr.bf16.mxu0 0
      %1913 = vmatpush1.bf16.msra.mxu0 0
      %1914 = vmatprep.subr.bf16.mxu0 0
      %1915 = vmatpush1.bf16.msra.mxu0 0
      %1916 = vmatprep.subr.bf16.mxu0 0
      %1917 = vmatpush1.bf16.msra.mxu0 0
      %1918 = vmatprep.mubr.bf16.mxu0 0
      %1919 = vmatmul.mubr.bf16.gmra.mrb[0].mxu0 %v1681
      %v1920 = vpop.f32.mrb[0].mxu0
      %v1921 = vadd.f32 %v1872, %v1920
      %v1922 = vpop.f32.mrb[0].mxu0
      %v1923 = vpop.f32.mrb[0].mxu0
      %v1924 = vadd.f32 %v1875, %v1923
      %v1925 = vpop.f32.mrb[0].mxu0
      %1926 = vmatprep.mubr.bf16.mxu0 0
      %1927 = vmatmul.mubr.bf16.gmra.mrb[0].mxu0 %v1684
      %v1928 = vpop.f32.mrb[0].mxu0
      %v1929 = vadd.f32 %v1880, %v1928
      %v1930 = vpop.f32.mrb[0].mxu0
      %v1931 = vpop.f32.mrb[0].mxu0
      %v1932 = vadd.f32 %v1883, %v1931
      %v1933 = vpop.f32.mrb[0].mxu0
      %1934 = vdwg.mxu0
      %v1935 = vmax.f32 %v1921, 0.0
      %v1936 = vmax.f32 %v1924, 0.0
      %v1937 = vmax.f32 %v1929, 0.0
      %v1938 = vmax.f32 %v1932, 0.0
      %s1939 = scalar_lea.vmem %s5, 128
      %v1940 = vld [vmem:[%s1939] sm:$0xf]
      %v1941 = vld [vmem:[%s1939 + $0x4] sm:$0xf]
      %v1942 = vld [vmem:[%s1939 + $0x8] sm:$0xf]
      %v1943 = vld [vmem:[%s1939 + $0xc] sm:$0xf]
      %v1944 = vld [vmem:[%s1939 + $0x10] sm:$0xf]
      %v1945 = vld [vmem:[%s1939 + $0x14] sm:$0xf]
      %v1946 = vld [vmem:[%s1939 + $0x18] sm:$0xf]
      %v1947 = vld [vmem:[%s1939 + $0x1c] sm:$0xf]
      %v1948 = vld [vmem:[%s1939 + $0x20] sm:$0xf]
      %v1949 = vld [vmem:[%s1939 + $0x24] sm:$0xf]
      %v1950 = vld [vmem:[%s1939 + $0x28] sm:$0xf]
      %v1951 = vld [vmem:[%s1939 + $0x2c] sm:$0xf]
      %v1952 = vld [vmem:[%s1939 + $0x30] sm:$0xf]
      %v1953 = vld [vmem:[%s1939 + $0x34] sm:$0xf]
      %v1954 = vld [vmem:[%s1939 + $0x38] sm:$0xf]
      %v1955 = vld [vmem:[%s1939 + $0x3c] sm:$0xf]
      %v1956 = vpack.c.bf16 %v1936, %v1935
      %v1957 = vpack.c.bf16 %v1938, %v1937
      %s1958 = scalar_lea.vmem %s6, 2
      %v1959 = vld [vmem:[%s1958] sm:$0x1]
      %v1961 = vlaneseq
      %v1962 = vshrl.u32 %v1961, 7
      %v1963 = vsub.s32 0, %v1962
      %v1964 = vrot.slane %v1959, %v1963
      %v1982 = vunpack.c.l.b16 %v1940
      %v1983 = vunpack.c.l.b16 %v1941
      %v1984 = vunpack.c.l.b16 %v1942
      %v1985 = vunpack.c.l.b16 %v1943
      %v1986 = vunpack.c.l.b16 %v1944
      %v1987 = vunpack.c.l.b16 %v1945
      %v1988 = vunpack.c.l.b16 %v1946
      %v1989 = vunpack.c.l.b16 %v1947
      %v1990 = vunpack.c.l.b16 %v1948
      %v1991 = vunpack.c.l.b16 %v1949
      %v1992 = vunpack.c.l.b16 %v1950
      %v1993 = vunpack.c.l.b16 %v1951
      %v1994 = vunpack.c.l.b16 %v1952
      %v1995 = vunpack.c.l.b16 %v1953
      %v1996 = vunpack.c.l.b16 %v1954
      %v1997 = vunpack.c.l.b16 %v1955
      %v1998 = vpack.c.b16 %v1983, %v1982
      %v1999 = vpack.c.b16 %v1985, %v1984
      %v2000 = vpack.c.b16 %v1987, %v1986
      %v2001 = vpack.c.b16 %v1989, %v1988
      %v2002 = vpack.c.b16 %v1991, %v1990
      %v2003 = vpack.c.b16 %v1993, %v1992
      %v2004 = vpack.c.b16 %v1995, %v1994
      %v2005 = vpack.c.b16 %v1997, %v1996
      %2014 = vmatprep.subr.bf16.mxu0 0
      %2015 = vmatpush1.bf16.msra.mxu0 %v1998
      %2016 = vmatprep.subr.bf16.mxu0 0
      %2017 = vmatpush1.bf16.msra.mxu0 %v1999
      %2018 = vmatprep.subr.bf16.mxu0 0
      %2019 = vmatpush1.bf16.msra.mxu0 %v2000
      %2020 = vmatprep.subr.bf16.mxu0 0
      %2021 = vmatpush1.bf16.msra.mxu0 %v2001
      %2022 = vmatprep.subr.bf16.mxu0 0
      %2023 = vmatpush1.bf16.msra.mxu0 %v2002
      %2024 = vmatprep.subr.bf16.mxu0 0
      %2025 = vmatpush1.bf16.msra.mxu0 %v2003
      %2026 = vmatprep.subr.bf16.mxu0 0
      %2027 = vmatpush1.bf16.msra.mxu0 %v2004
      %2028 = vmatprep.subr.bf16.mxu0 0
      %2029 = vmatpush1.bf16.msra.mxu0 %v2005
      %2030 = vmatprep.subr.bf16.mxu0 0
      %2031 = vmatpush1.bf16.msra.mxu0 0
      %2032 = vmatprep.subr.bf16.mxu0 0
      %2033 = vmatpush1.bf16.msra.mxu0 0
      %2034 = vmatprep.subr.bf16.mxu0 0
      %2035 = vmatpush1.bf16.msra.mxu0 0
      %2036 = vmatprep.subr.bf16.mxu0 0
      %2037 = vmatpush1.bf16.msra.mxu0 0
      %2038 = vmatprep.subr.bf16.mxu0 0
      %2039 = vmatpush1.bf16.msra.mxu0 0
      %2040 = vmatprep.subr.bf16.mxu0 0
      %2041 = vmatpush1.bf16.msra.mxu0 0
      %2042 = vmatprep.subr.bf16.mxu0 0
      %2043 = vmatpush1.bf16.msra.mxu0 0
      %2044 = vmatprep.subr.bf16.mxu0 0
      %2045 = vmatpush1.bf16.msra.mxu0 0
      %2046 = vmatprep.mubr.bf16.mxu0 0
      %2047 = vmatmul.mubr.bf16.gmra.mrb[0].mxu0 %v1956
      %v2048 = vpop.f32.mrb[0].mxu0
      %v2049 = vadd.f32 %v1964, %v2048
      %v2050 = vpop.f32.mrb[0].mxu0
      %v2051 = vpop.f32.mrb[0].mxu0
      %v2052 = vadd.f32 %v1964, %v2051
      %v2053 = vpop.f32.mrb[0].mxu0
      %2054 = vmatprep.mubr.bf16.mxu0 0
      %2055 = vmatmul.mubr.bf16.gmra.mrb[0].mxu0 %v1957
      %v2056 = vpop.f32.mrb[0].mxu0
      %v2057 = vadd.f32 %v1964, %v2056
      %v2058 = vpop.f32.mrb[0].mxu0
      %v2059 = vpop.f32.mrb[0].mxu0
      %v2060 = vadd.f32 %v1964, %v2059
      %v2061 = vpop.f32.mrb[0].mxu0
      %2062 = vdwg.mxu0
      %v2063 = vadd.f32 %v1606, %v2049
      %v2064 = vadd.f32 %v1607, %v2052
      %v2065 = vadd.f32 %v1608, %v2057
      %v2066 = vadd.f32 %v1609, %v2060
      %vm2071 = vcmask 1040384
      %v2072 = vrot.slane %v2063, 7
      %v2073 = vrot.slane %v2064, 7
      %v2074 = vsel %vm2071, %v2072, %v2073
      %v2075 = vrot.slane %v2065, 7
      %v2076 = vsel %vm2071, %v2073, %v2075
      %v2077 = vrot.slane %v2066, 7
      %v2078 = vsel %vm2071, %v2075, %v2077
      %v2084 = vsel %vm2071, 0.0, %v2072
      %v2085 = vsel %vm2071, %v2077, 0.0
      %2086 = vst [vmem:[%s278] sm:$0xff] %v2084
      %2087 = vst [vmem:[%s278 + $0x8] sm:$0xff] %v2074
      %2088 = vst [vmem:[%s278 + $0x10] sm:$0xff] %v2076
      %2089 = vst [vmem:[%s278 + $0x18] sm:$0xff] %v2078
      %2090 = vst [vmem:[%s278 + $0x20] sm:$0x3] %v2085
      %p2091 = scmp.lt.s32.totalorder %s18, 1
      %s2092 = scalar_select %p2091, %s18, 1
      %s2093 = smul.addr %s2092, 5
      %s2094 = smul.addr %s2093, 8
      %s2095 = scalar_lea.vmem %s7, %s2094
      // Predicated region
      $region49: #{encoder_apply_pallas.4} parent=47 // pred_check
        %p2096 = pneg %p188
      $region50: #{encoder_apply_pallas.4} parent=47 // pred_check_branch
        %2098 = sbr.rel (%p2096) target = $region52
      $region51: #{encoder_apply_pallas.4} parent=47 // pred_region
        _
      $region52: #{encoder_apply_pallas.4} parent=47 // pred_fallthru
        _
    $region48: #{encoder_apply_pallas.4} parent=5 // pred_fallthru
      _
    %p2099 = scmp.le.s32.totalorder 2, %s13
    // Predicated region
    $region53: #{encoder_apply_pallas.4} parent=5 // pred_check
      %p2100 = pneg %p2099
    $region54: #{encoder_apply_pallas.4} parent=5 // pred_check_branch
      %2102 = sbr.rel (%p2100) target = $region56
    $region55: #{encoder_apply_pallas.4} parent=5 // pred_region
      %s2103 = ssub.s32 %s13, 2
      // Predicated region
      $region57: #{encoder_apply_pallas.4} parent=55 // pred_check
        %p2104 = pneg %p194
      $region58: #{encoder_apply_pallas.4} parent=55 // pred_check_branch
        %2106 = sbr.rel (%p2104) target = $region60
      $region59: #{encoder_apply_pallas.4} parent=55 // pred_region
        %p2107 = scmp.lt.s32.totalorder %s19, 1
        %s2108 = scalar_select %p2107, %s19, 1
        %s2109 = smul.addr %s2108, 5
        %s2110 = smul.addr %s2109, 8
        %s2111 = scalar_lea.vmem %s7, %s2110
      $region60: #{encoder_apply_pallas.4} parent=55 // pred_fallthru
        _
    $region56: #{encoder_apply_pallas.4} parent=5 // pred_fallthru
      _
  $region6: #{encoder_apply_pallas.4} parent=0 // loop_footer
    %s17 = sadd.s32 1, %s13
  $region7: #{encoder_apply_pallas.4} parent=0 // loop_footer_branch
    %12 = sbr.rel target = $region3
  $region8: #{encoder_apply_pallas.4} parent=0 // loop_exit
    _

// kernel: encoder_apply_pallas.5
$region0: #{encoder_apply_pallas.5}
  #allocation0 [shape = 'u32[]', space=smem, size = 0x4, offset = 0x4, fixed_abs, tag = 'smem constant byte address 0x4 - core index']
  #allocation1 [shape = 'u32[144,128]{1,0:T(1,128)}', space=vmem, size = 0x12000, scoped, tag = 'internal scratch']
  #allocation2 [shape = 'f32[48,128]{1,0:T(8,128)}', space=vmem, size = 0x6000, scoped, tag = 'scratch operand']
  %s0 = inlined_call_operand.vmem [shape: f32[2,17,256], index: 0, kind: input, shape index: {}]
  %s1 = inlined_call_operand.vmem [shape: bf16[512,128], index: 1, kind: input, shape index: {}]
  %s2 = inlined_call_operand.vmem [shape: f32[1,128], index: 2, kind: input, shape index: {}]
  %s3 = inlined_call_operand.vmem [shape: bf16[3,384,128], index: 3, kind: input, shape index: {}]
  %s4 = inlined_call_operand.vmem [shape: f32[3,1,128], index: 4, kind: input, shape index: {}]
  %s5 = inlined_call_operand.vmem [shape: bf16[3,128,128], index: 5, kind: input, shape index: {}]
  %s6 = inlined_call_operand.vmem [shape: f32[3,1,128], index: 6, kind: input, shape index: {}]
  %s7 = inlined_call_operand.vmem [shape: bf16[384,128], index: 7, kind: input, shape index: {}]
  %s8 = inlined_call_operand.vmem [shape: f32[1,128], index: 8, kind: input, shape index: {}]
  %s9 = inlined_call_operand.hbm [shape: f32[2,16,128], index: 9, kind: output, shape index: {}]
  %s10 = sld [smem:[#allocation0]]
  $region69: #{encoder_apply_pallas.5} parent=0
    _
  %s12 = ssub.s32 1, %s10
  %s13 = scalar_select 0, %s12, %s10
  $region1: #{encoder_apply_pallas.5} parent=0
    #allocation3 [shape = 'u8[16384]{0}', space=vmem, size = 0x4000, scoped, tag = 'output window, operand 0']
    #allocation4 [shape = 's32[2]{0}', space=sflag, size = 0x8, scoped, tag = 'scoped memory for encoder_apply_pallas.5']
    %14 = vsyncpa [#allocation4], 0
    %s15 = scalar_lea.sflag [#allocation4], 1
    %16 = vsyncpa %s15, 0
    loop: start=0, step=1, limit=4
    $region2: #{encoder_apply_pallas.5} parent=1 // loop_pre_header
      _
    $region3: #{encoder_apply_pallas.5} parent=1 // loop_header
      %s18 = sphi 0, %s22
      %p19 = scmp.ge.s32.totalorder %s18, 4
      %s28 = sphi 0, %s30
      %s31 = sphi 0, %s28
      %s32 = sphi 0, %s31
      %s48 = sphi 0, %s32
      %s52 = sphi 0, %s52
      %s54 = sphi 0, %s52
      %s55 = sphi 0, %s54
      %s69 = sphi 0, %s55
      %s73 = sphi 0, %s73
      %s75 = sphi 0, %s73
      %s76 = sphi 0, %s75
      %s90 = sphi 0, %s76
      %s94 = sphi 0, %s94
      %s96 = sphi 0, %s94
      %s97 = sphi 0, %s96
      %s111 = sphi 0, %s97
      %s115 = sphi 0, %s115
      %s117 = sphi 0, %s115
      %s118 = sphi 0, %s117
      %s132 = sphi 0, %s118
      %s136 = sphi 0, %s136
      %s138 = sphi 0, %s136
      %s139 = sphi 0, %s138
      %s153 = sphi 0, %s139
      %s157 = sphi 0, %s157
      %s159 = sphi 0, %s157
      %s160 = sphi 0, %s159
      %s174 = sphi 0, %s160
      %s178 = sphi 0, %s178
      %s180 = sphi 0, %s178
      %s181 = sphi 0, %s180
      %s195 = sphi 0, %s181
      %s199 = sphi 0, %s199
      %s201 = sphi 0, %s199
      %s202 = sphi 0, %s201
      %s216 = sphi 0, %s202
      %s222 = sphi 0, %s224
      %s225 = sphi 0, %s222
      %s226 = sphi 0, %s225
      %s242 = sphi 0, %s226
    $region4: #{encoder_apply_pallas.5} parent=1 // loop_header_branch
      %21 = sbr.rel (%p19) target = $region8
    $region5: #{encoder_apply_pallas.5} parent=1 // loop_body
      %s23 = ssub.s32 %s18, 1
      %s24 = ssub.s32 %s18, 2
      %s25 = sadd.s32 %s18, 1
      %s26 = ssub.s32 %s18, %s25
      %p27 = scmp.eq.s32.totalorder %s26, 0
      %s29 = sadd.s32 %s28, 1
      %s30 = scalar_select %p27, %s28, %s29
      %p33 = pneg %p27
      %p34 = scmp.eq.s32.totalorder %s18, 1
      %p35 = por %p33, %p34
      %p36 = scmp.ne.s32.totalorder %s28, %s31
      %p37 = scmp.eq.s32.totalorder %s18, 0
      %p38 = por %p36, %p37
      %p39 = scmp.ne.s32.totalorder %s28, %s31
      %p40 = scmp.eq.s32.totalorder %s23, 1
      %p41 = por %p39, %p40
      %p42 = scmp.ne.s32.totalorder %s31, %s32
      %p43 = scmp.eq.s32.totalorder %s23, 0
      %p44 = por %p42, %p43
      %p45 = scmp.ne.s32.totalorder %s31, %s32
      %p46 = scmp.eq.s32.totalorder %s24, 1
      %p47 = por %p45, %p46
      %p49 = scmp.ne.s32.totalorder %s32, %s48
      %p50 = scmp.eq.s32.totalorder %s24, 0
      %p51 = por %p49, %p50
      %s53 = sadd.s32 %s52, 1
      %p56 = scmp.eq.s32.totalorder %s18, 1
      %p57 = scmp.ne.s32.totalorder %s52, %s54
      %p58 = scmp.eq.s32.totalorder %s18, 0
      %p59 = por %p57, %p58
      %p60 = scmp.ne.s32.totalorder %s52, %s54
      %p61 = scmp.eq.s32.totalorder %s23, 1
      %p62 = por %p60, %p61
      %p63 = scmp.ne.s32.totalorder %s54, %s55
      %p64 = scmp.eq.s32.totalorder %s23, 0
      %p65 = por %p63, %p64
      %p66 = scmp.ne.s32.totalorder %s54, %s55
      %p67 = scmp.eq.s32.totalorder %s24, 1
      %p68 = por %p66, %p67
      %p70 = scmp.ne.s32.totalorder %s55, %s69
      %p71 = scmp.eq.s32.totalorder %s24, 0
      %p72 = por %p70, %p71
      %s74 = sadd.s32 %s73, 1
      %p77 = scmp.eq.s32.totalorder %s18, 1
      %p78 = scmp.ne.s32.totalorder %s73, %s75
      %p79 = scmp.eq.s32.totalorder %s18, 0
      %p80 = por %p78, %p79
      %p81 = scmp.ne.s32.totalorder %s73, %s75
      %p82 = scmp.eq.s32.totalorder %s23, 1
      %p83 = por %p81, %p82
      %p84 = scmp.ne.s32.totalorder %s75, %s76
      %p85 = scmp.eq.s32.totalorder %s23, 0
      %p86 = por %p84, %p85
      %p87 = scmp.ne.s32.totalorder %s75, %s76
      %p88 = scmp.eq.s32.totalorder %s24, 1
      %p89 = por %p87, %p88
      %p91 = scmp.ne.s32.totalorder %s76, %s90
      %p92 = scmp.eq.s32.totalorder %s24, 0
      %p93 = por %p91, %p92
      %s95 = sadd.s32 %s94, 1
      %p98 = scmp.eq.s32.totalorder %s18, 1
      %p99 = scmp.ne.s32.totalorder %s94, %s96
      %p100 = scmp.eq.s32.totalorder %s18, 0
      %p101 = por %p99, %p100
      %p102 = scmp.ne.s32.totalorder %s94, %s96
      %p103 = scmp.eq.s32.totalorder %s23, 1
      %p104 = por %p102, %p103
      %p105 = scmp.ne.s32.totalorder %s96, %s97
      %p106 = scmp.eq.s32.totalorder %s23, 0
      %p107 = por %p105, %p106
      %p108 = scmp.ne.s32.totalorder %s96, %s97
      %p109 = scmp.eq.s32.totalorder %s24, 1
      %p110 = por %p108, %p109
      %p112 = scmp.ne.s32.totalorder %s97, %s111
      %p113 = scmp.eq.s32.totalorder %s24, 0
      %p114 = por %p112, %p113
      %s116 = sadd.s32 %s115, 1
      %p119 = scmp.eq.s32.totalorder %s18, 1
      %p120 = scmp.ne.s32.totalorder %s115, %s117
      %p121 = scmp.eq.s32.totalorder %s18, 0
      %p122 = por %p120, %p121
      %p123 = scmp.ne.s32.totalorder %s115, %s117
      %p124 = scmp.eq.s32.totalorder %s23, 1
      %p125 = por %p123, %p124
      %p126 = scmp.ne.s32.totalorder %s117, %s118
      %p127 = scmp.eq.s32.totalorder %s23, 0
      %p128 = por %p126, %p127
      %p129 = scmp.ne.s32.totalorder %s117, %s118
      %p130 = scmp.eq.s32.totalorder %s24, 1
      %p131 = por %p129, %p130
      %p133 = scmp.ne.s32.totalorder %s118, %s132
      %p134 = scmp.eq.s32.totalorder %s24, 0
      %p135 = por %p133, %p134
      %s137 = sadd.s32 %s136, 1
      %p140 = scmp.eq.s32.totalorder %s18, 1
      %p141 = scmp.ne.s32.totalorder %s136, %s138
      %p142 = scmp.eq.s32.totalorder %s18, 0
      %p143 = por %p141, %p142
      %p144 = scmp.ne.s32.totalorder %s136, %s138
      %p145 = scmp.eq.s32.totalorder %s23, 1
      %p146 = por %p144, %p145
      %p147 = scmp.ne.s32.totalorder %s138, %s139
      %p148 = scmp.eq.s32.totalorder %s23, 0
      %p149 = por %p147, %p148
      %p150 = scmp.ne.s32.totalorder %s138, %s139
      %p151 = scmp.eq.s32.totalorder %s24, 1
      %p152 = por %p150, %p151
      %p154 = scmp.ne.s32.totalorder %s139, %s153
      %p155 = scmp.eq.s32.totalorder %s24, 0
      %p156 = por %p154, %p155
      %s158 = sadd.s32 %s157, 1
      %p161 = scmp.eq.s32.totalorder %s18, 1
      %p162 = scmp.ne.s32.totalorder %s157, %s159
      %p163 = scmp.eq.s32.totalorder %s18, 0
      %p164 = por %p162, %p163
      %p165 = scmp.ne.s32.totalorder %s157, %s159
      %p166 = scmp.eq.s32.totalorder %s23, 1
      %p167 = por %p165, %p166
      %p168 = scmp.ne.s32.totalorder %s159, %s160
      %p169 = scmp.eq.s32.totalorder %s23, 0
      %p170 = por %p168, %p169
      %p171 = scmp.ne.s32.totalorder %s159, %s160
      %p172 = scmp.eq.s32.totalorder %s24, 1
      %p173 = por %p171, %p172
      %p175 = scmp.ne.s32.totalorder %s160, %s174
      %p176 = scmp.eq.s32.totalorder %s24, 0
      %p177 = por %p175, %p176
      %s179 = sadd.s32 %s178, 1
      %p182 = scmp.eq.s32.totalorder %s18, 1
      %p183 = scmp.ne.s32.totalorder %s178, %s180
      %p184 = scmp.eq.s32.totalorder %s18, 0
      %p185 = por %p183, %p184
      %p186 = scmp.ne.s32.totalorder %s178, %s180
      %p187 = scmp.eq.s32.totalorder %s23, 1
      %p188 = por %p186, %p187
      %p189 = scmp.ne.s32.totalorder %s180, %s181
      %p190 = scmp.eq.s32.totalorder %s23, 0
      %p191 = por %p189, %p190
      %p192 = scmp.ne.s32.totalorder %s180, %s181
      %p193 = scmp.eq.s32.totalorder %s24, 1
      %p194 = por %p192, %p193
      %p196 = scmp.ne.s32.totalorder %s181, %s195
      %p197 = scmp.eq.s32.totalorder %s24, 0
      %p198 = por %p196, %p197
      %s200 = sadd.s32 %s199, 1
      %p203 = scmp.eq.s32.totalorder %s18, 1
      %p204 = scmp.ne.s32.totalorder %s199, %s201
      %p205 = scmp.eq.s32.totalorder %s18, 0
      %p206 = por %p204, %p205
      %p207 = scmp.ne.s32.totalorder %s199, %s201
      %p208 = scmp.eq.s32.totalorder %s23, 1
      %p209 = por %p207, %p208
      %p210 = scmp.ne.s32.totalorder %s201, %s202
      %p211 = scmp.eq.s32.totalorder %s23, 0
      %p212 = por %p210, %p211
      %p213 = scmp.ne.s32.totalorder %s201, %s202
      %p214 = scmp.eq.s32.totalorder %s24, 1
      %p215 = por %p213, %p214
      %p217 = scmp.ne.s32.totalorder %s202, %s216
      %p218 = scmp.eq.s32.totalorder %s24, 0
      %p219 = por %p217, %p218
      %s220 = ssub.s32 %s18, %s25
      %p221 = scmp.eq.s32.totalorder %s220, 0
      %s223 = sadd.s32 %s222, 1
      %s224 = scalar_select %p221, %s222, %s223
      %p227 = pneg %p221
      %p228 = scmp.eq.s32.totalorder %s18, 1
      %p229 = por %p227, %p228
      %p230 = scmp.ne.s32.totalorder %s222, %s225
      %p231 = scmp.eq.s32.totalorder %s18, 0
      %p232 = por %p230, %p231
      %p233 = scmp.ne.s32.totalorder %s222, %s225
      %p234 = scmp.eq.s32.totalorder %s23, 1
      %p235 = por %p233, %p234
      %p236 = scmp.ne.s32.totalorder %s225, %s226
      %p237 = scmp.eq.s32.totalorder %s23, 0
      %p238 = por %p236, %p237
      %p239 = scmp.ne.s32.totalorder %s225, %s226
      %p240 = scmp.eq.s32.totalorder %s24, 1
      %p241 = por %p239, %p240
      %p243 = scmp.ne.s32.totalorder %s226, %s242
      %p244 = scmp.eq.s32.totalorder %s24, 0
      %p245 = por %p243, %p244
      %p246 = scmp.le.s32.totalorder 1, %s18
      %p247 = scmp.lt.s32.totalorder %s18, 3
      %p248 = pnand %p246, %p247
      %p249 = pneg %p248
      // Predicated region
      $region9: #{encoder_apply_pallas.5} parent=5 // pred_check
        _
      $region10: #{encoder_apply_pallas.5} parent=5 // pred_check_branch
        %251 = sbr.rel (%p248) target = $region12
      $region11: #{encoder_apply_pallas.5} parent=5 // pred_region
        %s252 = ssub.s32 %s18, 1
        // Predicated region
        $region13: #{encoder_apply_pallas.5} parent=11 // pred_check
          %p253 = pneg %p65
        $region14: #{encoder_apply_pallas.5} parent=11 // pred_check_branch
          %255 = sbr.rel (%p253) target = $region16
        $region15: #{encoder_apply_pallas.5} parent=11 // pred_region
          _
        $region16: #{encoder_apply_pallas.5} parent=11 // pred_fallthru
          _
        // Predicated region
        $region17: #{encoder_apply_pallas.5} parent=11 // pred_check
          %p256 = pneg %p86
        $region18: #{encoder_apply_pallas.5} parent=11 // pred_check_branch
          %258 = sbr.rel (%p256) target = $region20
        $region19: #{encoder_apply_pallas.5} parent=11 // pred_region
          _
        $region20: #{encoder_apply_pallas.5} parent=11 // pred_fallthru
          _
        // Predicated region
        $region21: #{encoder_apply_pallas.5} parent=11 // pred_check
          %p259 = pneg %p107
        $region22: #{encoder_apply_pallas.5} parent=11 // pred_check_branch
          %261 = sbr.rel (%p259) target = $region24
        $region23: #{encoder_apply_pallas.5} parent=11 // pred_region
          _
        $region24: #{encoder_apply_pallas.5} parent=11 // pred_fallthru
          _
        // Predicated region
        $region25: #{encoder_apply_pallas.5} parent=11 // pred_check
          %p262 = pneg %p128
        $region26: #{encoder_apply_pallas.5} parent=11 // pred_check_branch
          %264 = sbr.rel (%p262) target = $region28
        $region27: #{encoder_apply_pallas.5} parent=11 // pred_region
          _
        $region28: #{encoder_apply_pallas.5} parent=11 // pred_fallthru
          _
        // Predicated region
        $region29: #{encoder_apply_pallas.5} parent=11 // pred_check
          %p265 = pneg %p149
        $region30: #{encoder_apply_pallas.5} parent=11 // pred_check_branch
          %267 = sbr.rel (%p265) target = $region32
        $region31: #{encoder_apply_pallas.5} parent=11 // pred_region
          _
        $region32: #{encoder_apply_pallas.5} parent=11 // pred_fallthru
          _
        // Predicated region
        $region33: #{encoder_apply_pallas.5} parent=11 // pred_check
          %p268 = pneg %p170
        $region34: #{encoder_apply_pallas.5} parent=11 // pred_check_branch
          %270 = sbr.rel (%p268) target = $region36
        $region35: #{encoder_apply_pallas.5} parent=11 // pred_region
          _
        $region36: #{encoder_apply_pallas.5} parent=11 // pred_fallthru
          _
        // Predicated region
        $region37: #{encoder_apply_pallas.5} parent=11 // pred_check
          %p271 = pneg %p191
        $region38: #{encoder_apply_pallas.5} parent=11 // pred_check_branch
          %273 = sbr.rel (%p271) target = $region40
        $region39: #{encoder_apply_pallas.5} parent=11 // pred_region
          _
        $region40: #{encoder_apply_pallas.5} parent=11 // pred_fallthru
          _
        // Predicated region
        $region41: #{encoder_apply_pallas.5} parent=11 // pred_check
          %p274 = pneg %p212
        $region42: #{encoder_apply_pallas.5} parent=11 // pred_check_branch
          %276 = sbr.rel (%p274) target = $region44
        $region43: #{encoder_apply_pallas.5} parent=11 // pred_region
          _
        $region44: #{encoder_apply_pallas.5} parent=11 // pred_fallthru
          _
      $region12: #{encoder_apply_pallas.5} parent=5 // pred_fallthru
        _
      %p277 = scmp.lt.s32.totalorder %s18, 2
      // Predicated region
      $region45: #{encoder_apply_pallas.5} parent=5 // pred_check
        %p278 = pneg %p277
      $region46: #{encoder_apply_pallas.5} parent=5 // pred_check_branch
        %280 = sbr.rel (%p278) target = $region48
      $region47: #{encoder_apply_pallas.5} parent=5 // pred_region
        // Predicated region
        $region49: #{encoder_apply_pallas.5} parent=47 // pred_check
          %p281 = pneg %p38
        $region50: #{encoder_apply_pallas.5} parent=47 // pred_check_branch
          %283 = sbr.rel (%p281) target = $region52
        $region51: #{encoder_apply_pallas.5} parent=47 // pred_region
          %p284 = scmp.lt.s32.totalorder %s18, 1
          %s285 = scalar_select %p284, %s18, 1
          %s286 = smul.addr %s285, 6
          %s287 = smul.addr %s286, 8
          %s288 = scalar_lea.vmem %s0, %s287
        $region52: #{encoder_apply_pallas.5} parent=47 // pred_fallthru
          _
      $region48: #{encoder_apply_pallas.5} parent=5 // pred_fallthru
        _
      %p289 = scmp.le.s32.totalorder 1, %s18
      %p290 = scmp.lt.s32.totalorder %s18, 3
      %p291 = pnand %p289, %p290
      %p292 = pneg %p291
      // Predicated region
      $region53: #{encoder_apply_pallas.5} parent=5 // pred_check
        _
      $region54: #{encoder_apply_pallas.5} parent=5 // pred_check_branch
        %294 = sbr.rel (%p291) target = $region56
      $region55: #{encoder_apply_pallas.5} parent=5 // pred_region
        %s295 = ssub.s32 %s18, 1
        %p296 = scmp.lt.s32.totalorder %s23, 1
        %s297 = scalar_select %p296, %s23, 1
        %s298 = smul.addr %s297, 6
        %s299 = smul.addr %s298, 8
        %s300 = scalar_lea.vmem %s0, %s299
        %p301 = pneg %p44
        %p302 = pneg %p41
        %p303 = pneg %p65
        %p304 = pneg %p62
        %p305 = pneg %p86
        %p306 = pneg %p83
        %p307 = pneg %p107
        %p308 = pneg %p104
        %p309 = pneg %p128
        %p310 = pneg %p125
        %p311 = pneg %p149
        %p312 = pneg %p146
        %p313 = pneg %p170
        %p314 = pneg %p167
        %p315 = pneg %p191
        %p316 = pneg %p188
        %p317 = pneg %p212
        %p318 = pneg %p209
        %p319 = pneg %p238
        %p320 = pneg %p235
        %s321 = sand.u32 %s225, 1
        %s322 = scalar_lea.sflag [#allocation4], %s321
        %s323 = sand.u32 %s225, 1
        %s324 = smul.addr %s323, 16
        %s325 = scalar_lea.vmem [#allocation3], %s324
        %p326 = scmp.lt.s32.totalorder %s23, 1
        %s327 = scalar_select %p326, %s23, 1
        %s328 = smul.addr %s327, 6
        %s329 = smul.addr %s328, 8
        %s330 = scalar_lea.vmem %s0, %s329
        %v332 = vld [vmem:[%s330] sm:$0xff]
        %v333 = vld [vmem:[%s330 + $0x8] sm:$0xff]
        %v334 = vld [vmem:[%s330 + $0x10] sm:$0xff]
        %v335 = vld [vmem:[%s330 + $0x18] sm:$0xff]
        %v336 = vld [vmem:[%s330 + $0x20] sm:$0x1]
        %v337 = vld [vmem:[%s330 + $0x28] sm:$0x1]
        %v338 = vld [vmem:[%s1] sm:$0xf]
        %v339 = vld [vmem:[%s1 + $0x4] sm:$0xf]
        %v340 = vld [vmem:[%s1 + $0x8] sm:$0xf]
        %v341 = vld [vmem:[%s1 + $0xc] sm:$0xf]
        %v342 = vld [vmem:[%s1 + $0x10] sm:$0xf]
        %v343 = vld [vmem:[%s1 + $0x14] sm:$0xf]
        %v344 = vld [vmem:[%s1 + $0x18] sm:$0xf]
        %v345 = vld [vmem:[%s1 + $0x1c] sm:$0xf]
        %v346 = vld [vmem:[%s1 + $0x20] sm:$0xf]
        %v347 = vld [vmem:[%s1 + $0x24] sm:$0xf]
        %v348 = vld [vmem:[%s1 + $0x28] sm:$0xf]
        %v349 = vld [vmem:[%s1 + $0x2c] sm:$0xf]
        %v350 = vld [vmem:[%s1 + $0x30] sm:$0xf]
        %v351 = vld [vmem:[%s1 + $0x34] sm:$0xf]
        %v352 = vld [vmem:[%s1 + $0x38] sm:$0xf]
        %v353 = vld [vmem:[%s1 + $0x3c] sm:$0xf]
        %v354 = vld [vmem:[%s1 + $0x40] sm:$0xf]
        %v355 = vld [vmem:[%s1 + $0x44] sm:$0xf]
        %v356 = vld [vmem:[%s1 + $0x48] sm:$0xf]
        %v357 = vld [vmem:[%s1 + $0x4c] sm:$0xf]
        %v358 = vld [vmem:[%s1 + $0x50] sm:$0xf]
        %v359 = vld [vmem:[%s1 + $0x54] sm:$0xf]
        %v360 = vld [vmem:[%s1 + $0x58] sm:$0xf]
        %v361 = vld [vmem:[%s1 + $0x5c] sm:$0xf]
        %v362 = vld [vmem:[%s1 + $0x60] sm:$0xf]
        %v363 = vld [vmem:[%s1 + $0x64] sm:$0xf]
        %v364 = vld [vmem:[%s1 + $0x68] sm:$0xf]
        %v365 = vld [vmem:[%s1 + $0x6c] sm:$0xf]
        %v366 = vld [vmem:[%s1 + $0x70] sm:$0xf]
        %v367 = vld [vmem:[%s1 + $0x74] sm:$0xf]
        %v368 = vld [vmem:[%s1 + $0x78] sm:$0xf]
        %v369 = vld [vmem:[%s1 + $0x7c] sm:$0xf]
        %v370 = vld [vmem:[%s1 + $0x80] sm:$0xf]
        %v371 = vld [vmem:[%s1 + $0x84] sm:$0xf]
        %v372 = vld [vmem:[%s1 + $0x88] sm:$0xf]
        %v373 = vld [vmem:[%s1 + $0x8c] sm:$0xf]
        %v374 = vld [vmem:[%s1 + $0x90] sm:$0xf]
        %v375 = vld [vmem:[%s1 + $0x94] sm:$0xf]
        %v376 = vld [vmem:[%s1 + $0x98] sm:$0xf]
        %v377 = vld [vmem:[%s1 + $0x9c] sm:$0xf]
        %v378 = vld [vmem:[%s1 + $0xa0] sm:$0xf]
        %v379 = vld [vmem:[%s1 + $0xa4] sm:$0xf]
        %v380 = vld [vmem:[%s1 + $0xa8] sm:$0xf]
        %v381 = vld [vmem:[%s1 + $0xac] sm:$0xf]
        %v382 = vld [vmem:[%s1 + $0xb0] sm:$0xf]
        %v383 = vld [vmem:[%s1 + $0xb4] sm:$0xf]
        %v384 = vld [vmem:[%s1 + $0xb8] sm:$0xf]
        %v385 = vld [vmem:[%s1 + $0xbc] sm:$0xf]
        %v386 = vld [vmem:[%s1 + $0xc0] sm:$0xf]
        %v387 = vld [vmem:[%s1 + $0xc4] sm:$0xf]
        %v388 = vld [vmem:[%s1 + $0xc8] sm:$0xf]
        %v389 = vld [vmem:[%s1 + $0xcc] sm:$0xf]
        %v390 = vld [vmem:[%s1 + $0xd0] sm:$0xf]
        %v391 = vld [vmem:[%s1 + $0xd4] sm:$0xf]
        %v392 = vld [vmem:[%s1 + $0xd8] sm:$0xf]
        %v393 = vld [vmem:[%s1 + $0xdc] sm:$0xf]
        %v394 = vld [vmem:[%s1 + $0xe0] sm:$0xf]
        %v395 = vld [vmem:[%s1 + $0xe4] sm:$0xf]
        %v396 = vld [vmem:[%s1 + $0xe8] sm:$0xf]
        %v397 = vld [vmem:[%s1 + $0xec] sm:$0xf]
        %v398 = vld [vmem:[%s1 + $0xf0] sm:$0xf]
        %v399 = vld [vmem:[%s1 + $0xf4] sm:$0xf]
        %v400 = vld [vmem:[%s1 + $0xf8] sm:$0xf]
        %v401 = vld [vmem:[%s1 + $0xfc] sm:$0xf]
        %vm408 = vcmask 1046528
        %v409 = vrot.slane %v332, 1
        %v410 = vrot.slane %v334, 1
        %v411 = vsel %vm408, %v409, %v410
        %v412 = vrot.slane %v333, 1
        %v413 = vrot.slane %v335, 1
        %v414 = vsel %vm408, %v412, %v413
        %v415 = vrot.slane %v336, 1
        %v416 = vsel %vm408, %v410, %v415
        %v417 = vrot.slane %v337, 1
        %v418 = vsel %vm408, %v413, %v417
        %v423 = vpack.c.bf16 %v334, %v332
        %v424 = vpack.c.bf16 %v335, %v333
        %v425 = vpack.c.bf16 %v416, %v411
        %v426 = vpack.c.bf16 %v418, %v414
        %v427 = vld [vmem:[%s2] sm:$0x1]
        %v429 = vlaneseq
        %v430 = vshrl.u32 %v429, 7
        %v431 = vsub.s32 0, %v430
        %v432 = vrot.slane %v427, %v431
        %v498 = vunpack.c.l.b16 %v338
        %v499 = vunpack.c.l.b16 %v339
        %v500 = vunpack.c.l.b16 %v340
        %v501 = vunpack.c.l.b16 %v341
        %v502 = vunpack.c.l.b16 %v342
        %v503 = vunpack.c.l.b16 %v343
        %v504 = vunpack.c.l.b16 %v344
        %v505 = vunpack.c.l.b16 %v345
        %v506 = vunpack.c.l.b16 %v346
        %v507 = vunpack.c.l.b16 %v347
        %v508 = vunpack.c.l.b16 %v348
        %v509 = vunpack.c.l.b16 %v349
        %v510 = vunpack.c.l.b16 %v350
        %v511 = vunpack.c.l.b16 %v351
        %v512 = vunpack.c.l.b16 %v352
        %v513 = vunpack.c.l.b16 %v353
        %v514 = vunpack.c.l.b16 %v354
        %v515 = vunpack.c.l.b16 %v355
        %v516 = vunpack.c.l.b16 %v356
        %v517 = vunpack.c.l.b16 %v357
        %v518 = vunpack.c.l.b16 %v358
        %v519 = vunpack.c.l.b16 %v359
        %v520 = vunpack.c.l.b16 %v360
        %v521 = vunpack.c.l.b16 %v361
        %v522 = vunpack.c.l.b16 %v362
        %v523 = vunpack.c.l.b16 %v363
        %v524 = vunpack.c.l.b16 %v364
        %v525 = vunpack.c.l.b16 %v365
        %v526 = vunpack.c.l.b16 %v366
        %v527 = vunpack.c.l.b16 %v367
        %v528 = vunpack.c.l.b16 %v368
        %v529 = vunpack.c.l.b16 %v369
        %v530 = vunpack.c.l.b16 %v370
        %v531 = vunpack.c.l.b16 %v371
        %v532 = vunpack.c.l.b16 %v372
        %v533 = vunpack.c.l.b16 %v373
        %v534 = vunpack.c.l.b16 %v374
        %v535 = vunpack.c.l.b16 %v375
        %v536 = vunpack.c.l.b16 %v376
        %v537 = vunpack.c.l.b16 %v377
        %v538 = vunpack.c.l.b16 %v378
        %v539 = vunpack.c.l.b16 %v379
        %v540 = vunpack.c.l.b16 %v380
        %v541 = vunpack.c.l.b16 %v381
        %v542 = vunpack.c.l.b16 %v382
        %v543 = vunpack.c.l.b16 %v383
        %v544 = vunpack.c.l.b16 %v384
        %v545 = vunpack.c.l.b16 %v385
        %v546 = vunpack.c.l.b16 %v386
        %v547 = vunpack.c.l.b16 %v387
        %v548 = vunpack.c.l.b16 %v388
        %v549 = vunpack.c.l.b16 %v389
        %v550 = vunpack.c.l.b16 %v390
        %v551 = vunpack.c.l.b16 %v391
        %v552 = vunpack.c.l.b16 %v392
        %v553 = vunpack.c.l.b16 %v393
        %v554 = vunpack.c.l.b16 %v394
        %v555 = vunpack.c.l.b16 %v395
        %v556 = vunpack.c.l.b16 %v396
        %v557 = vunpack.c.l.b16 %v397
        %v558 = vunpack.c.l.b16 %v398
        %v559 = vunpack.c.l.b16 %v399
        %v560 = vunpack.c.l.b16 %v400
        %v561 = vunpack.c.l.b16 %v401
        %v562 = vpack.c.b16 %v499, %v498
        %v563 = vpack.c.b16 %v501, %v500
        %v564 = vpack.c.b16 %v503, %v502
        %v565 = vpack.c.b16 %v505, %v504
        %v566 = vpack.c.b16 %v507, %v506
        %v567 = vpack.c.b16 %v509, %v508
        %v568 = vpack.c.b16 %v511, %v510
        %v569 = vpack.c.b16 %v513, %v512
        %v570 = vpack.c.b16 %v515, %v514
        %v571 = vpack.c.b16 %v517, %v516
        %v572 = vpack.c.b16 %v519, %v518
        %v573 = vpack.c.b16 %v521, %v520
        %v574 = vpack.c.b16 %v523, %v522
        %v575 = vpack.c.b16 %v525, %v524
        %v576 = vpack.c.b16 %v527, %v526
        %v577 = vpack.c.b16 %v529, %v528
        %v578 = vpack.c.b16 %v531, %v530
        %v579 = vpack.c.b16 %v533, %v532
        %v580 = vpack.c.b16 %v535, %v534
        %v581 = vpack.c.b16 %v537, %v536
        %v582 = vpack.c.b16 %v539, %v538
        %v583 = vpack.c.b16 %v541, %v540
        %v584 = vpack.c.b16 %v543, %v542
        %v585 = vpack.c.b16 %v545, %v544
        %v586 = vpack.c.b16 %v547, %v546
        %v587 = vpack.c.b16 %v549, %v548
        %v588 = vpack.c.b16 %v551, %v550
        %v589 = vpack.c.b16 %v553, %v552
        %v590 = vpack.c.b16 %v555, %v554
        %v591 = vpack.c.b16 %v557, %v556
        %v592 = vpack.c.b16 %v559, %v558
        %v593 = vpack.c.b16 %v561, %v560
        %626 = vmatprep.subr.bf16.mxu0 0
        %627 = vmatpush1.bf16.msra.mxu0 %v562
        %628 = vmatprep.subr.bf16.mxu0 0
        %629 = vmatpush1.bf16.msra.mxu0 %v563
        %630 = vmatprep.subr.bf16.mxu0 0
        %631 = vmatpush1.bf16.msra.mxu0 %v564
        %632 = vmatprep.subr.bf16.mxu0 0
        %633 = vmatpush1.bf16.msra.mxu0 %v565
        %634 = vmatprep.subr.bf16.mxu0 0
        %635 = vmatpush1.bf16.msra.mxu0 %v566
        %636 = vmatprep.subr.bf16.mxu0 0
        %637 = vmatpush1.bf16.msra.mxu0 %v567
        %638 = vmatprep.subr.bf16.mxu0 0
        %639 = vmatpush1.bf16.msra.mxu0 %v568
        %640 = vmatprep.subr.bf16.mxu0 0
        %641 = vmatpush1.bf16.msra.mxu0 %v569
        %642 = vmatprep.subr.bf16.mxu0 0
        %643 = vmatpush1.bf16.msra.mxu0 %v570
        %644 = vmatprep.subr.bf16.mxu0 0
        %645 = vmatpush1.bf16.msra.mxu0 %v571
        %646 = vmatprep.subr.bf16.mxu0 0
        %647 = vmatpush1.bf16.msra.mxu0 %v572
        %648 = vmatprep.subr.bf16.mxu0 0
        %649 = vmatpush1.bf16.msra.mxu0 %v573
        %650 = vmatprep.subr.bf16.mxu0 0
        %651 = vmatpush1.bf16.msra.mxu0 %v574
        %652 = vmatprep.subr.bf16.mxu0 0
        %653 = vmatpush1.bf16.msra.mxu0 %v575
        %654 = vmatprep.subr.bf16.mxu0 0
        %655 = vmatpush1.bf16.msra.mxu0 %v576
        %656 = vmatprep.subr.bf16.mxu0 0
        %657 = vmatpush1.bf16.msra.mxu0 %v577
        %658 = vmatprep.mubr.bf16.mxu0 %v424
        %659 = vmatmul.mubr.bf16.gmra.mrb[0].mxu0 %v423
        %v660 = vpop.f32.mrb[0].mxu0
        %v661 = vadd.f32 %v432, %v660
        %v662 = vpop.f32.mrb[0].mxu0
        %v663 = vpop.f32.mrb[0].mxu0
        %v664 = vadd.f32 %v432, %v663
        %v665 = vpop.f32.mrb[0].mxu0
        %666 = vdwg.mxu0
        %667 = vmatprep.subr.bf16.mxu0 0
        %668 = vmatpush1.bf16.msra.mxu0 %v578
        %669 = vmatprep.subr.bf16.mxu0 0
        %670 = vmatpush1.bf16.msra.mxu0 %v579
        %671 = vmatprep.subr.bf16.mxu0 0
        %672 = vmatpush1.bf16.msra.mxu0 %v580
        %673 = vmatprep.subr.bf16.mxu0 0
        %674 = vmatpush1.bf16.msra.mxu0 %v581
        %675 = vmatprep.subr.bf16.mxu0 0
        %676 = vmatpush1.bf16.msra.mxu0 %v582
        %677 = vmatprep.subr.bf16.mxu0 0
        %678 = vmatpush1.bf16.msra.mxu0 %v583
        %679 = vmatprep.subr.bf16.mxu0 0
        %680 = vmatpush1.bf16.msra.mxu0 %v584
        %681 = vmatprep.subr.bf16.mxu0 0
        %682 = vmatpush1.bf16.msra.mxu0 %v585
        %683 = vmatprep.subr.bf16.mxu0 0
        %684 = vmatpush1.bf16.msra.mxu0 %v586
        %685 = vmatprep.subr.bf16.mxu0 0
        %686 = vmatpush1.bf16.msra.mxu0 %v587
        %687 = vmatprep.subr.bf16.mxu0 0
        %688 = vmatpush1.bf16.msra.mxu0 %v588
        %689 = vmatprep.subr.bf16.mxu0 0
        %690 = vmatpush1.bf16.msra.mxu0 %v589
        %691 = vmatprep.subr.bf16.mxu0 0
        %692 = vmatpush1.bf16.msra.mxu0 %v590
        %693 = vmatprep.subr.bf16.mxu0 0
        %694 = vmatpush1.bf16.msra.mxu0 %v591
        %695 = vmatprep.subr.bf16.mxu0 0
        %696 = vmatpush1.bf16.msra.mxu0 %v592
        %697 = vmatprep.subr.bf16.mxu0 0
        %698 = vmatpush1.bf16.msra.mxu0 %v593
        %699 = vmatprep.mubr.bf16.mxu0 %v426
        %700 = vmatmul.mubr.bf16.gmra.mrb[0].mxu0 %v425
        %v701 = vpop.f32.mrb[0].mxu0
        %v702 = vadd.f32 %v661, %v701
        %v703 = vpop.f32.mrb[0].mxu0
        %v704 = vpop.f32.mrb[0].mxu0
        %v705 = vadd.f32 %v664, %v704
        %v706 = vpop.f32.mrb[0].mxu0
        %707 = vdwg.mxu0
        %708 = vst [vmem:[#allocation2] sm:$0xff] 0.0
        %709 = vst [vmem:[#allocation2 + $0x8] sm:$0xff] 0.0
        %710 = vst [vmem:[#allocation2 + $0x20] sm:$0xff] 0.0
        %711 = vst [vmem:[#allocation2 + $0x28] sm:$0xff] 0.0
        %v712 = vmax.f32 %v702, 0.0
        %v713 = vmax.f32 %v705, 0.0
        %714 = vst [vmem:[#allocation2 + $0x10] sm:$0xff] %v712
        %715 = vst [vmem:[#allocation2 + $0x18] sm:$0xff] %v713
        %v716 = vld [vmem:[%s3] sm:$0xf]
        %v717 = vld [vmem:[%s3 + $0x4] sm:$0xf]
        %v718 = vld [vmem:[%s3 + $0x8] sm:$0xf]
        %v719 = vld [vmem:[%s3 + $0xc] sm:$0xf]
        %v720 = vld [vmem:[%s3 + $0x10] sm:$0xf]
        %v721 = vld [vmem:[%s3 + $0x14] sm:$0xf]
        %v722 = vld [vmem:[%s3 + $0x18] sm:$0xf]
        %v723 = vld [vmem:[%s3 + $0x1c] sm:$0xf]
        %v724 = vld [vmem:[%s3 + $0x20] sm:$0xf]
        %v725 = vld [vmem:[%s3 + $0x24] sm:$0xf]
        %v726 = vld [vmem:[%s3 + $0x28] sm:$0xf]
        %v727 = vld [vmem:[%s3 + $0x2c] sm:$0xf]
        %v728 = vld [vmem:[%s3 + $0x30] sm:$0xf]
        %v729 = vld [vmem:[%s3 + $0x34] sm:$0xf]
        %v730 = vld [vmem:[%s3 + $0x38] sm:$0xf]
        %v731 = vld [vmem:[%s3 + $0x3c] sm:$0xf]
        %v732 = vld [vmem:[%s3 + $0x40] sm:$0xf]
        %v733 = vld [vmem:[%s3 + $0x44] sm:$0xf]
        %v734 = vld [vmem:[%s3 + $0x48] sm:$0xf]
        %v735 = vld [vmem:[%s3 + $0x4c] sm:$0xf]
        %v736 = vld [vmem:[%s3 + $0x50] sm:$0xf]
        %v737 = vld [vmem:[%s3 + $0x54] sm:$0xf]
        %v738 = vld [vmem:[%s3 + $0x58] sm:$0xf]
        %v739 = vld [vmem:[%s3 + $0x5c] sm:$0xf]
        %v740 = vld [vmem:[%s3 + $0x60] sm:$0xf]
        %v741 = vld [vmem:[%s3 + $0x64] sm:$0xf]
        %v742 = vld [vmem:[%s3 + $0x68] sm:$0xf]
        %v743 = vld [vmem:[%s3 + $0x6c] sm:$0xf]
        %v744 = vld [vmem:[%s3 + $0x70] sm:$0xf]
        %v745 = vld [vmem:[%s3 + $0x74] sm:$0xf]
        %v746 = vld [vmem:[%s3 + $0x78] sm:$0xf]
        %v747 = vld [vmem:[%s3 + $0x7c] sm:$0xf]
        %v748 = vld [vmem:[%s3 + $0x80] sm:$0xf]
        %v749 = vld [vmem:[%s3 + $0x84] sm:$0xf]
        %v750 = vld [vmem:[%s3 + $0x88] sm:$0xf]
        %v751 = vld [vmem:[%s3 + $0x8c] sm:$0xf]
        %v752 = vld [vmem:[%s3 + $0x90] sm:$0xf]
        %v753 = vld [vmem:[%s3 + $0x94] sm:$0xf]
        %v754 = vld [vmem:[%s3 + $0x98] sm:$0xf]
        %v755 = vld [vmem:[%s3 + $0x9c] sm:$0xf]
        %v756 = vld [vmem:[%s3 + $0xa0] sm:$0xf]
        %v757 = vld [vmem:[%s3 + $0xa4] sm:$0xf]
        %v758 = vld [vmem:[%s3 + $0xa8] sm:$0xf]
        %v759 = vld [vmem:[%s3 + $0xac] sm:$0xf]
        %v760 = vld [vmem:[%s3 + $0xb0] sm:$0xf]
        %v761 = vld [vmem:[%s3 + $0xb4] sm:$0xf]
        %v762 = vld [vmem:[%s3 + $0xb8] sm:$0xf]
        %v763 = vld [vmem:[%s3 + $0xbc] sm:$0xf]
        %v764 = vld [vmem:[#allocation2 + $0x7] sm:$0xff]
        %v765 = vld [vmem:[#allocation2 + $0xf] sm:$0xff]
        %v766 = vld [vmem:[#allocation2 + $0x10] sm:$0xff]
        %v767 = vld [vmem:[#allocation2 + $0x18] sm:$0xff]
        %v768 = vld [vmem:[#allocation2 + $0x19] sm:$0xff]
        %v769 = vld [vmem:[#allocation2 + $0x21] sm:$0xff]
        %v770 = vpack.c.bf16 %v765, %v764
        %v771 = vpack.c.bf16 %v767, %v766
        %v772 = vpack.c.bf16 %v769, %v768
        %v773 = vld [vmem:[%s4] sm:$0x1]
        %v775 = vlaneseq
        %v776 = vshrl.u32 %v775, 7
        %v777 = vsub.s32 0, %v776
        %v778 = vrot.slane %v773, %v777
        %v828 = vunpack.c.l.b16 %v716
        %v829 = vunpack.c.l.b16 %v717
        %v830 = vunpack.c.l.b16 %v718
        %v831 = vunpack.c.l.b16 %v719
        %v832 = vunpack.c.l.b16 %v720
        %v833 = vunpack.c.l.b16 %v721
        %v834 = vunpack.c.l.b16 %v722
        %v835 = vunpack.c.l.b16 %v723
        %v836 = vunpack.c.l.b16 %v724
        %v837 = vunpack.c.l.b16 %v725
        %v838 = vunpack.c.l.b16 %v726
        %v839 = vunpack.c.l.b16 %v727
        %v840 = vunpack.c.l.b16 %v728
        %v841 = vunpack.c.l.b16 %v729
        %v842 = vunpack.c.l.b16 %v730
        %v843 = vunpack.c.l.b16 %v731
        %v844 = vunpack.c.l.b16 %v732
        %v845 = vunpack.c.l.b16 %v733
        %v846 = vunpack.c.l.b16 %v734
        %v847 = vunpack.c.l.b16 %v735
        %v848 = vunpack.c.l.b16 %v736
        %v849 = vunpack.c.l.b16 %v737
        %v850 = vunpack.c.l.b16 %v738
        %v851 = vunpack.c.l.b16 %v739
        %v852 = vunpack.c.l.b16 %v740
        %v853 = vunpack.c.l.b16 %v741
        %v854 = vunpack.c.l.b16 %v742
        %v855 = vunpack.c.l.b16 %v743
        %v856 = vunpack.c.l.b16 %v744
        %v857 = vunpack.c.l.b16 %v745
        %v858 = vunpack.c.l.b16 %v746
        %v859 = vunpack.c.l.b16 %v747
        %v860 = vunpack.c.l.b16 %v748
        %v861 = vunpack.c.l.b16 %v749
        %v862 = vunpack.c.l.b16 %v750
        %v863 = vunpack.c.l.b16 %v751
        %v864 = vunpack.c.l.b16 %v752
        %v865 = vunpack.c.l.b16 %v753
        %v866 = vunpack.c.l.b16 %v754
        %v867 = vunpack.c.l.b16 %v755
        %v868 = vunpack.c.l.b16 %v756
        %v869 = vunpack.c.l.b16 %v757
        %v870 = vunpack.c.l.b16 %v758
        %v871 = vunpack.c.l.b16 %v759
        %v872 = vunpack.c.l.b16 %v760
        %v873 = vunpack.c.l.b16 %v761
        %v874 = vunpack.c.l.b16 %v762
        %v875 = vunpack.c.l.b16 %v763
        %v876 = vpack.c.b16 %v829, %v828
        %v877 = vpack.c.b16 %v831, %v830
        %v878 = vpack.c.b16 %v833, %v832
        %v879 = vpack.c.b16 %v835, %v834
        %v880 = vpack.c.b16 %v837, %v836
        %v881 = vpack.c.b16 %v839, %v838
        %v882 = vpack.c.b16 %v841, %v840
        %v883 = vpack.c.b16 %v843, %v842
        %v884 = vpack.c.b16 %v845, %v844
        %v885 = vpack.c.b16 %v847, %v846
        %v886 = vpack.c.b16 %v849, %v848
        %v887 = vpack.c.b16 %v851, %v850
        %v888 = vpack.c.b16 %v853, %v852
        %v889 = vpack.c.b16 %v855, %v854
        %v890 = vpack.c.b16 %v857, %v856
        %v891 = vpack.c.b16 %v859, %v858
        %v892 = vpack.c.b16 %v861, %v860
        %v893 = vpack.c.b16 %v863, %v862
        %v894 = vpack.c.b16 %v865, %v864
        %v895 = vpack.c.b16 %v867, %v866
        %v896 = vpack.c.b16 %v869, %v868
        %v897 = vpack.c.b16 %v871, %v870
        %v898 = vpack.c.b16 %v873, %v872
        %v899 = vpack.c.b16 %v875, %v874
        %924 = vmatprep.subr.bf16.mxu0 0
        %925 = vmatpush1.bf16.msra.mxu0 %v876
        %926 = vmatprep.subr.bf16.mxu0 0
        %927 = vmatpush1.bf16.msra.mxu0 %v877
        %928 = vmatprep.subr.bf16.mxu0 0
        %929 = vmatpush1.bf16.msra.mxu0 %v878
        %930 = vmatprep.subr.bf16.mxu0 0
        %931 = vmatpush1.bf16.msra.mxu0 %v879
        %932 = vmatprep.subr.bf16.mxu0 0
        %933 = vmatpush1.bf16.msra.mxu0 %v880
        %934 = vmatprep.subr.bf16.mxu0 0
        %935 = vmatpush1.bf16.msra.mxu0 %v881
        %936 = vmatprep.subr.bf16.mxu0 0
        %937 = vmatpush1.bf16.msra.mxu0 %v882
        %938 = vmatprep.subr.bf16.mxu0 0
        %939 = vmatpush1.bf16.msra.mxu0 %v883
        %940 = vmatprep.subr.bf16.mxu0 0
        %941 = vmatpush1.bf16.msra.mxu0 %v884
        %942 = vmatprep.subr.bf16.mxu0 0
        %943 = vmatpush1.bf16.msra.mxu0 %v885
        %944 = vmatprep.subr.bf16.mxu0 0
        %945 = vmatpush1.bf16.msra.mxu0 %v886
        %946 = vmatprep.subr.bf16.mxu0 0
        %947 = vmatpush1.bf16.msra.mxu0 %v887
        %948 = vmatprep.subr.bf16.mxu0 0
        %949 = vmatpush1.bf16.msra.mxu0 %v888
        %950 = vmatprep.subr.bf16.mxu0 0
        %951 = vmatpush1.bf16.msra.mxu0 %v889
        %952 = vmatprep.subr.bf16.mxu0 0
        %953 = vmatpush1.bf16.msra.mxu0 %v890
        %954 = vmatprep.subr.bf16.mxu0 0
        %955 = vmatpush1.bf16.msra.mxu0 %v891
        %956 = vmatprep.mubr.bf16.mxu0 %v771
        %957 = vmatmul.mubr.bf16.gmra.mrb[0].mxu0 %v770
        %v958 = vpop.f32.mrb[0].mxu0
        %v959 = vadd.f32 %v778, %v958
        %v960 = vpop.f32.mrb[0].mxu0
        %v961 = vpop.f32.mrb[0].mxu0
        %v962 = vadd.f32 %v778, %v961
        %v963 = vpop.f32.mrb[0].mxu0
        %964 = vdwg.mxu0
        %965 = vmatprep.subr.bf16.mxu0 0
        %966 = vmatpush1.bf16.msra.mxu0 %v892
        %967 = vmatprep.subr.bf16.mxu0 0
        %968 = vmatpush1.bf16.msra.mxu0 %v893
        %969 = vmatprep.subr.bf16.mxu0 0
        %970 = vmatpush1.bf16.msra.mxu0 %v894
        %971 = vmatprep.subr.bf16.mxu0 0
        %972 = vmatpush1.bf16.msra.mxu0 %v895
        %973 = vmatprep.subr.bf16.mxu0 0
        %974 = vmatpush1.bf16.msra.mxu0 %v896
        %975 = vmatprep.subr.bf16.mxu0 0
        %976 = vmatpush1.bf16.msra.mxu0 %v897
        %977 = vmatprep.subr.bf16.mxu0 0
        %978 = vmatpush1.bf16.msra.mxu0 %v898
        %979 = vmatprep.subr.bf16.mxu0 0
        %980 = vmatpush1.bf16.msra.mxu0 %v899
        %981 = vmatprep.subr.bf16.mxu0 0
        %982 = vmatpush1.bf16.msra.mxu0 0
        %983 = vmatprep.subr.bf16.mxu0 0
        %984 = vmatpush1.bf16.msra.mxu0 0
        %985 = vmatprep.subr.bf16.mxu0 0
        %986 = vmatpush1.bf16.msra.mxu0 0
        %987 = vmatprep.subr.bf16.mxu0 0
        %988 = vmatpush1.bf16.msra.mxu0 0
        %989 = vmatprep.subr.bf16.mxu0 0
        %990 = vmatpush1.bf16.msra.mxu0 0
        %991 = vmatprep.subr.bf16.mxu0 0
        %992 = vmatpush1.bf16.msra.mxu0 0
        %993 = vmatprep.subr.bf16.mxu0 0
        %994 = vmatpush1.bf16.msra.mxu0 0
        %995 = vmatprep.subr.bf16.mxu0 0
        %996 = vmatpush1.bf16.msra.mxu0 0
        %997 = vmatprep.mubr.bf16.mxu0 0
        %998 = vmatmul.mubr.bf16.gmra.mrb[0].mxu0 %v772
        %v999 = vpop.f32.mrb[0].mxu0
        %v1000 = vadd.f32 %v959, %v999
        %v1001 = vpop.f32.mrb[0].mxu0
        %v1002 = vpop.f32.mrb[0].mxu0
        %v1003 = vadd.f32 %v962, %v1002
        %v1004 = vpop.f32.mrb[0].mxu0
        %1005 = vdwg.mxu0
        %v1006 = vmax.f32 %v1000, 0.0
        %v1007 = vmax.f32 %v1003, 0.0
        %v1008 = vld [vmem:[%s5] sm:$0xf]
        %v1009 = vld [vmem:[%s5 + $0x4] sm:$0xf]
        %v1010 = vld [vmem:[%s5 + $0x8] sm:$0xf]
        %v1011 = vld [vmem:[%s5 + $0xc] sm:$0xf]
        %v1012 = vld [vmem:[%s5 + $0x10] sm:$0xf]
        %v1013 = vld [vmem:[%s5 + $0x14] sm:$0xf]
        %v1014 = vld [vmem:[%s5 + $0x18] sm:$0xf]
        %v1015 = vld [vmem:[%s5 + $0x1c] sm:$0xf]
        %v1016 = vld [vmem:[%s5 + $0x20] sm:$0xf]
        %v1017 = vld [vmem:[%s5 + $0x24] sm:$0xf]
        %v1018 = vld [vmem:[%s5 + $0x28] sm:$0xf]
        %v1019 = vld [vmem:[%s5 + $0x2c] sm:$0xf]
        %v1020 = vld [vmem:[%s5 + $0x30] sm:$0xf]
        %v1021 = vld [vmem:[%s5 + $0x34] sm:$0xf]
        %v1022 = vld [vmem:[%s5 + $0x38] sm:$0xf]
        %v1023 = vld [vmem:[%s5 + $0x3c] sm:$0xf]
        %v1024 = vpack.c.bf16 %v1007, %v1006
        %v1025 = vld [vmem:[%s6] sm:$0x1]
        %v1027 = vlaneseq
        %v1028 = vshrl.u32 %v1027, 7
        %v1029 = vsub.s32 0, %v1028
        %v1030 = vrot.slane %v1025, %v1029
        %v1048 = vunpack.c.l.b16 %v1008
        %v1049 = vunpack.c.l.b16 %v1009
        %v1050 = vunpack.c.l.b16 %v1010
        %v1051 = vunpack.c.l.b16 %v1011
        %v1052 = vunpack.c.l.b16 %v1012
        %v1053 = vunpack.c.l.b16 %v1013
        %v1054 = vunpack.c.l.b16 %v1014
        %v1055 = vunpack.c.l.b16 %v1015
        %v1056 = vunpack.c.l.b16 %v1016
        %v1057 = vunpack.c.l.b16 %v1017
        %v1058 = vunpack.c.l.b16 %v1018
        %v1059 = vunpack.c.l.b16 %v1019
        %v1060 = vunpack.c.l.b16 %v1020
        %v1061 = vunpack.c.l.b16 %v1021
        %v1062 = vunpack.c.l.b16 %v1022
        %v1063 = vunpack.c.l.b16 %v1023
        %v1064 = vpack.c.b16 %v1049, %v1048
        %v1065 = vpack.c.b16 %v1051, %v1050
        %v1066 = vpack.c.b16 %v1053, %v1052
        %v1067 = vpack.c.b16 %v1055, %v1054
        %v1068 = vpack.c.b16 %v1057, %v1056
        %v1069 = vpack.c.b16 %v1059, %v1058
        %v1070 = vpack.c.b16 %v1061, %v1060
        %v1071 = vpack.c.b16 %v1063, %v1062
        %1080 = vmatprep.subr.bf16.mxu0 0
        %1081 = vmatpush1.bf16.msra.mxu0 %v1064
        %1082 = vmatprep.subr.bf16.mxu0 0
        %1083 = vmatpush1.bf16.msra.mxu0 %v1065
        %1084 = vmatprep.subr.bf16.mxu0 0
        %1085 = vmatpush1.bf16.msra.mxu0 %v1066
        %1086 = vmatprep.subr.bf16.mxu0 0
        %1087 = vmatpush1.bf16.msra.mxu0 %v1067
        %1088 = vmatprep.subr.bf16.mxu0 0
        %1089 = vmatpush1.bf16.msra.mxu0 %v1068
        %1090 = vmatprep.subr.bf16.mxu0 0
        %1091 = vmatpush1.bf16.msra.mxu0 %v1069
        %1092 = vmatprep.subr.bf16.mxu0 0
        %1093 = vmatpush1.bf16.msra.mxu0 %v1070
        %1094 = vmatprep.subr.bf16.mxu0 0
        %1095 = vmatpush1.bf16.msra.mxu0 %v1071
        %1096 = vmatprep.subr.bf16.mxu0 0
        %1097 = vmatpush1.bf16.msra.mxu0 0
        %1098 = vmatprep.subr.bf16.mxu0 0
        %1099 = vmatpush1.bf16.msra.mxu0 0
        %1100 = vmatprep.subr.bf16.mxu0 0
        %1101 = vmatpush1.bf16.msra.mxu0 0
        %1102 = vmatprep.subr.bf16.mxu0 0
        %1103 = vmatpush1.bf16.msra.mxu0 0
        %1104 = vmatprep.subr.bf16.mxu0 0
        %1105 = vmatpush1.bf16.msra.mxu0 0
        %1106 = vmatprep.subr.bf16.mxu0 0
        %1107 = vmatpush1.bf16.msra.mxu0 0
        %1108 = vmatprep.subr.bf16.mxu0 0
        %1109 = vmatpush1.bf16.msra.mxu0 0
        %1110 = vmatprep.subr.bf16.mxu0 0
        %1111 = vmatpush1.bf16.msra.mxu0 0
        %1112 = vmatprep.mubr.bf16.mxu0 0
        %1113 = vmatmul.mubr.bf16.gmra.mrb[0].mxu0 %v1024
        %v1114 = vpop.f32.mrb[0].mxu0
        %v1115 = vadd.f32 %v1030, %v1114
        %v1116 = vpop.f32.mrb[0].mxu0
        %v1117 = vpop.f32.mrb[0].mxu0
        %v1118 = vadd.f32 %v1030, %v1117
        %v1119 = vpop.f32.mrb[0].mxu0
        %1120 = vdwg.mxu0
        %v1121 = vadd.f32 %v702, %v1115
        %v1122 = vadd.f32 %v705, %v1118
        %v1123 = vmax.f32 %v1121, 0.0
        %v1124 = vmax.f32 %v1122, 0.0
        %1125 = vst [vmem:[#allocation2 + $0x10] sm:$0xff] %v1123
        %1126 = vst [vmem:[#allocation2 + $0x18] sm:$0xff] %v1124
        %s1127 = scalar_lea.vmem %s3, 192
        %v1128 = vld [vmem:[%s1127] sm:$0xf]
        %v1129 = vld [vmem:[%s1127 + $0x4] sm:$0xf]
        %v1130 = vld [vmem:[%s1127 + $0x8] sm:$0xf]
        %v1131 = vld [vmem:[%s1127 + $0xc] sm:$0xf]
        %v1132 = vld [vmem:[%s1127 + $0x10] sm:$0xf]
        %v1133 = vld [vmem:[%s1127 + $0x14] sm:$0xf]
        %v1134 = vld [vmem:[%s1127 + $0x18] sm:$0xf]
        %v1135 = vld [vmem:[%s1127 + $0x1c] sm:$0xf]
        %v1136 = vld [vmem:[%s1127 + $0x20] sm:$0xf]
        %v1137 = vld [vmem:[%s1127 + $0x24] sm:$0xf]
        %v1138 = vld [vmem:[%s1127 + $0x28] sm:$0xf]
        %v1139 = vld [vmem:[%s1127 + $0x2c] sm:$0xf]
        %v1140 = vld [vmem:[%s1127 + $0x30] sm:$0xf]
        %v1141 = vld [vmem:[%s1127 + $0x34] sm:$0xf]
        %v1142 = vld [vmem:[%s1127 + $0x38] sm:$0xf]
        %v1143 = vld [vmem:[%s1127 + $0x3c] sm:$0xf]
        %v1144 = vld [vmem:[%s1127 + $0x40] sm:$0xf]
        %v1145 = vld [vmem:[%s1127 + $0x44] sm:$0xf]
        %v1146 = vld [vmem:[%s1127 + $0x48] sm:$0xf]
        %v1147 = vld [vmem:[%s1127 + $0x4c] sm:$0xf]
        %v1148 = vld [vmem:[%s1127 + $0x50] sm:$0xf]
        %v1149 = vld [vmem:[%s1127 + $0x54] sm:$0xf]
        %v1150 = vld [vmem:[%s1127 + $0x58] sm:$0xf]
        %v1151 = vld [vmem:[%s1127 + $0x5c] sm:$0xf]
        %v1152 = vld [vmem:[%s1127 + $0x60] sm:$0xf]
        %v1153 = vld [vmem:[%s1127 + $0x64] sm:$0xf]
        %v1154 = vld [vmem:[%s1127 + $0x68] sm:$0xf]
        %v1155 = vld [vmem:[%s1127 + $0x6c] sm:$0xf]
        %v1156 = vld [vmem:[%s1127 + $0x70] sm:$0xf]
        %v1157 = vld [vmem:[%s1127 + $0x74] sm:$0xf]
        %v1158 = vld [vmem:[%s1127 + $0x78] sm:$0xf]
        %v1159 = vld [vmem:[%s1127 + $0x7c] sm:$0xf]
        %v1160 = vld [vmem:[%s1127 + $0x80] sm:$0xf]
        %v1161 = vld [vmem:[%s1127 + $0x84] sm:$0xf]
        %v1162 = vld [vmem:[%s1127 + $0x88] sm:$0xf]
        %v1163 = vld [vmem:[%s1127 + $0x8c] sm:$0xf]
        %v1164 = vld [vmem:[%s1127 + $0x90] sm:$0xf]
        %v1165 = vld [vmem:[%s1127 + $0x94] sm:$0xf]
        %v1166 = vld [vmem:[%s1127 + $0x98] sm:$0xf]
        %v1167 = vld [vmem:[%s1127 + $0x9c] sm:$0xf]
        %v1168 = vld [vmem:[%s1127 + $0xa0] sm:$0xf]
        %v1169 = vld [vmem:[%s1127 + $0xa4] sm:$0xf]
        %v1170 = vld [vmem:[%s1127 + $0xa8] sm:$0xf]
        %v1171 = vld [vmem:[%s1127 + $0xac] sm:$0xf]
        %v1172 = vld [vmem:[%s1127 + $0xb0] sm:$0xf]
        %v1173 = vld [vmem:[%s1127 + $0xb4] sm:$0xf]
        %v1174 = vld [vmem:[%s1127 + $0xb8] sm:$0xf]
        %v1175 = vld [vmem:[%s1127 + $0xbc] sm:$0xf]
        %v1176 = vld [vmem:[#allocation2 + $0xd] sm:$0xff]
        %v1177 = vld [vmem:[#allocation2 + $0x15] sm:$0xff]
        %v1178 = vld [vmem:[#allocation2 + $0x10] sm:$0xff]
        %v1179 = vld [vmem:[#allocation2 + $0x18] sm:$0xff]
        %v1180 = vld [vmem:[#allocation2 + $0x13] sm:$0xff]
        %v1181 = vld [vmem:[#allocation2 + $0x1b] sm:$0xff]
        %v1182 = vpack.c.bf16 %v1177, %v1176
        %v1183 = vpack.c.bf16 %v1179, %v1178
        %v1184 = vpack.c.bf16 %v1181, %v1180
        %s1185 = scalar_lea.vmem %s4, 1
        %v1186 = vld [vmem:[%s1185] sm:$0x1]
        %v1188 = vlaneseq
        %v1189 = vshrl.u32 %v1188, 7
        %v1190 = vsub.s32 0, %v1189
        %v1191 = vrot.slane %v1186, %v1190
        %v1241 = vunpack.c.l.b16 %v1128
        %v1242 = vunpack.c.l.b16 %v1129
        %v1243 = vunpack.c.l.b16 %v1130
        %v1244 = vunpack.c.l.b16 %v1131
        %v1245 = vunpack.c.l.b16 %v1132
        %v1246 = vunpack.c.l.b16 %v1133
        %v1247 = vunpack.c.l.b16 %v1134
        %v1248 = vunpack.c.l.b16 %v1135
        %v1249 = vunpack.c.l.b16 %v1136
        %v1250 = vunpack.c.l.b16 %v1137
        %v1251 = vunpack.c.l.b16 %v1138
        %v1252 = vunpack.c.l.b16 %v1139
        %v1253 = vunpack.c.l.b16 %v1140
        %v1254 = vunpack.c.l.b16 %v1141
        %v1255 = vunpack.c.l.b16 %v1142
        %v1256 = vunpack.c.l.b16 %v1143
        %v1257 = vunpack.c.l.b16 %v1144
        %v1258 = vunpack.c.l.b16 %v1145
        %v1259 = vunpack.c.l.b16 %v1146
        %v1260 = vunpack.c.l.b16 %v1147
        %v1261 = vunpack.c.l.b16 %v1148
        %v1262 = vunpack.c.l.b16 %v1149
        %v1263 = vunpack.c.l.b16 %v1150
        %v1264 = vunpack.c.l.b16 %v1151
        %v1265 = vunpack.c.l.b16 %v1152
        %v1266 = vunpack.c.l.b16 %v1153
        %v1267 = vunpack.c.l.b16 %v1154
        %v1268 = vunpack.c.l.b16 %v1155
        %v1269 = vunpack.c.l.b16 %v1156
        %v1270 = vunpack.c.l.b16 %v1157
        %v1271 = vunpack.c.l.b16 %v1158
        %v1272 = vunpack.c.l.b16 %v1159
        %v1273 = vunpack.c.l.b16 %v1160
        %v1274 = vunpack.c.l.b16 %v1161
        %v1275 = vunpack.c.l.b16 %v1162
        %v1276 = vunpack.c.l.b16 %v1163
        %v1277 = vunpack.c.l.b16 %v1164
        %v1278 = vunpack.c.l.b16 %v1165
        %v1279 = vunpack.c.l.b16 %v1166
        %v1280 = vunpack.c.l.b16 %v1167
        %v1281 = vunpack.c.l.b16 %v1168
        %v1282 = vunpack.c.l.b16 %v1169
        %v1283 = vunpack.c.l.b16 %v1170
        %v1284 = vunpack.c.l.b16 %v1171
        %v1285 = vunpack.c.l.b16 %v1172
        %v1286 = vunpack.c.l.b16 %v1173
        %v1287 = vunpack.c.l.b16 %v1174
        %v1288 = vunpack.c.l.b16 %v1175
        %v1289 = vpack.c.b16 %v1242, %v1241
        %v1290 = vpack.c.b16 %v1244, %v1243
        %v1291 = vpack.c.b16 %v1246, %v1245
        %v1292 = vpack.c.b16 %v1248, %v1247
        %v1293 = vpack.c.b16 %v1250, %v1249
        %v1294 = vpack.c.b16 %v1252, %v1251
        %v1295 = vpack.c.b16 %v1254, %v1253
        %v1296 = vpack.c.b16 %v1256, %v1255
        %v1297 = vpack.c.b16 %v1258, %v1257
        %v1298 = vpack.c.b16 %v1260, %v1259
        %v1299 = vpack.c.b16 %v1262, %v1261
        %v1300 = vpack.c.b16 %v1264, %v1263
        %v1301 = vpack.c.b16 %v1266, %v1265
        %v1302 = vpack.c.b16 %v1268, %v1267
        %v1303 = vpack.c.b16 %v1270, %v1269
        %v1304 = vpack.c.b16 %v1272, %v1271
        %v1305 = vpack.c.b16 %v1274, %v1273
        %v1306 = vpack.c.b16 %v1276, %v1275
        %v1307 = vpack.c.b16 %v1278, %v1277
        %v1308 = vpack.c.b16 %v1280, %v1279
        %v1309 = vpack.c.b16 %v1282, %v1281
        %v1310 = vpack.c.b16 %v1284, %v1283
        %v1311 = vpack.c.b16 %v1286, %v1285
        %v1312 = vpack.c.b16 %v1288, %v1287
        %1337 = vmatprep.subr.bf16.mxu0 0
        %1338 = vmatpush1.bf16.msra.mxu0 %v1289
        %1339 = vmatprep.subr.bf16.mxu0 0
        %1340 = vmatpush1.bf16.msra.mxu0 %v1290
        %1341 = vmatprep.subr.bf16.mxu0 0
        %1342 = vmatpush1.bf16.msra.mxu0 %v1291
        %1343 = vmatprep.subr.bf16.mxu0 0
        %1344 = vmatpush1.bf16.msra.mxu0 %v1292
        %1345 = vmatprep.subr.bf16.mxu0 0
        %1346 = vmatpush1.bf16.msra.mxu0 %v1293
        %1347 = vmatprep.subr.bf16.mxu0 0
        %1348 = vmatpush1.bf16.msra.mxu0 %v1294
        %1349 = vmatprep.subr.bf16.mxu0 0
        %1350 = vmatpush1.bf16.msra.mxu0 %v1295
        %1351 = vmatprep.subr.bf16.mxu0 0
        %1352 = vmatpush1.bf16.msra.mxu0 %v1296
        %1353 = vmatprep.subr.bf16.mxu0 0
        %1354 = vmatpush1.bf16.msra.mxu0 %v1297
        %1355 = vmatprep.subr.bf16.mxu0 0
        %1356 = vmatpush1.bf16.msra.mxu0 %v1298
        %1357 = vmatprep.subr.bf16.mxu0 0
        %1358 = vmatpush1.bf16.msra.mxu0 %v1299
        %1359 = vmatprep.subr.bf16.mxu0 0
        %1360 = vmatpush1.bf16.msra.mxu0 %v1300
        %1361 = vmatprep.subr.bf16.mxu0 0
        %1362 = vmatpush1.bf16.msra.mxu0 %v1301
        %1363 = vmatprep.subr.bf16.mxu0 0
        %1364 = vmatpush1.bf16.msra.mxu0 %v1302
        %1365 = vmatprep.subr.bf16.mxu0 0
        %1366 = vmatpush1.bf16.msra.mxu0 %v1303
        %1367 = vmatprep.subr.bf16.mxu0 0
        %1368 = vmatpush1.bf16.msra.mxu0 %v1304
        %1369 = vmatprep.mubr.bf16.mxu0 %v1183
        %1370 = vmatmul.mubr.bf16.gmra.mrb[0].mxu0 %v1182
        %v1371 = vpop.f32.mrb[0].mxu0
        %v1372 = vadd.f32 %v1191, %v1371
        %v1373 = vpop.f32.mrb[0].mxu0
        %v1374 = vpop.f32.mrb[0].mxu0
        %v1375 = vadd.f32 %v1191, %v1374
        %v1376 = vpop.f32.mrb[0].mxu0
        %1377 = vdwg.mxu0
        %1378 = vmatprep.subr.bf16.mxu0 0
        %1379 = vmatpush1.bf16.msra.mxu0 %v1305
        %1380 = vmatprep.subr.bf16.mxu0 0
        %1381 = vmatpush1.bf16.msra.mxu0 %v1306
        %1382 = vmatprep.subr.bf16.mxu0 0
        %1383 = vmatpush1.bf16.msra.mxu0 %v1307
        %1384 = vmatprep.subr.bf16.mxu0 0
        %1385 = vmatpush1.bf16.msra.mxu0 %v1308
        %1386 = vmatprep.subr.bf16.mxu0 0
        %1387 = vmatpush1.bf16.msra.mxu0 %v1309
        %1388 = vmatprep.subr.bf16.mxu0 0
        %1389 = vmatpush1.bf16.msra.mxu0 %v1310
        %1390 = vmatprep.subr.bf16.mxu0 0
        %1391 = vmatpush1.bf16.msra.mxu0 %v1311
        %1392 = vmatprep.subr.bf16.mxu0 0
        %1393 = vmatpush1.bf16.msra.mxu0 %v1312
        %1394 = vmatprep.subr.bf16.mxu0 0
        %1395 = vmatpush1.bf16.msra.mxu0 0
        %1396 = vmatprep.subr.bf16.mxu0 0
        %1397 = vmatpush1.bf16.msra.mxu0 0
        %1398 = vmatprep.subr.bf16.mxu0 0
        %1399 = vmatpush1.bf16.msra.mxu0 0
        %1400 = vmatprep.subr.bf16.mxu0 0
        %1401 = vmatpush1.bf16.msra.mxu0 0
        %1402 = vmatprep.subr.bf16.mxu0 0
        %1403 = vmatpush1.bf16.msra.mxu0 0
        %1404 = vmatprep.subr.bf16.mxu0 0
        %1405 = vmatpush1.bf16.msra.mxu0 0
        %1406 = vmatprep.subr.bf16.mxu0 0
        %1407 = vmatpush1.bf16.msra.mxu0 0
        %1408 = vmatprep.subr.bf16.mxu0 0
        %1409 = vmatpush1.bf16.msra.mxu0 0
        %1410 = vmatprep.mubr.bf16.mxu0 0
        %1411 = vmatmul.mubr.bf16.gmra.mrb[0].mxu0 %v1184
        %v1412 = vpop.f32.mrb[0].mxu0
        %v1413 = vadd.f32 %v1372, %v1412
        %v1414 = vpop.f32.mrb[0].mxu0
        %v1415 = vpop.f32.mrb[0].mxu0
        %v1416 = vadd.f32 %v1375, %v1415
        %v1417 = vpop.f32.mrb[0].mxu0
        %1418 = vdwg.mxu0
        %v1419 = vmax.f32 %v1413, 0.0
        %v1420 = vmax.f32 %v1416, 0.0
        %s1421 = scalar_lea.vmem %s5, 64
        %v1422 = vld [vmem:[%s1421] sm:$0xf]
        %v1423 = vld [vmem:[%s1421 + $0x4] sm:$0xf]
        %v1424 = vld [vmem:[%s1421 + $0x8] sm:$0xf]
        %v1425 = vld [vmem:[%s1421 + $0xc] sm:$0xf]
        %v1426 = vld [vmem:[%s1421 + $0x10] sm:$0xf]
        %v1427 = vld [vmem:[%s1421 + $0x14] sm:$0xf]
        %v1428 = vld [vmem:[%s1421 + $0x18] sm:$0xf]
        %v1429 = vld [vmem:[%s1421 + $0x1c] sm:$0xf]
        %v1430 = vld [vmem:[%s1421 + $0x20] sm:$0xf]
        %v1431 = vld [vmem:[%s1421 + $0x24] sm:$0xf]
        %v1432 = vld [vmem:[%s1421 + $0x28] sm:$0xf]
        %v1433 = vld [vmem:[%s1421 + $0x2c] sm:$0xf]
        %v1434 = vld [vmem:[%s1421 + $0x30] sm:$0xf]
        %v1435 = vld [vmem:[%s1421 + $0x34] sm:$0xf]
        %v1436 = vld [vmem:[%s1421 + $0x38] sm:$0xf]
        %v1437 = vld [vmem:[%s1421 + $0x3c] sm:$0xf]
        %v1438 = vpack.c.bf16 %v1420, %v1419
        %s1439 = scalar_lea.vmem %s6, 1
        %v1440 = vld [vmem:[%s1439] sm:$0x1]
        %v1442 = vlaneseq
        %v1443 = vshrl.u32 %v1442, 7
        %v1444 = vsub.s32 0, %v1443
        %v1445 = vrot.slane %v1440, %v1444
        %v1463 = vunpack.c.l.b16 %v1422
        %v1464 = vunpack.c.l.b16 %v1423
        %v1465 = vunpack.c.l.b16 %v1424
        %v1466 = vunpack.c.l.b16 %v1425
        %v1467 = vunpack.c.l.b16 %v1426
        %v1468 = vunpack.c.l.b16 %v1427
        %v1469 = vunpack.c.l.b16 %v1428
        %v1470 = vunpack.c.l.b16 %v1429
        %v1471 = vunpack.c.l.b16 %v1430
        %v1472 = vunpack.c.l.b16 %v1431
        %v1473 = vunpack.c.l.b16 %v1432
        %v1474 = vunpack.c.l.b16 %v1433
        %v1475 = vunpack.c.l.b16 %v1434
        %v1476 = vunpack.c.l.b16 %v1435
        %v1477 = vunpack.c.l.b16 %v1436
        %v1478 = vunpack.c.l.b16 %v1437
        %v1479 = vpack.c.b16 %v1464, %v1463
        %v1480 = vpack.c.b16 %v1466, %v1465
        %v1481 = vpack.c.b16 %v1468, %v1467
        %v1482 = vpack.c.b16 %v1470, %v1469
        %v1483 = vpack.c.b16 %v1472, %v1471
        %v1484 = vpack.c.b16 %v1474, %v1473
        %v1485 = vpack.c.b16 %v1476, %v1475
        %v1486 = vpack.c.b16 %v1478, %v1477
        %1495 = vmatprep.subr.bf16.mxu0 0
        %1496 = vmatpush1.bf16.msra.mxu0 %v1479
        %1497 = vmatprep.subr.bf16.mxu0 0
        %1498 = vmatpush1.bf16.msra.mxu0 %v1480
        %1499 = vmatprep.subr.bf16.mxu0 0
        %1500 = vmatpush1.bf16.msra.mxu0 %v1481
        %1501 = vmatprep.subr.bf16.mxu0 0
        %1502 = vmatpush1.bf16.msra.mxu0 %v1482
        %1503 = vmatprep.subr.bf16.mxu0 0
        %1504 = vmatpush1.bf16.msra.mxu0 %v1483
        %1505 = vmatprep.subr.bf16.mxu0 0
        %1506 = vmatpush1.bf16.msra.mxu0 %v1484
        %1507 = vmatprep.subr.bf16.mxu0 0
        %1508 = vmatpush1.bf16.msra.mxu0 %v1485
        %1509 = vmatprep.subr.bf16.mxu0 0
        %1510 = vmatpush1.bf16.msra.mxu0 %v1486
        %1511 = vmatprep.subr.bf16.mxu0 0
        %1512 = vmatpush1.bf16.msra.mxu0 0
        %1513 = vmatprep.subr.bf16.mxu0 0
        %1514 = vmatpush1.bf16.msra.mxu0 0
        %1515 = vmatprep.subr.bf16.mxu0 0
        %1516 = vmatpush1.bf16.msra.mxu0 0
        %1517 = vmatprep.subr.bf16.mxu0 0
        %1518 = vmatpush1.bf16.msra.mxu0 0
        %1519 = vmatprep.subr.bf16.mxu0 0
        %1520 = vmatpush1.bf16.msra.mxu0 0
        %1521 = vmatprep.subr.bf16.mxu0 0
        %1522 = vmatpush1.bf16.msra.mxu0 0
        %1523 = vmatprep.subr.bf16.mxu0 0
        %1524 = vmatpush1.bf16.msra.mxu0 0
        %1525 = vmatprep.subr.bf16.mxu0 0
        %1526 = vmatpush1.bf16.msra.mxu0 0
        %1527 = vmatprep.mubr.bf16.mxu0 0
        %1528 = vmatmul.mubr.bf16.gmra.mrb[0].mxu0 %v1438
        %v1529 = vpop.f32.mrb[0].mxu0
        %v1530 = vadd.f32 %v1445, %v1529
        %v1531 = vpop.f32.mrb[0].mxu0
        %v1532 = vpop.f32.mrb[0].mxu0
        %v1533 = vadd.f32 %v1445, %v1532
        %v1534 = vpop.f32.mrb[0].mxu0
        %1535 = vdwg.mxu0
        %v1536 = vadd.f32 %v1121, %v1530
        %v1537 = vadd.f32 %v1122, %v1533
        %v1538 = vmax.f32 %v1536, 0.0
        %v1539 = vmax.f32 %v1537, 0.0
        %1540 = vst [vmem:[#allocation2 + $0x10] sm:$0xff] %v1538
        %1541 = vst [vmem:[#allocation2 + $0x18] sm:$0xff] %v1539
        %s1542 = scalar_lea.vmem %s3, 384
        %v1543 = vld [vmem:[%s1542] sm:$0xf]
        %v1544 = vld [vmem:[%s1542 + $0x4] sm:$0xf]
        %v1545 = vld [vmem:[%s1542 + $0x8] sm:$0xf]
        %v1546 = vld [vmem:[%s1542 + $0xc] sm:$0xf]
        %v1547 = vld [vmem:[%s1542 + $0x10] sm:$0xf]
        %v1548 = vld [vmem:[%s1542 + $0x14] sm:$0xf]
        %v1549 = vld [vmem:[%s1542 + $0x18] sm:$0xf]
        %v1550 = vld [vmem:[%s1542 + $0x1c] sm:$0xf]
        %v1551 = vld [vmem:[%s1542 + $0x20] sm:$0xf]
        %v1552 = vld [vmem:[%s1542 + $0x24] sm:$0xf]
        %v1553 = vld [vmem:[%s1542 + $0x28] sm:$0xf]
        %v1554 = vld [vmem:[%s1542 + $0x2c] sm:$0xf]
        %v1555 = vld [vmem:[%s1542 + $0x30] sm:$0xf]
        %v1556 = vld [vmem:[%s1542 + $0x34] sm:$0xf]
        %v1557 = vld [vmem:[%s1542 + $0x38] sm:$0xf]
        %v1558 = vld [vmem:[%s1542 + $0x3c] sm:$0xf]
        %v1559 = vld [vmem:[%s1542 + $0x40] sm:$0xf]
        %v1560 = vld [vmem:[%s1542 + $0x44] sm:$0xf]
        %v1561 = vld [vmem:[%s1542 + $0x48] sm:$0xf]
        %v1562 = vld [vmem:[%s1542 + $0x4c] sm:$0xf]
        %v1563 = vld [vmem:[%s1542 + $0x50] sm:$0xf]
        %v1564 = vld [vmem:[%s1542 + $0x54] sm:$0xf]
        %v1565 = vld [vmem:[%s1542 + $0x58] sm:$0xf]
        %v1566 = vld [vmem:[%s1542 + $0x5c] sm:$0xf]
        %v1567 = vld [vmem:[%s1542 + $0x60] sm:$0xf]
        %v1568 = vld [vmem:[%s1542 + $0x64] sm:$0xf]
        %v1569 = vld [vmem:[%s1542 + $0x68] sm:$0xf]
        %v1570 = vld [vmem:[%s1542 + $0x6c] sm:$0xf]
        %v1571 = vld [vmem:[%s1542 + $0x70] sm:$0xf]
        %v1572 = vld [vmem:[%s1542 + $0x74] sm:$0xf]
        %v1573 = vld [vmem:[%s1542 + $0x78] sm:$0xf]
        %v1574 = vld [vmem:[%s1542 + $0x7c] sm:$0xf]
        %v1575 = vld [vmem:[%s1542 + $0x80] sm:$0xf]
        %v1576 = vld [vmem:[%s1542 + $0x84] sm:$0xf]
        %v1577 = vld [vmem:[%s1542 + $0x88] sm:$0xf]
        %v1578 = vld [vmem:[%s1542 + $0x8c] sm:$0xf]
        %v1579 = vld [vmem:[%s1542 + $0x90] sm:$0xf]
        %v1580 = vld [vmem:[%s1542 + $0x94] sm:$0xf]
        %v1581 = vld [vmem:[%s1542 + $0x98] sm:$0xf]
        %v1582 = vld [vmem:[%s1542 + $0x9c] sm:$0xf]
        %v1583 = vld [vmem:[%s1542 + $0xa0] sm:$0xf]
        %v1584 = vld [vmem:[%s1542 + $0xa4] sm:$0xf]
        %v1585 = vld [vmem:[%s1542 + $0xa8] sm:$0xf]
        %v1586 = vld [vmem:[%s1542 + $0xac] sm:$0xf]
        %v1587 = vld [vmem:[%s1542 + $0xb0] sm:$0xf]
        %v1588 = vld [vmem:[%s1542 + $0xb4] sm:$0xf]
        %v1589 = vld [vmem:[%s1542 + $0xb8] sm:$0xf]
        %v1590 = vld [vmem:[%s1542 + $0xbc] sm:$0xf]
        %v1591 = vld [vmem:[#allocation2 + $0xf] sm:$0xff]
        %v1592 = vld [vmem:[#allocation2 + $0x17] sm:$0xff]
        %v1593 = vld [vmem:[#allocation2 + $0x10] sm:$0xff]
        %v1594 = vld [vmem:[#allocation2 + $0x18] sm:$0xff]
        %v1595 = vld [vmem:[#allocation2 + $0x11] sm:$0xff]
        %v1596 = vld [vmem:[#allocation2 + $0x19] sm:$0xff]
        %v1597 = vpack.c.bf16 %v1592, %v1591
        %v1598 = vpack.c.bf16 %v1594, %v1593
        %v1599 = vpack.c.bf16 %v1596, %v1595
        %s1600 = scalar_lea.vmem %s4, 2
        %v1601 = vld [vmem:[%s1600] sm:$0x1]
        %v1603 = vlaneseq
        %v1604 = vshrl.u32 %v1603, 7
        %v1605 = vsub.s32 0, %v1604
        %v1606 = vrot.slane %v1601, %v1605
        %v1656 = vunpack.c.l.b16 %v1543
        %v1657 = vunpack.c.l.b16 %v1544
        %v1658 = vunpack.c.l.b16 %v1545
        %v1659 = vunpack.c.l.b16 %v1546
        %v1660 = vunpack.c.l.b16 %v1547
        %v1661 = vunpack.c.l.b16 %v1548
        %v1662 = vunpack.c.l.b16 %v1549
        %v1663 = vunpack.c.l.b16 %v1550
        %v1664 = vunpack.c.l.b16 %v1551
        %v1665 = vunpack.c.l.b16 %v1552
        %v1666 = vunpack.c.l.b16 %v1553
        %v1667 = vunpack.c.l.b16 %v1554
        %v1668 = vunpack.c.l.b16 %v1555
        %v1669 = vunpack.c.l.b16 %v1556
        %v1670 = vunpack.c.l.b16 %v1557
        %v1671 = vunpack.c.l.b16 %v1558
        %v1672 = vunpack.c.l.b16 %v1559
        %v1673 = vunpack.c.l.b16 %v1560
        %v1674 = vunpack.c.l.b16 %v1561
        %v1675 = vunpack.c.l.b16 %v1562
        %v1676 = vunpack.c.l.b16 %v1563
        %v1677 = vunpack.c.l.b16 %v1564
        %v1678 = vunpack.c.l.b16 %v1565
        %v1679 = vunpack.c.l.b16 %v1566
        %v1680 = vunpack.c.l.b16 %v1567
        %v1681 = vunpack.c.l.b16 %v1568
        %v1682 = vunpack.c.l.b16 %v1569
        %v1683 = vunpack.c.l.b16 %v1570
        %v1684 = vunpack.c.l.b16 %v1571
        %v1685 = vunpack.c.l.b16 %v1572
        %v1686 = vunpack.c.l.b16 %v1573
        %v1687 = vunpack.c.l.b16 %v1574
        %v1688 = vunpack.c.l.b16 %v1575
        %v1689 = vunpack.c.l.b16 %v1576
        %v1690 = vunpack.c.l.b16 %v1577
        %v1691 = vunpack.c.l.b16 %v1578
        %v1692 = vunpack.c.l.b16 %v1579
        %v1693 = vunpack.c.l.b16 %v1580
        %v1694 = vunpack.c.l.b16 %v1581
        %v1695 = vunpack.c.l.b16 %v1582
        %v1696 = vunpack.c.l.b16 %v1583
        %v1697 = vunpack.c.l.b16 %v1584
        %v1698 = vunpack.c.l.b16 %v1585
        %v1699 = vunpack.c.l.b16 %v1586
        %v1700 = vunpack.c.l.b16 %v1587
        %v1701 = vunpack.c.l.b16 %v1588
        %v1702 = vunpack.c.l.b16 %v1589
        %v1703 = vunpack.c.l.b16 %v1590
        %v1704 = vpack.c.b16 %v1657, %v1656
        %v1705 = vpack.c.b16 %v1659, %v1658
        %v1706 = vpack.c.b16 %v1661, %v1660
        %v1707 = vpack.c.b16 %v1663, %v1662
        %v1708 = vpack.c.b16 %v1665, %v1664
        %v1709 = vpack.c.b16 %v1667, %v1666
        %v1710 = vpack.c.b16 %v1669, %v1668
        %v1711 = vpack.c.b16 %v1671, %v1670
        %v1712 = vpack.c.b16 %v1673, %v1672
        %v1713 = vpack.c.b16 %v1675, %v1674
        %v1714 = vpack.c.b16 %v1677, %v1676
        %v1715 = vpack.c.b16 %v1679, %v1678
        %v1716 = vpack.c.b16 %v1681, %v1680
        %v1717 = vpack.c.b16 %v1683, %v1682
        %v1718 = vpack.c.b16 %v1685, %v1684
        %v1719 = vpack.c.b16 %v1687, %v1686
        %v1720 = vpack.c.b16 %v1689, %v1688
        %v1721 = vpack.c.b16 %v1691, %v1690
        %v1722 = vpack.c.b16 %v1693, %v1692
        %v1723 = vpack.c.b16 %v1695, %v1694
        %v1724 = vpack.c.b16 %v1697, %v1696
        %v1725 = vpack.c.b16 %v1699, %v1698
        %v1726 = vpack.c.b16 %v1701, %v1700
        %v1727 = vpack.c.b16 %v1703, %v1702
        %1752 = vmatprep.subr.bf16.mxu0 0
        %1753 = vmatpush1.bf16.msra.mxu0 %v1704
        %1754 = vmatprep.subr.bf16.mxu0 0
        %1755 = vmatpush1.bf16.msra.mxu0 %v1705
        %1756 = vmatprep.subr.bf16.mxu0 0
        %1757 = vmatpush1.bf16.msra.mxu0 %v1706
        %1758 = vmatprep.subr.bf16.mxu0 0
        %1759 = vmatpush1.bf16.msra.mxu0 %v1707
        %1760 = vmatprep.subr.bf16.mxu0 0
        %1761 = vmatpush1.bf16.msra.mxu0 %v1708
        %1762 = vmatprep.subr.bf16.mxu0 0
        %1763 = vmatpush1.bf16.msra.mxu0 %v1709
        %1764 = vmatprep.subr.bf16.mxu0 0
        %1765 = vmatpush1.bf16.msra.mxu0 %v1710
        %1766 = vmatprep.subr.bf16.mxu0 0
        %1767 = vmatpush1.bf16.msra.mxu0 %v1711
        %1768 = vmatprep.subr.bf16.mxu0 0
        %1769 = vmatpush1.bf16.msra.mxu0 %v1712
        %1770 = vmatprep.subr.bf16.mxu0 0
        %1771 = vmatpush1.bf16.msra.mxu0 %v1713
        %1772 = vmatprep.subr.bf16.mxu0 0
        %1773 = vmatpush1.bf16.msra.mxu0 %v1714
        %1774 = vmatprep.subr.bf16.mxu0 0
        %1775 = vmatpush1.bf16.msra.mxu0 %v1715
        %1776 = vmatprep.subr.bf16.mxu0 0
        %1777 = vmatpush1.bf16.msra.mxu0 %v1716
        %1778 = vmatprep.subr.bf16.mxu0 0
        %1779 = vmatpush1.bf16.msra.mxu0 %v1717
        %1780 = vmatprep.subr.bf16.mxu0 0
        %1781 = vmatpush1.bf16.msra.mxu0 %v1718
        %1782 = vmatprep.subr.bf16.mxu0 0
        %1783 = vmatpush1.bf16.msra.mxu0 %v1719
        %1784 = vmatprep.mubr.bf16.mxu0 %v1598
        %1785 = vmatmul.mubr.bf16.gmra.mrb[0].mxu0 %v1597
        %v1786 = vpop.f32.mrb[0].mxu0
        %v1787 = vadd.f32 %v1606, %v1786
        %v1788 = vpop.f32.mrb[0].mxu0
        %v1789 = vpop.f32.mrb[0].mxu0
        %v1790 = vadd.f32 %v1606, %v1789
        %v1791 = vpop.f32.mrb[0].mxu0
        %1792 = vdwg.mxu0
        %1793 = vmatprep.subr.bf16.mxu0 0
        %1794 = vmatpush1.bf16.msra.mxu0 %v1720
        %1795 = vmatprep.subr.bf16.mxu0 0
        %1796 = vmatpush1.bf16.msra.mxu0 %v1721
        %1797 = vmatprep.subr.bf16.mxu0 0
        %1798 = vmatpush1.bf16.msra.mxu0 %v1722
        %1799 = vmatprep.subr.bf16.mxu0 0
        %1800 = vmatpush1.bf16.msra.mxu0 %v1723
        %1801 = vmatprep.subr.bf16.mxu0 0
        %1802 = vmatpush1.bf16.msra.mxu0 %v1724
        %1803 = vmatprep.subr.bf16.mxu0 0
        %1804 = vmatpush1.bf16.msra.mxu0 %v1725
        %1805 = vmatprep.subr.bf16.mxu0 0
        %1806 = vmatpush1.bf16.msra.mxu0 %v1726
        %1807 = vmatprep.subr.bf16.mxu0 0
        %1808 = vmatpush1.bf16.msra.mxu0 %v1727
        %1809 = vmatprep.subr.bf16.mxu0 0
        %1810 = vmatpush1.bf16.msra.mxu0 0
        %1811 = vmatprep.subr.bf16.mxu0 0
        %1812 = vmatpush1.bf16.msra.mxu0 0
        %1813 = vmatprep.subr.bf16.mxu0 0
        %1814 = vmatpush1.bf16.msra.mxu0 0
        %1815 = vmatprep.subr.bf16.mxu0 0
        %1816 = vmatpush1.bf16.msra.mxu0 0
        %1817 = vmatprep.subr.bf16.mxu0 0
        %1818 = vmatpush1.bf16.msra.mxu0 0
        %1819 = vmatprep.subr.bf16.mxu0 0
        %1820 = vmatpush1.bf16.msra.mxu0 0
        %1821 = vmatprep.subr.bf16.mxu0 0
        %1822 = vmatpush1.bf16.msra.mxu0 0
        %1823 = vmatprep.subr.bf16.mxu0 0
        %1824 = vmatpush1.bf16.msra.mxu0 0
        %1825 = vmatprep.mubr.bf16.mxu0 0
        %1826 = vmatmul.mubr.bf16.gmra.mrb[0].mxu0 %v1599
        %v1827 = vpop.f32.mrb[0].mxu0
        %v1828 = vadd.f32 %v1787, %v1827
        %v1829 = vpop.f32.mrb[0].mxu0
        %v1830 = vpop.f32.mrb[0].mxu0
        %v1831 = vadd.f32 %v1790, %v1830
        %v1832 = vpop.f32.mrb[0].mxu0
        %1833 = vdwg.mxu0
        %v1834 = vmax.f32 %v1828, 0.0
        %v1835 = vmax.f32 %v1831, 0.0
        %s1836 = scalar_lea.vmem %s5, 128
        %v1837 = vld [vmem:[%s1836] sm:$0xf]
        %v1838 = vld [vmem:[%s1836 + $0x4] sm:$0xf]
        %v1839 = vld [vmem:[%s1836 + $0x8] sm:$0xf]
        %v1840 = vld [vmem:[%s1836 + $0xc] sm:$0xf]
        %v1841 = vld [vmem:[%s1836 + $0x10] sm:$0xf]
        %v1842 = vld [vmem:[%s1836 + $0x14] sm:$0xf]
        %v1843 = vld [vmem:[%s1836 + $0x18] sm:$0xf]
        %v1844 = vld [vmem:[%s1836 + $0x1c] sm:$0xf]
        %v1845 = vld [vmem:[%s1836 + $0x20] sm:$0xf]
        %v1846 = vld [vmem:[%s1836 + $0x24] sm:$0xf]
        %v1847 = vld [vmem:[%s1836 + $0x28] sm:$0xf]
        %v1848 = vld [vmem:[%s1836 + $0x2c] sm:$0xf]
        %v1849 = vld [vmem:[%s1836 + $0x30] sm:$0xf]
        %v1850 = vld [vmem:[%s1836 + $0x34] sm:$0xf]
        %v1851 = vld [vmem:[%s1836 + $0x38] sm:$0xf]
        %v1852 = vld [vmem:[%s1836 + $0x3c] sm:$0xf]
        %v1853 = vpack.c.bf16 %v1835, %v1834
        %s1854 = scalar_lea.vmem %s6, 2
        %v1855 = vld [vmem:[%s1854] sm:$0x1]
        %v1857 = vlaneseq
        %v1858 = vshrl.u32 %v1857, 7
        %v1859 = vsub.s32 0, %v1858
        %v1860 = vrot.slane %v1855, %v1859
        %v1878 = vunpack.c.l.b16 %v1837
        %v1879 = vunpack.c.l.b16 %v1838
        %v1880 = vunpack.c.l.b16 %v1839
        %v1881 = vunpack.c.l.b16 %v1840
        %v1882 = vunpack.c.l.b16 %v1841
        %v1883 = vunpack.c.l.b16 %v1842
        %v1884 = vunpack.c.l.b16 %v1843
        %v1885 = vunpack.c.l.b16 %v1844
        %v1886 = vunpack.c.l.b16 %v1845
        %v1887 = vunpack.c.l.b16 %v1846
        %v1888 = vunpack.c.l.b16 %v1847
        %v1889 = vunpack.c.l.b16 %v1848
        %v1890 = vunpack.c.l.b16 %v1849
        %v1891 = vunpack.c.l.b16 %v1850
        %v1892 = vunpack.c.l.b16 %v1851
        %v1893 = vunpack.c.l.b16 %v1852
        %v1894 = vpack.c.b16 %v1879, %v1878
        %v1895 = vpack.c.b16 %v1881, %v1880
        %v1896 = vpack.c.b16 %v1883, %v1882
        %v1897 = vpack.c.b16 %v1885, %v1884
        %v1898 = vpack.c.b16 %v1887, %v1886
        %v1899 = vpack.c.b16 %v1889, %v1888
        %v1900 = vpack.c.b16 %v1891, %v1890
        %v1901 = vpack.c.b16 %v1893, %v1892
        %1910 = vmatprep.subr.bf16.mxu0 0
        %1911 = vmatpush1.bf16.msra.mxu0 %v1894
        %1912 = vmatprep.subr.bf16.mxu0 0
        %1913 = vmatpush1.bf16.msra.mxu0 %v1895
        %1914 = vmatprep.subr.bf16.mxu0 0
        %1915 = vmatpush1.bf16.msra.mxu0 %v1896
        %1916 = vmatprep.subr.bf16.mxu0 0
        %1917 = vmatpush1.bf16.msra.mxu0 %v1897
        %1918 = vmatprep.subr.bf16.mxu0 0
        %1919 = vmatpush1.bf16.msra.mxu0 %v1898
        %1920 = vmatprep.subr.bf16.mxu0 0
        %1921 = vmatpush1.bf16.msra.mxu0 %v1899
        %1922 = vmatprep.subr.bf16.mxu0 0
        %1923 = vmatpush1.bf16.msra.mxu0 %v1900
        %1924 = vmatprep.subr.bf16.mxu0 0
        %1925 = vmatpush1.bf16.msra.mxu0 %v1901
        %1926 = vmatprep.subr.bf16.mxu0 0
        %1927 = vmatpush1.bf16.msra.mxu0 0
        %1928 = vmatprep.subr.bf16.mxu0 0
        %1929 = vmatpush1.bf16.msra.mxu0 0
        %1930 = vmatprep.subr.bf16.mxu0 0
        %1931 = vmatpush1.bf16.msra.mxu0 0
        %1932 = vmatprep.subr.bf16.mxu0 0
        %1933 = vmatpush1.bf16.msra.mxu0 0
        %1934 = vmatprep.subr.bf16.mxu0 0
        %1935 = vmatpush1.bf16.msra.mxu0 0
        %1936 = vmatprep.subr.bf16.mxu0 0
        %1937 = vmatpush1.bf16.msra.mxu0 0
        %1938 = vmatprep.subr.bf16.mxu0 0
        %1939 = vmatpush1.bf16.msra.mxu0 0
        %1940 = vmatprep.subr.bf16.mxu0 0
        %1941 = vmatpush1.bf16.msra.mxu0 0
        %1942 = vmatprep.mubr.bf16.mxu0 0
        %1943 = vmatmul.mubr.bf16.gmra.mrb[0].mxu0 %v1853
        %v1944 = vpop.f32.mrb[0].mxu0
        %v1945 = vadd.f32 %v1860, %v1944
        %v1946 = vpop.f32.mrb[0].mxu0
        %v1947 = vpop.f32.mrb[0].mxu0
        %v1948 = vadd.f32 %v1860, %v1947
        %v1949 = vpop.f32.mrb[0].mxu0
        %1950 = vdwg.mxu0
        %v1951 = vadd.f32 %v1536, %v1945
        %v1952 = vadd.f32 %v1537, %v1948
        %1953 = vst [vmem:[#allocation2 + $0x10] sm:$0xff] %v1951
        %1954 = vst [vmem:[#allocation2 + $0x18] sm:$0xff] %v1952
        %v1955 = vld [vmem:[%s7] sm:$0xf]
        %v1956 = vld [vmem:[%s7 + $0x4] sm:$0xf]
        %v1957 = vld [vmem:[%s7 + $0x8] sm:$0xf]
        %v1958 = vld [vmem:[%s7 + $0xc] sm:$0xf]
        %v1959 = vld [vmem:[%s7 + $0x10] sm:$0xf]
        %v1960 = vld [vmem:[%s7 + $0x14] sm:$0xf]
        %v1961 = vld [vmem:[%s7 + $0x18] sm:$0xf]
        %v1962 = vld [vmem:[%s7 + $0x1c] sm:$0xf]
        %v1963 = vld [vmem:[%s7 + $0x20] sm:$0xf]
        %v1964 = vld [vmem:[%s7 + $0x24] sm:$0xf]
        %v1965 = vld [vmem:[%s7 + $0x28] sm:$0xf]
        %v1966 = vld [vmem:[%s7 + $0x2c] sm:$0xf]
        %v1967 = vld [vmem:[%s7 + $0x30] sm:$0xf]
        %v1968 = vld [vmem:[%s7 + $0x34] sm:$0xf]
        %v1969 = vld [vmem:[%s7 + $0x38] sm:$0xf]
        %v1970 = vld [vmem:[%s7 + $0x3c] sm:$0xf]
        %v1971 = vld [vmem:[%s7 + $0x40] sm:$0xf]
        %v1972 = vld [vmem:[%s7 + $0x44] sm:$0xf]
        %v1973 = vld [vmem:[%s7 + $0x48] sm:$0xf]
        %v1974 = vld [vmem:[%s7 + $0x4c] sm:$0xf]
        %v1975 = vld [vmem:[%s7 + $0x50] sm:$0xf]
        %v1976 = vld [vmem:[%s7 + $0x54] sm:$0xf]
        %v1977 = vld [vmem:[%s7 + $0x58] sm:$0xf]
        %v1978 = vld [vmem:[%s7 + $0x5c] sm:$0xf]
        %v1979 = vld [vmem:[%s7 + $0x60] sm:$0xf]
        %v1980 = vld [vmem:[%s7 + $0x64] sm:$0xf]
        %v1981 = vld [vmem:[%s7 + $0x68] sm:$0xf]
        %v1982 = vld [vmem:[%s7 + $0x6c] sm:$0xf]
        %v1983 = vld [vmem:[%s7 + $0x70] sm:$0xf]
        %v1984 = vld [vmem:[%s7 + $0x74] sm:$0xf]
        %v1985 = vld [vmem:[%s7 + $0x78] sm:$0xf]
        %v1986 = vld [vmem:[%s7 + $0x7c] sm:$0xf]
        %v1987 = vld [vmem:[%s7 + $0x80] sm:$0xf]
        %v1988 = vld [vmem:[%s7 + $0x84] sm:$0xf]
        %v1989 = vld [vmem:[%s7 + $0x88] sm:$0xf]
        %v1990 = vld [vmem:[%s7 + $0x8c] sm:$0xf]
        %v1991 = vld [vmem:[%s7 + $0x90] sm:$0xf]
        %v1992 = vld [vmem:[%s7 + $0x94] sm:$0xf]
        %v1993 = vld [vmem:[%s7 + $0x98] sm:$0xf]
        %v1994 = vld [vmem:[%s7 + $0x9c] sm:$0xf]
        %v1995 = vld [vmem:[%s7 + $0xa0] sm:$0xf]
        %v1996 = vld [vmem:[%s7 + $0xa4] sm:$0xf]
        %v1997 = vld [vmem:[%s7 + $0xa8] sm:$0xf]
        %v1998 = vld [vmem:[%s7 + $0xac] sm:$0xf]
        %v1999 = vld [vmem:[%s7 + $0xb0] sm:$0xf]
        %v2000 = vld [vmem:[%s7 + $0xb4] sm:$0xf]
        %v2001 = vld [vmem:[%s7 + $0xb8] sm:$0xf]
        %v2002 = vld [vmem:[%s7 + $0xbc] sm:$0xf]
        %v2003 = vld [vmem:[#allocation2 + $0xf] sm:$0xff]
        %v2004 = vld [vmem:[#allocation2 + $0x17] sm:$0xff]
        %v2005 = vld [vmem:[#allocation2 + $0x10] sm:$0xff]
        %v2006 = vld [vmem:[#allocation2 + $0x18] sm:$0xff]
        %v2007 = vld [vmem:[#allocation2 + $0x11] sm:$0xff]
        %v2008 = vld [vmem:[#allocation2 + $0x19] sm:$0xff]
        %v2009 = vpack.c.bf16 %v2004, %v2003
        %v2010 = vpack.c.bf16 %v2006, %v2005
        %v2011 = vpack.c.bf16 %v2008, %v2007
        %v2012 = vld [vmem:[%s8] sm:$0x1]
        %v2014 = vlaneseq
        %v2015 = vshrl.u32 %v2014, 7
        %v2016 = vsub.s32 0, %v2015
        %v2017 = vrot.slane %v2012, %v2016
        %v2067 = vunpack.c.l.b16 %v1955
        %v2068 = vunpack.c.l.b16 %v1956
        %v2069 = vunpack.c.l.b16 %v1957
        %v2070 = vunpack.c.l.b16 %v1958
        %v2071 = vunpack.c.l.b16 %v1959
        %v2072 = vunpack.c.l.b16 %v1960
        %v2073 = vunpack.c.l.b16 %v1961
        %v2074 = vunpack.c.l.b16 %v1962
        %v2075 = vunpack.c.l.b16 %v1963
        %v2076 = vunpack.c.l.b16 %v1964
        %v2077 = vunpack.c.l.b16 %v1965
        %v2078 = vunpack.c.l.b16 %v1966
        %v2079 = vunpack.c.l.b16 %v1967
        %v2080 = vunpack.c.l.b16 %v1968
        %v2081 = vunpack.c.l.b16 %v1969
        %v2082 = vunpack.c.l.b16 %v1970
        %v2083 = vunpack.c.l.b16 %v1971
        %v2084 = vunpack.c.l.b16 %v1972
        %v2085 = vunpack.c.l.b16 %v1973
        %v2086 = vunpack.c.l.b16 %v1974
        %v2087 = vunpack.c.l.b16 %v1975
        %v2088 = vunpack.c.l.b16 %v1976
        %v2089 = vunpack.c.l.b16 %v1977
        %v2090 = vunpack.c.l.b16 %v1978
        %v2091 = vunpack.c.l.b16 %v1979
        %v2092 = vunpack.c.l.b16 %v1980
        %v2093 = vunpack.c.l.b16 %v1981
        %v2094 = vunpack.c.l.b16 %v1982
        %v2095 = vunpack.c.l.b16 %v1983
        %v2096 = vunpack.c.l.b16 %v1984
        %v2097 = vunpack.c.l.b16 %v1985
        %v2098 = vunpack.c.l.b16 %v1986
        %v2099 = vunpack.c.l.b16 %v1987
        %v2100 = vunpack.c.l.b16 %v1988
        %v2101 = vunpack.c.l.b16 %v1989
        %v2102 = vunpack.c.l.b16 %v1990
        %v2103 = vunpack.c.l.b16 %v1991
        %v2104 = vunpack.c.l.b16 %v1992
        %v2105 = vunpack.c.l.b16 %v1993
        %v2106 = vunpack.c.l.b16 %v1994
        %v2107 = vunpack.c.l.b16 %v1995
        %v2108 = vunpack.c.l.b16 %v1996
        %v2109 = vunpack.c.l.b16 %v1997
        %v2110 = vunpack.c.l.b16 %v1998
        %v2111 = vunpack.c.l.b16 %v1999
        %v2112 = vunpack.c.l.b16 %v2000
        %v2113 = vunpack.c.l.b16 %v2001
        %v2114 = vunpack.c.l.b16 %v2002
        %v2115 = vpack.c.b16 %v2068, %v2067
        %v2116 = vpack.c.b16 %v2070, %v2069
        %v2117 = vpack.c.b16 %v2072, %v2071
        %v2118 = vpack.c.b16 %v2074, %v2073
        %v2119 = vpack.c.b16 %v2076, %v2075
        %v2120 = vpack.c.b16 %v2078, %v2077
        %v2121 = vpack.c.b16 %v2080, %v2079
        %v2122 = vpack.c.b16 %v2082, %v2081
        %v2123 = vpack.c.b16 %v2084, %v2083
        %v2124 = vpack.c.b16 %v2086, %v2085
        %v2125 = vpack.c.b16 %v2088, %v2087
        %v2126 = vpack.c.b16 %v2090, %v2089
        %v2127 = vpack.c.b16 %v2092, %v2091
        %v2128 = vpack.c.b16 %v2094, %v2093
        %v2129 = vpack.c.b16 %v2096, %v2095
        %v2130 = vpack.c.b16 %v2098, %v2097
        %v2131 = vpack.c.b16 %v2100, %v2099
        %v2132 = vpack.c.b16 %v2102, %v2101
        %v2133 = vpack.c.b16 %v2104, %v2103
        %v2134 = vpack.c.b16 %v2106, %v2105
        %v2135 = vpack.c.b16 %v2108, %v2107
        %v2136 = vpack.c.b16 %v2110, %v2109
        %v2137 = vpack.c.b16 %v2112, %v2111
        %v2138 = vpack.c.b16 %v2114, %v2113
        %2163 = vmatprep.subr.bf16.mxu0 0
        %2164 = vmatpush1.bf16.msra.mxu0 %v2115
        %2165 = vmatprep.subr.bf16.mxu0 0
        %2166 = vmatpush1.bf16.msra.mxu0 %v2116
        %2167 = vmatprep.subr.bf16.mxu0 0
        %2168 = vmatpush1.bf16.msra.mxu0 %v2117
        %2169 = vmatprep.subr.bf16.mxu0 0
        %2170 = vmatpush1.bf16.msra.mxu0 %v2118
        %2171 = vmatprep.subr.bf16.mxu0 0
        %2172 = vmatpush1.bf16.msra.mxu0 %v2119
        %2173 = vmatprep.subr.bf16.mxu0 0
        %2174 = vmatpush1.bf16.msra.mxu0 %v2120
        %2175 = vmatprep.subr.bf16.mxu0 0
        %2176 = vmatpush1.bf16.msra.mxu0 %v2121
        %2177 = vmatprep.subr.bf16.mxu0 0
        %2178 = vmatpush1.bf16.msra.mxu0 %v2122
        %2179 = vmatprep.subr.bf16.mxu0 0
        %2180 = vmatpush1.bf16.msra.mxu0 %v2123
        %2181 = vmatprep.subr.bf16.mxu0 0
        %2182 = vmatpush1.bf16.msra.mxu0 %v2124
        %2183 = vmatprep.subr.bf16.mxu0 0
        %2184 = vmatpush1.bf16.msra.mxu0 %v2125
        %2185 = vmatprep.subr.bf16.mxu0 0
        %2186 = vmatpush1.bf16.msra.mxu0 %v2126
        %2187 = vmatprep.subr.bf16.mxu0 0
        %2188 = vmatpush1.bf16.msra.mxu0 %v2127
        %2189 = vmatprep.subr.bf16.mxu0 0
        %2190 = vmatpush1.bf16.msra.mxu0 %v2128
        %2191 = vmatprep.subr.bf16.mxu0 0
        %2192 = vmatpush1.bf16.msra.mxu0 %v2129
        %2193 = vmatprep.subr.bf16.mxu0 0
        %2194 = vmatpush1.bf16.msra.mxu0 %v2130
        %2195 = vmatprep.mubr.bf16.mxu0 %v2010
        %2196 = vmatmul.mubr.bf16.gmra.mrb[0].mxu0 %v2009
        %v2197 = vpop.f32.mrb[0].mxu0
        %v2198 = vadd.f32 %v2017, %v2197
        %v2199 = vpop.f32.mrb[0].mxu0
        %v2200 = vpop.f32.mrb[0].mxu0
        %v2201 = vadd.f32 %v2017, %v2200
        %v2202 = vpop.f32.mrb[0].mxu0
        %2203 = vdwg.mxu0
        %2204 = vmatprep.subr.bf16.mxu0 0
        %2205 = vmatpush1.bf16.msra.mxu0 %v2131
        %2206 = vmatprep.subr.bf16.mxu0 0
        %2207 = vmatpush1.bf16.msra.mxu0 %v2132
        %2208 = vmatprep.subr.bf16.mxu0 0
        %2209 = vmatpush1.bf16.msra.mxu0 %v2133
        %2210 = vmatprep.subr.bf16.mxu0 0
        %2211 = vmatpush1.bf16.msra.mxu0 %v2134
        %2212 = vmatprep.subr.bf16.mxu0 0
        %2213 = vmatpush1.bf16.msra.mxu0 %v2135
        %2214 = vmatprep.subr.bf16.mxu0 0
        %2215 = vmatpush1.bf16.msra.mxu0 %v2136
        %2216 = vmatprep.subr.bf16.mxu0 0
        %2217 = vmatpush1.bf16.msra.mxu0 %v2137
        %2218 = vmatprep.subr.bf16.mxu0 0
        %2219 = vmatpush1.bf16.msra.mxu0 %v2138
        %2220 = vmatprep.subr.bf16.mxu0 0
        %2221 = vmatpush1.bf16.msra.mxu0 0
        %2222 = vmatprep.subr.bf16.mxu0 0
        %2223 = vmatpush1.bf16.msra.mxu0 0
        %2224 = vmatprep.subr.bf16.mxu0 0
        %2225 = vmatpush1.bf16.msra.mxu0 0
        %2226 = vmatprep.subr.bf16.mxu0 0
        %2227 = vmatpush1.bf16.msra.mxu0 0
        %2228 = vmatprep.subr.bf16.mxu0 0
        %2229 = vmatpush1.bf16.msra.mxu0 0
        %2230 = vmatprep.subr.bf16.mxu0 0
        %2231 = vmatpush1.bf16.msra.mxu0 0
        %2232 = vmatprep.subr.bf16.mxu0 0
        %2233 = vmatpush1.bf16.msra.mxu0 0
        %2234 = vmatprep.subr.bf16.mxu0 0
        %2235 = vmatpush1.bf16.msra.mxu0 0
        %2236 = vmatprep.mubr.bf16.mxu0 0
        %2237 = vmatmul.mubr.bf16.gmra.mrb[0].mxu0 %v2011
        %v2238 = vpop.f32.mrb[0].mxu0
        %v2239 = vadd.f32 %v2198, %v2238
        %v2240 = vpop.f32.mrb[0].mxu0
        %v2241 = vpop.f32.mrb[0].mxu0
        %v2242 = vadd.f32 %v2201, %v2241
        %v2243 = vpop.f32.mrb[0].mxu0
        %2244 = vdwg.mxu0
        %2245 = vst [vmem:[%s325] sm:$0xff] %v2239
        %2246 = vst [vmem:[%s325 + $0x8] sm:$0xff] %v2242
        %s2247 = sand.u32 %s225, 1
        %s2248 = scalar_lea.sflag [#allocation4], %s2247
        %s2249 = sand.u32 %s225, 1
        %s2250 = smul.addr %s2249, 16
        %s2251 = scalar_lea.vmem [#allocation3], %s2250
        // Predicated region
        $region57: #{encoder_apply_pallas.5} parent=55 // pred_check
          %p2252 = pneg %p235
        $region58: #{encoder_apply_pallas.5} parent=55 // pred_check_branch
          %2254 = sbr.rel (%p2252) target = $region60
        $region59: #{encoder_apply_pallas.5} parent=55 // pred_region
          %s2256 = ssub.s32 256, 256
          %2257 = vsyncadd %s2248, %s2256
          %s2258 = smul.addr %s23, 2
          %s2259 = smul.addr %s2258, 128
          %s2260 = scalar_lea.hbm %s9, %s2259
          %s2261 = sshll.u32 %s2251, 4
          %s2262 = int_to_ptr.vmem [resolvable:$true] %s2261
          %2267 = dma.vmem_to_hbm [thread:$0]  %s2262, 256, %s2260, %s2248, 128, 128, 8
        $region60: #{encoder_apply_pallas.5} parent=55 // pred_fallthru
          _
      $region56: #{encoder_apply_pallas.5} parent=5 // pred_fallthru
        _
      %p2268 = scmp.le.s32.totalorder 2, %s18
      // Predicated region
      $region61: #{encoder_apply_pallas.5} parent=5 // pred_check
        %p2269 = pneg %p2268
      $region62: #{encoder_apply_pallas.5} parent=5 // pred_check_branch
        %2271 = sbr.rel (%p2269) target = $region64
      $region63: #{encoder_apply_pallas.5} parent=5 // pred_region
        %s2272 = ssub.s32 %s18, 2
        // Predicated region
        $region65: #{encoder_apply_pallas.5} parent=63 // pred_check
          %p2273 = pneg %p241
        $region66: #{encoder_apply_pallas.5} parent=63 // pred_check_branch
          %2275 = sbr.rel (%p2273) target = $region68
        $region67: #{encoder_apply_pallas.5} parent=63 // pred_region
          %s2276 = sand.u32 %s226, 1
          %s2277 = scalar_lea.sflag [#allocation4], %s2276
          %s2278 = sand.u32 %s226, 1
          %s2279 = smul.addr %s2278, 16
          %s2280 = scalar_lea.vmem [#allocation3], %s2279
          %2281 = dma.done %s2277, 256
        $region68: #{encoder_apply_pallas.5} parent=63 // pred_fallthru
          _
      $region64: #{encoder_apply_pallas.5} parent=5 // pred_fallthru
        _
    $region6: #{encoder_apply_pallas.5} parent=1 // loop_footer
      %s22 = sadd.s32 1, %s18
    $region7: #{encoder_apply_pallas.5} parent=1 // loop_footer_branch
      %17 = sbr.rel target = $region3
    $region8: #{encoder_apply_pallas.5} parent=1 // loop_exit
      _
    %2282 = vsyncpa [#allocation4], 1
    %s2283 = scalar_lea.sflag [#allocation4], 1
    %2284 = vsyncpa %s2283, 1

</llo_original>
